<compile_context>
chip_gen: v7x
topology: tpu7x:2x2x1
jax: 0.10.0
libtpu: 0.0.40
codegen_flags: <defaults>
</compile_context>

<pallas_src>
import functools

import numpy as np
import jax
import jax.numpy as jnp
from jax import lax
from jax.experimental import pallas as pl
from jax.experimental.pallas import tpu as pltpu

F32 = jnp.float32
BF16 = jnp.bfloat16
NEG_BIG = -(2.0 ** 100)          # finite "minus infinity" (exp() underflows to 0, no NaN)


def _round_up(x, m):
    return ((x + m - 1) // m) * m


def _cdiv(a, b):
    return -(-a // b)


def _approx_recip(x):
    if hasattr(pl, "reciprocal"):
        return pl.reciprocal(x, approx=True)       # EUP slot, keeps the VALU free
    return 1.0 / x


def _silu(x):
    return x * _approx_recip(1.0 + jnp.exp(-x))


# --------------------------------------------------------------------------- kernels
def _make_stats_kernel(n_heads, n_pad):
    def kernel(hcat_ref, row_1e_ref,
               w1_ref, b1_ref, w2_ref, b2_ref, matt_ref, red_ref,
               z_out_ref, att_out_ref, m_ref, l_ref):
        t = pl.program_id(1)

        @pl.when(t == 0)
        def _init():
            m_ref[...] = jnp.full(m_ref.shape, NEG_BIG, dtype=F32)
            l_ref[...] = jnp.zeros(l_ref.shape, dtype=F32)

        e_blk = hcat_ref.shape[0]

        # node_conv MLP (bf16 operands, f32 accumulation)
        h1 = _silu(jnp.dot(hcat_ref[...], w1_ref[...],
                           preferred_element_type=F32) + b1_ref[...])
        z = jnp.dot(h1.astype(BF16), w2_ref[...],
                    preferred_element_type=F32) + b2_ref[...]              # (E, HB) f32
        z16 = z.astype(BF16)
        z_out_ref[...] = z16                                               # reused in pass 2

        # batched attention logits: att_h = scale * z (Wq_h Wk_h^T) z^T for all heads
        zm = jnp.dot(z16, matt_ref[...], preferred_element_type=F32)      # (E, heads*HB)
        z_rep = jnp.concatenate([z] * n_heads, axis=1)                    # (E, heads*HB)
        att = jnp.dot(zm * z_rep, red_ref[...],
                      preferred_element_type=F32)                         # (E, NST)
        att_out_ref[...] = att                                            # reused in pass 2

        # online global-per-head max + per-node sum-of-exp (+ edge-count column)
        m_old = m_ref[0, :, :]                                            # (8, NST)
        m_new = jnp.maximum(m_old, jnp.max(att, axis=0, keepdims=True))
        alpha = jnp.exp(m_old[0:1, :] - m_new[0:1, :])                    # (1, NST)
        p = jnp.exp(att - m_new[0:1, :])                                  # (E, NST)

        row_row = row_1e_ref[0]                                           # (1, E)
        oh_ne16 = (lax.broadcasted_iota(jnp.int32, (n_pad, e_blk), 0)
                   == row_row).astype(BF16)                               # (N, E), exact 0/1
        l_ref[0, :, :] = (l_ref[0, :, :] * alpha
                          + jnp.dot(oh_ne16, p.astype(BF16),
                                    preferred_element_type=F32))          # (N, NST)
        m_ref[0, :, :] = m_new

    return kernel


def _make_main_kernel(n_heads, n_pad, hb):
    def kernel(z_ref, att_ref, rbf_ref, va_ref, cd_ref, row_e1_ref, row_1e_ref,
               stats_ref, m_ref,
               wv_ref, wo1_ref, bo1_ref, wo2a_ref, bo2a_ref, wo2b_ref, bo2b_ref,
               wra_ref, bra_ref, wrb_ref, brb_ref, cdexp_ref,
               acc_ref):
        t = pl.program_id(1)

        @pl.when(t == 0)
        def _init():
            acc_ref[...] = jnp.zeros(acc_ref.shape, dtype=F32)

        e_blk = z_ref.shape[0]
        z16 = z_ref[...]                                                  # (E, HB) bf16
        att = att_ref[...]                                                # (E, NST) f32

        # one-hot gather / scatter matrices (0/1 -> exact in bf16)
        row_col = row_e1_ref[...]                                         # (E, 1)
        oh_en16 = (row_col == lax.broadcasted_iota(
            jnp.int32, (e_blk, n_pad), 1)).astype(BF16)                   # (E, N)
        row_row = row_1e_ref[0]                                           # (1, E)
        oh_ne16 = (lax.broadcasted_iota(jnp.int32, (n_pad, e_blk), 0)
                   == row_row).astype(BF16)                               # (N, E)

        # softmax normalisation: gather 1/l per edge, subtract the shared (global) max
        inv_l_e = jnp.dot(oh_en16, stats_ref[...].astype(BF16),
                          preferred_element_type=F32)                     # (E, NST)
        m_row = m_ref[...][0:1, :]                                        # (1, NST)
        att_soft = jnp.exp(att - m_row) * inv_l_e                         # (E, NST)

        # stacked value projection + per-head weighting
        v_all = jnp.dot(z16, wv_ref[...], preferred_element_type=F32)     # (E, heads*HB)
        zup = jnp.zeros((e_blk, hb), dtype=F32)
        for h in range(n_heads):
            zup = zup + att_soft[:, h:h + 1] * v_all[:, h * hb:(h + 1) * hb]

        out1 = _silu(jnp.dot(zup.astype(BF16), wo1_ref[...],
                             preferred_element_type=F32) + bo1_ref[...])
        o16 = out1.astype(BF16)
        node_a = jnp.dot(o16, wo2a_ref[...], preferred_element_type=F32) + bo2a_ref[...]
        node_b = jnp.dot(o16, wo2b_ref[...], preferred_element_type=F32) + bo2b_ref[...]
        rbf16 = rbf_ref[...]
        rbf_a = jnp.dot(rbf16, wra_ref[...], preferred_element_type=F32) + bra_ref[...]
        rbf_b = jnp.dot(rbf16, wrb_ref[...], preferred_element_type=F32) + brb_ref[...]

        # coord_diff (E, 8) -> (E, 4H) via a tiny constant 0/1 matmul (no lane concats)
        vb = jnp.dot(cd_ref[...], cdexp_ref[...], preferred_element_type=F32)

        # lane-dense (E, 4H) message slab: [mix2 | mes_x | mes_y | mes_z]
        slab = node_a * rbf_a * va_ref[...].astype(F32) + node_b * rbf_b * vb

        acc_ref[0, :, :] = acc_ref[0, :, :] + jnp.dot(
            oh_ne16, slab.astype(BF16), preferred_element_type=F32)       # (N, 4H)

    return kernel


# --------------------------------------------------------------------------- helpers
def _device_kind():
    try:
        return jax.devices()[0].device_kind.lower()
    except Exception:
        return ""


def _is_v7x():
    return "v7" in _device_kind()


def _vmem_limit_bytes():
    cap = None
    try:
        info = pltpu.get_tpu_info()
        cap = getattr(info, "vmem_capacity_bytes", None)
    except Exception:
        cap = None
    if not cap:
        cap = 64 * 1024 * 1024                       # conservative (v7x floor)
    return int(min(max(cap * 5 // 8, 32 * 1024 * 1024), 100 * 1024 * 1024))


def _compiler_params():
    cls = getattr(pltpu, "CompilerParams", None)
    if cls is None:
        cls = getattr(pltpu, "TPUCompilerParams", None)
    if cls is None:
        return None
    try:
        return cls(dimension_semantics=("parallel", "arbitrary"),
                   vmem_limit_bytes=_vmem_limit_bytes())
    except TypeError:
        try:
            return cls(dimension_semantics=("parallel", "arbitrary"))
        except TypeError:
            return None


def _pallas(kernel, **kw):
    kw = {k: v for k, v in kw.items() if v is not None}
    try:
        return pl.pallas_call(kernel, **kw)
    except TypeError:
        kw.pop("compiler_params", None)
        return pl.pallas_call(kernel, **kw)


# --------------------------------------------------------------------------- wrapper
def mp_block_forward(params, node_feat, vec_feat, edges, edge_attr, coord_diff, rbf,
                     *, e_block=None):
    row, col = edges[0].astype(jnp.int32), edges[1].astype(jnp.int32)
    E = int(edges.shape[1])
    N = int(node_feat.shape[0])
    H = int(vec_feat.shape[1])
    H3, H4 = 3 * H, 4 * H
    HB = max(_round_up(H3, 128), 128)                 # per-head lane block width
    n_heads = int(params['wq'].shape[0])
    NST = max(_round_up(n_heads + 1, 8), 8)           # heads + count column, padded
    scale = 1.0 / np.sqrt(float(H3))
    is_v7x = _is_v7x()

    # ---- tiling over the edge axis (streams x tiles) ---------------------------
    if e_block is None:
        e_block = 512 if is_v7x else 1024             # smaller resident footprint on 64MiB v7x
    e_block = max(_round_up(int(e_block), 8), 8)
    if E <= e_block:
        e_blk, n_streams, tps = max(_round_up(E, 8), 8), 1, 1
    else:
        e_blk = e_block
        total_tiles = _cdiv(E, e_blk)
        n_streams = 2 if (is_v7x and total_tiles >= 2) else 1   # megacore split only on v7x
        tps = _cdiv(total_tiles, n_streams)
    e_pad = n_streams * tps * e_blk
    n_pad = max(_round_up(N, 8), 8)

    f32 = jnp.float32

    # ---- plain-JAX glue: gathers, padding ---------------------------------------
    node_col = node_feat[col].astype(f32)
    hcat = node_col if edge_attr is None else jnp.concatenate(
        [node_col, edge_attr.astype(f32)], axis=1)
    IN = int(hcat.shape[1])
    RBF = int(rbf.shape[1])
    vec_col = vec_feat[col].astype(f32)                       # (E, H, 3)

    va = jnp.concatenate([jnp.ones((E, H), f32),
                          vec_col[:, :, 0], vec_col[:, :, 1], vec_col[:, :, 2]],
                         axis=1)                               # (E, 4H)
    cd_pad = jnp.pad(coord_diff.astype(f32), ((0, 0), (0, 8 - 3)))   # (E, 8)

    def pad_e(x):
        return jnp.pad(x, ((0, e_pad - E), (0, 0)))

    hcat_p = pad_e(hcat).astype(BF16)
    rbf_p = pad_e(rbf.astype(f32)).astype(BF16)
    va_p = pad_e(va).astype(BF16)
    cd_p = pad_e(cd_pad)
    row_p = jnp.pad(row, (0, e_pad - E), constant_values=n_pad)      # out-of-range sentinel
    row_e1 = row_p[:, None]                                          # (E_pad, 1)
    row_1e3 = row_p.reshape(n_streams * tps, 1, e_blk)               # (tiles, 1, e_blk)

    # ---- weight prep (stacked / column-permuted once; bf16 for the MXU) ---------
    def padded(w, rows, cols):
        return jnp.pad(w, ((0, rows - w.shape[0]), (0, cols - w.shape[1])))

    w1 = params['w1'].astype(f32)
    b1 = params['b1'].astype(f32).reshape(1, -1)
    w2_p = padded(params['w2'].astype(f32), H, HB)
    b2_p = padded(params['b2'].astype(f32).reshape(1, -1), 1, HB)
    wq = params['wq'].astype(f32)
    wk = params['wk'].astype(f32)
    wv = params['wv'].astype(f32)

    matt = jnp.einsum('hai,hbi->hab', wq, wk)                        # M_h = Wq_h @ Wk_h^T
    matt_pad = jnp.pad(matt, ((0, 0), (0, HB - H3), (0, HB - H3)))
    matt_stack = matt_pad.transpose(1, 0, 2).reshape(HB, n_heads * HB)
    wv_pad = jnp.pad(wv, ((0, 0), (0, HB - H3), (0, HB - H3)))
    wv_stack = wv_pad.transpose(1, 0, 2).reshape(HB, n_heads * HB)

    red_np = np.zeros((n_heads * HB, NST), np.float32)               # per-head lane reduce
    for h in range(n_heads):
        red_np[h * HB:h * HB + H3, h] = scale
    reduce_mat = jnp.asarray(red_np)

    cdexp_np = np.zeros((8, H4), np.float32)                         # coord_diff expander
    for c in range(3):
        cdexp_np[c, (c + 1) * H:(c + 2) * H] = 1.0
    cdexp = jnp.asarray(cdexp_np)

    wo1_p = padded(params['wo1'].astype(f32), HB, HB)
    bo1_p = padded(params['bo1'].astype(f32).reshape(1, -1), 1, HB)
    wo2 = params['wo2'].astype(f32)
    bo2 = params['bo2'].astype(f32).reshape(1, -1)
    wrbf = params['wrbf'].astype(f32)
    brbf = params['brbf'].astype(f32).reshape(1, -1)

    def chunks(w):
        return w[..., :H], w[..., H:2 * H], w[..., 2 * H:]

    wo2_1, wo2_2, wo2_3 = chunks(wo2)
    bo2_1, bo2_2, bo2_3 = chunks(bo2)
    wr_1, wr_2, wr_3 = chunks(wrbf)
    br_1, br_2, br_3 = chunks(brbf)
    wo2a = padded(jnp.concatenate([wo2_2, wo2_1, wo2_1, wo2_1], axis=1), HB, H4)
    bo2a = jnp.concatenate([bo2_2, bo2_1, bo2_1, bo2_1], axis=1)
    wo2b = padded(jnp.concatenate([wo2_3, wo2_3, wo2_3, wo2_3], axis=1), HB, H4)
    bo2b = jnp.concatenate([bo2_3, bo2_3, bo2_3, bo2_3], axis=1)
    wra = jnp.concatenate([wr_2, wr_1, wr_1, wr_1], axis=1)
    bra = jnp.concatenate([br_2, br_1, br_1, br_1], axis=1)
    wrb = jnp.concatenate([wr_3, wr_3, wr_3, wr_3], axis=1)
    brb = jnp.concatenate([br_3, br_3, br_3, br_3], axis=1)

    to16 = lambda x: x.astype(BF16)
    w1_16, w2_16 = to16(w1), to16(w2_p)
    matt_16, wv_16 = to16(matt_stack), to16(wv_stack)
    wo1_16, wo2a_16, wo2b_16 = to16(wo1_p), to16(wo2a), to16(wo2b)
    wra_16, wrb_16 = to16(wra), to16(wrb)

    # ---- grid & specs ------------------------------------------------------------
    grid = (n_streams, tps)

    def emap(s, t): return (s * tps + t, 0)
    def emap3(s, t): return (s * tps + t, 0, 0)
    def cmap2(s, t): return (0, 0)
    def omap(s, t): return (s, 0, 0)

    def edge_spec(f): return pl.BlockSpec((e_blk, f), emap)
    row_e1_spec = pl.BlockSpec((e_blk, 1), emap)
    row_1e_spec = pl.BlockSpec((1, 1, e_blk), emap3)
    def w_spec(shape): return pl.BlockSpec(shape, cmap2)

    comp = _compiler_params()

    # ---- pass 1: edge MLP, attention logits, per-node softmax stats ---------------
    z_e, att_e, m_all, l_all = _pallas(
        _make_stats_kernel(n_heads, n_pad),
        out_shape=(jax.ShapeDtypeStruct((e_pad, HB), BF16),
                   jax.ShapeDtypeStruct((e_pad, NST), f32),
                   jax.ShapeDtypeStruct((n_streams, 8, NST), f32),
                   jax.ShapeDtypeStruct((n_streams, n_pad, NST), f32)),
        grid=grid,
        in_specs=[edge_spec(IN), row_1e_spec,
                  w_spec((IN, H)), w_spec((1, H)), w_spec((H, HB)), w_spec((1, HB)),
                  w_spec((HB, n_heads * HB)), w_spec((n_heads * HB, NST))],
        out_specs=(pl.BlockSpec((e_blk, HB), emap),
                   pl.BlockSpec((e_blk, NST), emap),
                   pl.BlockSpec((1, 8, NST), omap),
                   pl.BlockSpec((1, n_pad, NST), omap)),
        compiler_params=comp,
    )(hcat_p, row_1e3, w1_16, b1, w2_16, b2_p, matt_16, reduce_mat)

    # merge per-stream online-softmax states (tiny arrays, plain JAX)
    m_s = m_all[:, 0, :]                                             # (S, NST)
    m_g = jnp.max(m_s, axis=0)                                       # (NST,)
    l_g = jnp.sum(l_all * jnp.exp(m_s - m_g[None, :])[:, None, :], axis=0)   # (n_pad, NST)
    count = l_g[:, n_heads]                                          # per-node edge count
    l_h = l_g[:, :n_heads]
    inv_l = jnp.where(l_h > 0.0, 1.0 / jnp.maximum(l_h, 1e-30), 0.0)
    stats = jnp.pad(inv_l, ((0, 0), (0, NST - n_heads)))             # (n_pad, NST)
    m_in = jnp.tile(m_g[None, :], (8, 1))                            # (8, NST)

    # ---- pass 2: softmax-weighted values, output MLP, rbf mixing, fused reduction --
    acc_all = _pallas(
        _make_main_kernel(n_heads, n_pad, HB),
        out_shape=jax.ShapeDtypeStruct((n_streams, n_pad, H4), f32),
        grid=grid,
        in_specs=[pl.BlockSpec((e_blk, HB), emap),        # z (bf16, from pass 1)
                  pl.BlockSpec((e_blk, NST), emap),       # att logits (from pass 1)
                  edge_spec(RBF), edge_spec(H4), edge_spec(8),
                  row_e1_spec, row_1e_spec,
                  w_spec((n_pad, NST)), w_spec((8, NST)),
                  w_spec((HB, n_heads * HB)),
                  w_spec((HB, HB)), w_spec((1, HB)),
                  w_spec((HB, H4)), w_spec((1, H4)),
                  w_spec((HB, H4)), w_spec((1, H4)),
                  w_spec((RBF, H4)), w_spec((1, H4)),
                  w_spec((RBF, H4)), w_spec((1, H4)),
                  w_spec((8, H4))],
        out_specs=pl.BlockSpec((1, n_pad, H4), omap),
        compiler_params=comp,
    )(z_e, att_e, rbf_p, va_p, cd_p, row_e1, row_1e3,
      stats, m_in,
      wv_16, wo1_16, bo1_p, wo2a_16, bo2a, wo2b_16, bo2b,
      wra_16, bra, wrb_16, brb, cdexp)

    # ---- epilogue (lane-dense slab -> module outputs) ------------------------------
    acc = jnp.sum(acc_all, axis=0)                                   # (n_pad, 4H)
    mes = acc[:N] / jnp.maximum(count[:N], 1.0)[:, None]
    mes_node = mes[:, :H]
    mes_vec = mes[:, H:].reshape(N, 3, H).transpose(0, 2, 1)         # (N, H, 3)
    return mes_node, mes_vec


# --------------------------------------------------------------------------- reference
def reference_forward(params, node_feat, vec_feat, edges, edge_attr, coord_diff, rbf):
    row, col = edges[0], edges[1]
    N = node_feat.shape[0]
    E = edges.shape[1]
    H = vec_feat.shape[1]
    H3 = 3 * H

    def silu(x):
        return x * jax.nn.sigmoid(x)

    hcat = jnp.concatenate([node_feat[col], edge_attr], axis=1)
    z = silu(hcat @ params['w1'] + params['b1']) @ params['w2'] + params['b2']
    rbf_out = rbf @ params['wrbf'] + params['brbf']

    z_update = jnp.zeros_like(z)
    onehot = (row[:, None] == jnp.arange(N)[None, :])
    for h in range(params['wq'].shape[0]):
        q = z @ params['wq'][h]
        k = z @ params['wk'][h]
        v = z @ params['wv'][h]
        att = jnp.sum(q * k, axis=1) / np.sqrt(float(H3))
        att_masked = jnp.where(onehot, att[:, None], -1e30)
        seg_max = att_masked.max(axis=0)
        exp_att = jnp.exp(att - seg_max[row])
        seg_sum = jax.ops.segment_sum(exp_att, row, num_segments=N)
        att_soft = exp_att / seg_sum[row]
        z_update = z_update + att_soft[:, None] * v

    node_out = silu(z_update @ params['wo1'] + params['bo1']) @ params['wo2'] + params['bo2']
    mix = node_out * rbf_out
    mix1, mix2, mix3 = mix[:, :H], mix[:, H:2 * H], mix[:, 2 * H:]

    vec_col = vec_feat[col]                                                   # (E, H, 3)
    mes_vec_e = vec_col * mix1[:, :, None] + coord_diff[:, None, :] * mix3[:, :, None]

    count = jax.ops.segment_sum(jnp.ones((E,), jnp.float32), row, num_segments=N)
    countc = jnp.maximum(count, 1.0)
    mes_node = jax.ops.segment_sum(mix2, row, num_segments=N) / countc[:, None]
    mes_vec = (jax.ops.segment_sum(mes_vec_e.reshape(E, -1), row, num_segments=N)
               .reshape(N, H, 3) / countc[:, None, None])
    return mes_node, mes_vec


# --------------------------------------------------------------------------- params
def init_params(key, input_nf, edges_in_d, hidden_nf, rbf_dim, att_heads):
    H3 = 3 * hidden_nf
    input_edges = input_nf + edges_in_d
    ks = jax.random.split(key, 13)

    def lin(k, fan_in, fan_out):
        return (jax.random.normal(k, (fan_in, fan_out), jnp.float32)
                / np.sqrt(float(fan_in)))

    return dict(
        w1=lin(ks[0], input_edges, hidden_nf),
        b1=0.01 * jax.random.normal(ks[1], (1, hidden_nf), jnp.float32),
        w2=lin(ks[2], hidden_nf, H3),
        b2=0.01 * jax.random.normal(ks[3], (1, H3), jnp.float32),
        wrbf=lin(ks[4], rbf_dim, H3),
        brbf=0.01 * jax.random.normal(ks[5], (1, H3), jnp.float32),
        wq=jax.random.normal(ks[6], (att_heads, H3, H3), jnp.float32) / np.sqrt(float(H3)),
        wk=jax.random.normal(ks[7], (att_heads, H3, H3), jnp.float32) / np.sqrt(float(H3)),
        wv=jax.random.normal(ks[8], (att_heads, H3, H3), jnp.float32) / np.sqrt(float(H3)),
        wo1=lin(ks[9], H3, H3),
        bo1=0.01 * jax.random.normal(ks[10], (1, H3), jnp.float32),
        wo2=lin(ks[11], H3, H3),
        bo2=0.01 * jax.random.normal(ks[12], (1, H3), jnp.float32),
    )


# --------------------------------------------------------------------------- main
if __name__ == "__main__":
    key = jax.random.PRNGKey(0)
    N, E = 8, 50                       # E chosen to exercise multi-tile + padding
    input_nf, edges_in_d, hidden_nf, rbf_dim, att_heads = 16, 8, 32, 20, 4

    k = jax.random.split(key, 8)
    node_feat = jax.random.normal(k[0], (N, input_nf), jnp.float32)
    vec_feat = jax.random.normal(k[1], (N, hidden_nf, 3), jnp.float32)
    edge_attr = jax.random.normal(k[2], (E, edges_in_d), jnp.float32)
    coord_diff = jax.random.normal(k[3], (E, 3), jnp.float32)
    rbf = jax.random.normal(k[4], (E, rbf_dim), jnp.float32)
    row = jax.random.randint(k[5], (E,), 0, N, dtype=jnp.int32)
    col = jax.random.randint(k[6], (E,), 0, N, dtype=jnp.int32)
    edges = jnp.stack([row, col], axis=0)

    params = init_params(k[7], input_nf, edges_in_d, hidden_nf, rbf_dim, att_heads)

    # small e_block so the test hits the multi-tile / padded / accumulate paths
    fwd = jax.jit(functools.partial(mp_block_forward, e_block=16))
    mes_node, mes_vec = fwd(params, node_feat, vec_feat, edges, edge_attr,
                            coord_diff, rbf)
    jax.block_until_ready((mes_node, mes_vec))

    ref_node, ref_vec = reference_forward(params, node_feat, vec_feat, edges,
                                          edge_attr, coord_diff, rbf)
    np.testing.assert_allclose(np.asarray(mes_node), np.asarray(ref_node),
                               rtol=4e-2, atol=4e-2)
    np.testing.assert_allclose(np.asarray(mes_vec), np.asarray(ref_vec),
                               rtol=4e-2, atol=4e-2)
    assert mes_node.shape == (N, hidden_nf)
    assert mes_vec.shape == (N, hidden_nf, 3)
    print("KERNEL_OK")
</pallas_src>

<mosaic_0001>
module attributes {stable_mosaic.version = 11 : i64} {
  func.func @kernel(%arg0: i32, %arg1: i32, %arg2: memref<16x24xbf16, #tpu.memory_space<vmem>>, %arg3: memref<1x1x16xi32, #tpu.memory_space<vmem>>, %arg4: memref<24x32xbf16, #tpu.memory_space<vmem>>, %arg5: memref<1x32xf32, #tpu.memory_space<vmem>>, %arg6: memref<32x128xbf16, #tpu.memory_space<vmem>>, %arg7: memref<1x128xf32, #tpu.memory_space<vmem>>, %arg8: memref<128x512xbf16, #tpu.memory_space<vmem>>, %arg9: memref<512x8xf32, #tpu.memory_space<vmem>>, %arg10: memref<16x128xbf16, #tpu.memory_space<vmem>>, %arg11: memref<16x8xf32, #tpu.memory_space<vmem>>, %arg12: memref<1x8x8xf32, #tpu.memory_space<vmem>>, %arg13: memref<1x8x8xf32, #tpu.memory_space<vmem>>) attributes {dimension_semantics = [#tpu.dimension_semantics<parallel>, #tpu.dimension_semantics<arbitrary>], iteration_bounds = array<i64: 1, 4>, scalar_prefetch = 0 : i64, scratch_operands = 0 : i64, tpu.core_type = #tpu.core_type<tc>, window_params = [{transform_indices = @transform_0, window_bounds = array<i64: 16, 24>}, {transform_indices = @transform_1, window_bounds = array<i64: 1, 1, 16>}, {pipeline_mode = #tpu.pipeline_mode<synchronous>, transform_indices = @transform_2, window_bounds = array<i64: 24, 32>}, {pipeline_mode = #tpu.pipeline_mode<synchronous>, transform_indices = @transform_3, window_bounds = array<i64: 1, 32>}, {pipeline_mode = #tpu.pipeline_mode<synchronous>, transform_indices = @transform_4, window_bounds = array<i64: 32, 128>}, {pipeline_mode = #tpu.pipeline_mode<synchronous>, transform_indices = @transform_5, window_bounds = array<i64: 1, 128>}, {pipeline_mode = #tpu.pipeline_mode<synchronous>, transform_indices = @transform_6, window_bounds = array<i64: 128, 512>}, {pipeline_mode = #tpu.pipeline_mode<synchronous>, transform_indices = @transform_7, window_bounds = array<i64: 512, 8>}, {transform_indices = @transform_8, window_bounds = array<i64: 16, 128>}, {transform_indices = @transform_9, window_bounds = array<i64: 16, 8>}, {transform_indices = @transform_10, window_bounds = array<i64: 1, 8, 8>}, {transform_indices = @transform_11, window_bounds = array<i64: 1, 8, 8>}]} {
    %c0_i32 = arith.constant 0 : i32
    %0 = arith.cmpi eq, %arg1, %c0_i32 : i32
    %1 = arith.extui %0 : i1 to i32
    %c0_i32_0 = arith.constant 0 : i32
    %2 = arith.cmpi ne, %1, %c0_i32_0 : i32
    scf.if %2 {
      %cst_40 = arith.constant -1.2676506E+30 : f32
      %66 = vector.broadcast %cst_40 : f32 to vector<1x8x8xf32>
      %c0_41 = arith.constant 0 : index
      %c0_42 = arith.constant 0 : index
      %c0_43 = arith.constant 0 : index
      %67 = vector.load %arg12[%c0_41, %c0_42, %c0_43] : memref<1x8x8xf32, #tpu.memory_space<vmem>>, vector<1x8x8xf32>
      tpu.vector_store %arg12[%c0_41, %c0_42, %c0_43], %66 {strides = array<i32>} : memref<1x8x8xf32, #tpu.memory_space<vmem>>, vector<1x8x8xf32>,
      %cst_44 = arith.constant 0.000000e+00 : f32
      %68 = vector.broadcast %cst_44 : f32 to vector<1x8x8xf32>
      %c0_45 = arith.constant 0 : index
      %c0_46 = arith.constant 0 : index
      %c0_47 = arith.constant 0 : index
      %69 = vector.load %arg13[%c0_45, %c0_46, %c0_47] : memref<1x8x8xf32, #tpu.memory_space<vmem>>, vector<1x8x8xf32>
      tpu.vector_store %arg13[%c0_45, %c0_46, %c0_47], %68 {strides = array<i32>} : memref<1x8x8xf32, #tpu.memory_space<vmem>>, vector<1x8x8xf32>,
    } else {
    }
    %c0 = arith.constant 0 : index
    %c0_1 = arith.constant 0 : index
    %3 = vector.load %arg2[%c0, %c0_1] : memref<16x24xbf16, #tpu.memory_space<vmem>>, vector<16x24xbf16>
    %c0_2 = arith.constant 0 : index
    %c0_3 = arith.constant 0 : index
    %4 = vector.load %arg4[%c0_2, %c0_3] : memref<24x32xbf16, #tpu.memory_space<vmem>>, vector<24x32xbf16>
    %cst = arith.constant dense<0.000000e+00> : vector<16x32xf32>
    %5 = tpu.matmul %3, %4, %cst {dimension_numbers = #tpu.dot_dimension_numbers<[1], [0], [0], [1], [0, 0, 1, 1], [], []>} : vector<16x24xbf16>, vector<24x32xbf16>, vector<16x32xf32> -> vector<16x32xf32>
    %c0_4 = arith.constant 0 : index
    %c0_5 = arith.constant 0 : index
    %6 = vector.load %arg5[%c0_4, %c0_5] : memref<1x32xf32, #tpu.memory_space<vmem>>, vector<1x32xf32>
    %7 = vector.broadcast %6 : vector<1x32xf32> to vector<16x32xf32>
    %8 = arith.addf %5, %7 : vector<16x32xf32>
    %cst_6 = arith.constant 0.000000e+00 : f32
    %9 = vector.broadcast %cst_6 : f32 to vector<16x32xf32>
    %10 = arith.subf %9, %8 : vector<16x32xf32>
    %11 = math.exp %10 : vector<16x32xf32>
    %cst_7 = arith.constant 1.000000e+00 : f32
    %12 = vector.broadcast %cst_7 : f32 to vector<16x32xf32>
    %13 = arith.addf %12, %11 : vector<16x32xf32>
    %14 = tpu.reciprocal %13 {approx = true} : vector<16x32xf32> -> vector<16x32xf32>
    %15 = arith.mulf %8, %14 : vector<16x32xf32>
    %16 = arith.truncf %15 : vector<16x32xf32> to vector<16x32xbf16>
    %c0_8 = arith.constant 0 : index
    %c0_9 = arith.constant 0 : index
    %17 = vector.load %arg6[%c0_8, %c0_9] : memref<32x128xbf16, #tpu.memory_space<vmem>>, vector<32x128xbf16>
    %cst_10 = arith.constant dense<0.000000e+00> : vector<16x128xf32>
    %18 = tpu.matmul %16, %17, %cst_10 {dimension_numbers = #tpu.dot_dimension_numbers<[1], [0], [0], [1], [0, 0, 1, 1], [], []>} : vector<16x32xbf16>, vector<32x128xbf16>, vector<16x128xf32> -> vector<16x128xf32>
    %c0_11 = arith.constant 0 : index
    %c0_12 = arith.constant 0 : index
    %19 = vector.load %arg7[%c0_11, %c0_12] : memref<1x128xf32, #tpu.memory_space<vmem>>, vector<1x128xf32>
    %20 = vector.broadcast %19 : vector<1x128xf32> to vector<16x128xf32>
    %21 = arith.addf %18, %20 : vector<16x128xf32>
    %22 = arith.truncf %21 : vector<16x128xf32> to vector<16x128xbf16>
    %c0_13 = arith.constant 0 : index
    %c0_14 = arith.constant 0 : index
    %23 = vector.load %arg10[%c0_13, %c0_14] : memref<16x128xbf16, #tpu.memory_space<vmem>>, vector<16x128xbf16>
    tpu.vector_store %arg10[%c0_13, %c0_14], %22 {strides = array<i32>} : memref<16x128xbf16, #tpu.memory_space<vmem>>, vector<16x128xbf16>,
    %c0_15 = arith.constant 0 : index
    %c0_16 = arith.constant 0 : index
    %24 = vector.load %arg8[%c0_15, %c0_16] : memref<128x512xbf16, #tpu.memory_space<vmem>>, vector<128x512xbf16>
    %cst_17 = arith.constant dense<0.000000e+00> : vector<16x512xf32>
    %25 = tpu.matmul %22, %24, %cst_17 {dimension_numbers = #tpu.dot_dimension_numbers<[1], [0], [0], [1], [0, 0, 1, 1], [], []>} : vector<16x128xbf16>, vector<128x512xbf16>, vector<16x512xf32> -> vector<16x512xf32>
    %26 = tpu.concatenate %21, %21, %21, %21 in 1 : vector<16x128xf32>, vector<16x128xf32>, vector<16x128xf32>, vector<16x128xf32> -> vector<16x512xf32>
    %27 = arith.mulf %25, %26 : vector<16x512xf32>
    %c0_18 = arith.constant 0 : index
    %c0_19 = arith.constant 0 : index
    %28 = vector.load %arg9[%c0_18, %c0_19] : memref<512x8xf32, #tpu.memory_space<vmem>>, vector<512x8xf32>
    %cst_20 = arith.constant dense<0.000000e+00> : vector<16x8xf32>
    %29 = tpu.matmul %27, %28, %cst_20 {dimension_numbers = #tpu.dot_dimension_numbers<[1], [0], [0], [1], [0, 0, 1, 1], [], []>} : vector<16x512xf32>, vector<512x8xf32>, vector<16x8xf32> -> vector<16x8xf32>
    %c0_21 = arith.constant 0 : index
    %c0_22 = arith.constant 0 : index
    %30 = vector.load %arg11[%c0_21, %c0_22] : memref<16x8xf32, #tpu.memory_space<vmem>>, vector<16x8xf32>
    tpu.vector_store %arg11[%c0_21, %c0_22], %29 {strides = array<i32>} : memref<16x8xf32, #tpu.memory_space<vmem>>, vector<16x8xf32>,
    %c0_23 = arith.constant 0 : index
    %c0_24 = arith.constant 0 : index
    %c0_25 = arith.constant 0 : index
    %31 = vector.load %arg12[%c0_23, %c0_24, %c0_25] : memref<1x8x8xf32, #tpu.memory_space<vmem>>, vector<1x8x8xf32>
    %32 = vector.shape_cast %31 : vector<1x8x8xf32> to vector<8x8xf32>
    %cst_26 = arith.constant dense<0xFF800000> : vector<8xf32>
    %33 = vector.multi_reduction <maximumf>, %29, %cst_26 [0] : vector<16x8xf32> to vector<8xf32>
    %34 = vector.shape_cast %33 : vector<8xf32> to vector<1x8xf32>
    %35 = vector.broadcast %34 : vector<1x8xf32> to vector<8x8xf32>
    %36 = arith.maximumf %32, %35 : vector<8x8xf32>
    %37 = vector.extract_strided_slice %32 {offsets = [0, 0], sizes = [1, 8], strides = [1, 1]} : vector<8x8xf32> to vector<1x8xf32>
    %38 = vector.extract_strided_slice %36 {offsets = [0, 0], sizes = [1, 8], strides = [1, 1]} : vector<8x8xf32> to vector<1x8xf32>
    %39 = arith.subf %37, %38 : vector<1x8xf32>
    %40 = math.exp %39 : vector<1x8xf32>
    %41 = vector.extract_strided_slice %36 {offsets = [0, 0], sizes = [1, 8], strides = [1, 1]} : vector<8x8xf32> to vector<1x8xf32>
    %42 = vector.broadcast %41 : vector<1x8xf32> to vector<16x8xf32>
    %43 = arith.subf %29, %42 : vector<16x8xf32>
    %44 = math.exp %43 : vector<16x8xf32>
    %c0_27 = arith.constant 0 : index
    %c0_28 = arith.constant 0 : index
    %c0_29 = arith.constant 0 : index
    %45 = vector.load %arg3[%c0_27, %c0_28, %c0_29] : memref<1x1x16xi32, #tpu.memory_space<vmem>>, vector<1x1x16xi32>
    %46 = vector.shape_cast %45 : vector<1x1x16xi32> to vector<1x16xi32>
    %47 = tpu.iota {dimensions = array<i32: 0>} : vector<8x16xi32>
    %48 = vector.broadcast %46 : vector<1x16xi32> to vector<8x16xi32>
    %49 = arith.cmpi eq, %47, %48 : vector<8x16xi32>
    %50 = arith.extui %49 : vector<8x16xi1> to vector<8x16xi32>
    %51 = arith.sitofp %50 : vector<8x16xi32> to vector<8x16xf32>
    %52 = arith.truncf %51 : vector<8x16xf32> to vector<8x16xbf16>
    %c0_30 = arith.constant 0 : index
    %c0_31 = arith.constant 0 : index
    %c0_32 = arith.constant 0 : index
    %53 = vector.load %arg13[%c0_30, %c0_31, %c0_32] : memref<1x8x8xf32, #tpu.memory_space<vmem>>, vector<1x8x8xf32>
    %54 = vector.shape_cast %53 : vector<1x8x8xf32> to vector<8x8xf32>
    %55 = vector.broadcast %40 : vector<1x8xf32> to vector<8x8xf32>
    %56 = arith.mulf %54, %55 : vector<8x8xf32>
    %57 = arith.truncf %44 : vector<16x8xf32> to vector<16x8xbf16>
    %cst_33 = arith.constant dense<0.000000e+00> : vector<8x8xf32>
    %58 = tpu.matmul %52, %57, %cst_33 {dimension_numbers = #tpu.dot_dimension_numbers<[1], [0], [0], [1], [0, 0, 1, 1], [], []>} : vector<8x16xbf16>, vector<16x8xbf16>, vector<8x8xf32> -> vector<8x8xf32>
    %59 = arith.addf %56, %58 : vector<8x8xf32>
    %c0_34 = arith.constant 0 : index
    %c0_35 = arith.constant 0 : index
    %c0_36 = arith.constant 0 : index
    %60 = vector.load %arg13[%c0_34, %c0_35, %c0_36] : memref<1x8x8xf32, #tpu.memory_space<vmem>>, vector<1x8x8xf32>
    %61 = vector.shape_cast %60 : vector<1x8x8xf32> to vector<8x8xf32>
    %62 = vector.shape_cast %59 : vector<8x8xf32> to vector<1x8x8xf32>
    tpu.vector_store %arg13[%c0_34, %c0_35, %c0_36], %62 {strides = array<i32>} : memref<1x8x8xf32, #tpu.memory_space<vmem>>, vector<1x8x8xf32>,
    %c0_37 = arith.constant 0 : index
    %c0_38 = arith.constant 0 : index
    %c0_39 = arith.constant 0 : index
    %63 = vector.load %arg12[%c0_37, %c0_38, %c0_39] : memref<1x8x8xf32, #tpu.memory_space<vmem>>, vector<1x8x8xf32>
    %64 = vector.shape_cast %63 : vector<1x8x8xf32> to vector<8x8xf32>
    %65 = vector.shape_cast %36 : vector<8x8xf32> to vector<1x8x8xf32>
    tpu.vector_store %arg12[%c0_37, %c0_38, %c0_39], %65 {strides = array<i32>} : memref<1x8x8xf32, #tpu.memory_space<vmem>>, vector<1x8x8xf32>,
    return
  }
  func.func @transform_0(%arg0: i32, %arg1: i32) -> (i32, i32) {
    %c4_i32 = arith.constant 4 : i32
    %0 = arith.muli %arg0, %c4_i32 : i32
    %1 = arith.addi %0, %arg1 : i32
    %c0_i32 = arith.constant 0 : i32
    %c0_i32_0 = arith.constant 0 : i32
    return %1, %c0_i32 : i32, i32
  }
  func.func @transform_1(%arg0: i32, %arg1: i32) -> (i32, i32, i32) {
    %c4_i32 = arith.constant 4 : i32
    %0 = arith.muli %arg0, %c4_i32 : i32
    %1 = arith.addi %0, %arg1 : i32
    %c0_i32 = arith.constant 0 : i32
    %c0_i32_0 = arith.constant 0 : i32
    %c0_i32_1 = arith.constant 0 : i32
    return %1, %c0_i32, %c0_i32_0 : i32, i32, i32
  }
  func.func @transform_2(%arg0: i32, %arg1: i32) -> (i32, i32) {
    %c0_i32 = arith.constant 0 : i32
    %c0_i32_0 = arith.constant 0 : i32
    %c0_i32_1 = arith.constant 0 : i32
    return %c0_i32, %c0_i32_0 : i32, i32
  }
  func.func @transform_3(%arg0: i32, %arg1: i32) -> (i32, i32) {
    %c0_i32 = arith.constant 0 : i32
    %c0_i32_0 = arith.constant 0 : i32
    %c0_i32_1 = arith.constant 0 : i32
    return %c0_i32, %c0_i32_0 : i32, i32
  }
  func.func @transform_4(%arg0: i32, %arg1: i32) -> (i32, i32) {
    %c0_i32 = arith.constant 0 : i32
    %c0_i32_0 = arith.constant 0 : i32
    %c0_i32_1 = arith.constant 0 : i32
    return %c0_i32, %c0_i32_0 : i32, i32
  }
  func.func @transform_5(%arg0: i32, %arg1: i32) -> (i32, i32) {
    %c0_i32 = arith.constant 0 : i32
    %c0_i32_0 = arith.constant 0 : i32
    %c0_i32_1 = arith.constant 0 : i32
    return %c0_i32, %c0_i32_0 : i32, i32
  }
  func.func @transform_6(%arg0: i32, %arg1: i32) -> (i32, i32) {
    %c0_i32 = arith.constant 0 : i32
    %c0_i32_0 = arith.constant 0 : i32
    %c0_i32_1 = arith.constant 0 : i32
    return %c0_i32, %c0_i32_0 : i32, i32
  }
  func.func @transform_7(%arg0: i32, %arg1: i32) -> (i32, i32) {
    %c0_i32 = arith.constant 0 : i32
    %c0_i32_0 = arith.constant 0 : i32
    %c0_i32_1 = arith.constant 0 : i32
    return %c0_i32, %c0_i32_0 : i32, i32
  }
  func.func @transform_8(%arg0: i32, %arg1: i32) -> (i32, i32) {
    %c4_i32 = arith.constant 4 : i32
    %0 = arith.muli %arg0, %c4_i32 : i32
    %1 = arith.addi %0, %arg1 : i32
    %c0_i32 = arith.constant 0 : i32
    %c0_i32_0 = arith.constant 0 : i32
    return %1, %c0_i32 : i32, i32
  }
  func.func @transform_9(%arg0: i32, %arg1: i32) -> (i32, i32) {
    %c4_i32 = arith.constant 4 : i32
    %0 = arith.muli %arg0, %c4_i32 : i32
    %1 = arith.addi %0, %arg1 : i32
    %c0_i32 = arith.constant 0 : i32
    %c0_i32_0 = arith.constant 0 : i32
    return %1, %c0_i32 : i32, i32
  }
  func.func @transform_10(%arg0: i32, %arg1: i32) -> (i32, i32, i32) {
    %c0_i32 = arith.constant 0 : i32
    %c0_i32_0 = arith.constant 0 : i32
    %c0_i32_1 = arith.constant 0 : i32
    return %arg0, %c0_i32, %c0_i32_0 : i32, i32, i32
  }
  func.func @transform_11(%arg0: i32, %arg1: i32) -> (i32, i32, i32) {
    %c0_i32 = arith.constant 0 : i32
    %c0_i32_0 = arith.constant 0 : i32
    %c0_i32_1 = arith.constant 0 : i32
    return %arg0, %c0_i32, %c0_i32_0 : i32, i32, i32
  }
}

module attributes {stable_mosaic.version = 11 : i64} {
  func.func @kernel(%arg0: i32, %arg1: i32, %arg2: memref<16x128xbf16, #tpu.memory_space<vmem>>, %arg3: memref<16x8xf32, #tpu.memory_space<vmem>>, %arg4: memref<16x20xbf16, #tpu.memory_space<vmem>>, %arg5: memref<16x128xbf16, #tpu.memory_space<vmem>>, %arg6: memref<16x8xf32, #tpu.memory_space<vmem>>, %arg7: memref<16x1xi32, #tpu.memory_space<vmem>>, %arg8: memref<1x1x16xi32, #tpu.memory_space<vmem>>, %arg9: memref<8x8xf32, #tpu.memory_space<vmem>>, %arg10: memref<8x8xf32, #tpu.memory_space<vmem>>, %arg11: memref<128x512xbf16, #tpu.memory_space<vmem>>, %arg12: memref<128x128xbf16, #tpu.memory_space<vmem>>, %arg13: memref<1x128xf32, #tpu.memory_space<vmem>>, %arg14: memref<128x128xbf16, #tpu.memory_space<vmem>>, %arg15: memref<1x128xf32, #tpu.memory_space<vmem>>, %arg16: memref<128x128xbf16, #tpu.memory_space<vmem>>, %arg17: memref<1x128xf32, #tpu.memory_space<vmem>>, %arg18: memref<20x128xbf16, #tpu.memory_space<vmem>>, %arg19: memref<1x128xf32, #tpu.memory_space<vmem>>, %arg20: memref<20x128xbf16, #tpu.memory_space<vmem>>, %arg21: memref<1x128xf32, #tpu.memory_space<vmem>>, %arg22: memref<8x128xf32, #tpu.memory_space<vmem>>, %arg23: memref<1x8x128xf32, #tpu.memory_space<vmem>>) attributes {dimension_semantics = [#tpu.dimension_semantics<parallel>, #tpu.dimension_semantics<arbitrary>], iteration_bounds = array<i64: 1, 4>, scalar_prefetch = 0 : i64, scratch_operands = 0 : i64, tpu.core_type = #tpu.core_type<tc>, window_params = [{transform_indices = @transform_0, window_bounds = array<i64: 16, 128>}, {transform_indices = @transform_1, window_bounds = array<i64: 16, 8>}, {transform_indices = @transform_2, window_bounds = array<i64: 16, 20>}, {transform_indices = @transform_3, window_bounds = array<i64: 16, 128>}, {transform_indices = @transform_4, window_bounds = array<i64: 16, 8>}, {transform_indices = @transform_5, window_bounds = array<i64: 16, 1>}, {transform_indices = @transform_6, window_bounds = array<i64: 1, 1, 16>}, {pipeline_mode = #tpu.pipeline_mode<synchronous>, transform_indices = @transform_7, window_bounds = array<i64: 8, 8>}, {pipeline_mode = #tpu.pipeline_mode<synchronous>, transform_indices = @transform_8, window_bounds = array<i64: 8, 8>}, {pipeline_mode = #tpu.pipeline_mode<synchronous>, transform_indices = @transform_9, window_bounds = array<i64: 128, 512>}, {pipeline_mode = #tpu.pipeline_mode<synchronous>, transform_indices = @transform_10, window_bounds = array<i64: 128, 128>}, {pipeline_mode = #tpu.pipeline_mode<synchronous>, transform_indices = @transform_11, window_bounds = array<i64: 1, 128>}, {pipeline_mode = #tpu.pipeline_mode<synchronous>, transform_indices = @transform_12, window_bounds = array<i64: 128, 128>}, {pipeline_mode = #tpu.pipeline_mode<synchronous>, transform_indices = @transform_13, window_bounds = array<i64: 1, 128>}, {pipeline_mode = #tpu.pipeline_mode<synchronous>, transform_indices = @transform_14, window_bounds = array<i64: 128, 128>}, {pipeline_mode = #tpu.pipeline_mode<synchronous>, transform_indices = @transform_15, window_bounds = array<i64: 1, 128>}, {pipeline_mode = #tpu.pipeline_mode<synchronous>, transform_indices = @transform_16, window_bounds = array<i64: 20, 128>}, {pipeline_mode = #tpu.pipeline_mode<synchronous>, transform_indices = @transform_17, window_bounds = array<i64: 1, 128>}, {pipeline_mode = #tpu.pipeline_mode<synchronous>, transform_indices = @transform_18, window_bounds = array<i64: 20, 128>}, {pipeline_mode = #tpu.pipeline_mode<synchronous>, transform_indices = @transform_19, window_bounds = array<i64: 1, 128>}, {pipeline_mode = #tpu.pipeline_mode<synchronous>, transform_indices = @transform_20, window_bounds = array<i64: 8, 128>}, {transform_indices = @transform_21, window_bounds = array<i64: 1, 8, 128>}]} {
    %c0_i32 = arith.constant 0 : i32
    %0 = arith.cmpi eq, %arg1, %c0_i32 : i32
    %1 = arith.extui %0 : i1 to i32
    %c0_i32_0 = arith.constant 0 : i32
    %2 = arith.cmpi ne, %1, %c0_i32_0 : i32
    scf.if %2 {
      %cst_60 = arith.constant 0.000000e+00 : f32
      %105 = vector.broadcast %cst_60 : f32 to vector<1x8x128xf32>
      %c0_61 = arith.constant 0 : index
      %c0_62 = arith.constant 0 : index
      %c0_63 = arith.constant 0 : index
      %106 = vector.load %arg23[%c0_61, %c0_62, %c0_63] : memref<1x8x128xf32, #tpu.memory_space<vmem>>, vector<1x8x128xf32>
      tpu.vector_store %arg23[%c0_61, %c0_62, %c0_63], %105 {strides = array<i32>} : memref<1x8x128xf32, #tpu.memory_space<vmem>>, vector<1x8x128xf32>,
    } else {
    }
    %c0 = arith.constant 0 : index
    %c0_1 = arith.constant 0 : index
    %3 = vector.load %arg2[%c0, %c0_1] : memref<16x128xbf16, #tpu.memory_space<vmem>>, vector<16x128xbf16>
    %c0_2 = arith.constant 0 : index
    %c0_3 = arith.constant 0 : index
    %4 = vector.load %arg3[%c0_2, %c0_3] : memref<16x8xf32, #tpu.memory_space<vmem>>, vector<16x8xf32>
    %c0_4 = arith.constant 0 : index
    %c0_5 = arith.constant 0 : index
    %5 = vector.load %arg7[%c0_4, %c0_5] : memref<16x1xi32, #tpu.memory_space<vmem>>, vector<16x1xi32>
    %6 = tpu.iota {dimensions = array<i32: 1>} : vector<16x8xi32>
    %7 = vector.broadcast %5 : vector<16x1xi32> to vector<16x8xi32>
    %8 = arith.cmpi eq, %7, %6 : vector<16x8xi32>
    %9 = arith.extui %8 : vector<16x8xi1> to vector<16x8xi32>
    %10 = arith.sitofp %9 : vector<16x8xi32> to vector<16x8xf32>
    %11 = arith.truncf %10 : vector<16x8xf32> to vector<16x8xbf16>
    %c0_6 = arith.constant 0 : index
    %c0_7 = arith.constant 0 : index
    %c0_8 = arith.constant 0 : index
    %12 = vector.load %arg8[%c0_6, %c0_7, %c0_8] : memref<1x1x16xi32, #tpu.memory_space<vmem>>, vector<1x1x16xi32>
    %13 = vector.shape_cast %12 : vector<1x1x16xi32> to vector<1x16xi32>
    %14 = tpu.iota {dimensions = array<i32: 0>} : vector<8x16xi32>
    %15 = vector.broadcast %13 : vector<1x16xi32> to vector<8x16xi32>
    %16 = arith.cmpi eq, %14, %15 : vector<8x16xi32>
    %17 = arith.extui %16 : vector<8x16xi1> to vector<8x16xi32>
    %18 = arith.sitofp %17 : vector<8x16xi32> to vector<8x16xf32>
    %19 = arith.truncf %18 : vector<8x16xf32> to vector<8x16xbf16>
    %c0_9 = arith.constant 0 : index
    %c0_10 = arith.constant 0 : index
    %20 = vector.load %arg9[%c0_9, %c0_10] : memref<8x8xf32, #tpu.memory_space<vmem>>, vector<8x8xf32>
    %21 = arith.truncf %20 : vector<8x8xf32> to vector<8x8xbf16>
    %cst = arith.constant dense<0.000000e+00> : vector<16x8xf32>
    %22 = tpu.matmul %11, %21, %cst {dimension_numbers = #tpu.dot_dimension_numbers<[1], [0], [0], [1], [0, 0, 1, 1], [], []>} : vector<16x8xbf16>, vector<8x8xbf16>, vector<16x8xf32> -> vector<16x8xf32>
    %c0_11 = arith.constant 0 : index
    %c0_12 = arith.constant 0 : index
    %23 = vector.load %arg10[%c0_11, %c0_12] : memref<8x8xf32, #tpu.memory_space<vmem>>, vector<8x8xf32>
    %24 = vector.extract_strided_slice %23 {offsets = [0, 0], sizes = [1, 8], strides = [1, 1]} : vector<8x8xf32> to vector<1x8xf32>
    %25 = vector.broadcast %24 : vector<1x8xf32> to vector<16x8xf32>
    %26 = arith.subf %4, %25 : vector<16x8xf32>
    %27 = math.exp %26 : vector<16x8xf32>
    %28 = arith.mulf %27, %22 : vector<16x8xf32>
    %c0_13 = arith.constant 0 : index
    %c0_14 = arith.constant 0 : index
    %29 = vector.load %arg11[%c0_13, %c0_14] : memref<128x512xbf16, #tpu.memory_space<vmem>>, vector<128x512xbf16>
    %cst_15 = arith.constant dense<0.000000e+00> : vector<16x512xf32>
    %30 = tpu.matmul %3, %29, %cst_15 {dimension_numbers = #tpu.dot_dimension_numbers<[1], [0], [0], [1], [0, 0, 1, 1], [], []>} : vector<16x128xbf16>, vector<128x512xbf16>, vector<16x512xf32> -> vector<16x512xf32>
    %cst_16 = arith.constant 0.000000e+00 : f32
    %31 = vector.broadcast %cst_16 : f32 to vector<16x128xf32>
    %32 = vector.extract_strided_slice %28 {offsets = [0, 0], sizes = [16, 1], strides = [1, 1]} : vector<16x8xf32> to vector<16x1xf32>
    %33 = vector.extract_strided_slice %30 {offsets = [0, 0], sizes = [16, 128], strides = [1, 1]} : vector<16x512xf32> to vector<16x128xf32>
    %34 = vector.broadcast %32 : vector<16x1xf32> to vector<16x128xf32>
    %35 = arith.mulf %34, %33 : vector<16x128xf32>
    %36 = arith.addf %31, %35 : vector<16x128xf32>
    %37 = vector.extract_strided_slice %28 {offsets = [0, 1], sizes = [16, 1], strides = [1, 1]} : vector<16x8xf32> to vector<16x1xf32>
    %38 = vector.extract_strided_slice %30 {offsets = [0, 128], sizes = [16, 128], strides = [1, 1]} : vector<16x512xf32> to vector<16x128xf32>
    %39 = vector.broadcast %37 : vector<16x1xf32> to vector<16x128xf32>
    %40 = arith.mulf %39, %38 : vector<16x128xf32>
    %41 = arith.addf %36, %40 : vector<16x128xf32>
    %42 = vector.extract_strided_slice %28 {offsets = [0, 2], sizes = [16, 1], strides = [1, 1]} : vector<16x8xf32> to vector<16x1xf32>
    %43 = vector.extract_strided_slice %30 {offsets = [0, 256], sizes = [16, 128], strides = [1, 1]} : vector<16x512xf32> to vector<16x128xf32>
    %44 = vector.broadcast %42 : vector<16x1xf32> to vector<16x128xf32>
    %45 = arith.mulf %44, %43 : vector<16x128xf32>
    %46 = arith.addf %41, %45 : vector<16x128xf32>
    %47 = vector.extract_strided_slice %28 {offsets = [0, 3], sizes = [16, 1], strides = [1, 1]} : vector<16x8xf32> to vector<16x1xf32>
    %48 = vector.extract_strided_slice %30 {offsets = [0, 384], sizes = [16, 128], strides = [1, 1]} : vector<16x512xf32> to vector<16x128xf32>
    %49 = vector.broadcast %47 : vector<16x1xf32> to vector<16x128xf32>
    %50 = arith.mulf %49, %48 : vector<16x128xf32>
    %51 = arith.addf %46, %50 : vector<16x128xf32>
    %52 = arith.truncf %51 : vector<16x128xf32> to vector<16x128xbf16>
    %c0_17 = arith.constant 0 : index
    %c0_18 = arith.constant 0 : index
    %53 = vector.load %arg12[%c0_17, %c0_18] : memref<128x128xbf16, #tpu.memory_space<vmem>>, vector<128x128xbf16>
    %cst_19 = arith.constant dense<0.000000e+00> : vector<16x128xf32>
    %54 = tpu.matmul %52, %53, %cst_19 {dimension_numbers = #tpu.dot_dimension_numbers<[1], [0], [0], [1], [0, 0, 1, 1], [], []>} : vector<16x128xbf16>, vector<128x128xbf16>, vector<16x128xf32> -> vector<16x128xf32>
    %c0_20 = arith.constant 0 : index
    %c0_21 = arith.constant 0 : index
    %55 = vector.load %arg13[%c0_20, %c0_21] : memref<1x128xf32, #tpu.memory_space<vmem>>, vector<1x128xf32>
    %56 = vector.broadcast %55 : vector<1x128xf32> to vector<16x128xf32>
    %57 = arith.addf %54, %56 : vector<16x128xf32>
    %cst_22 = arith.constant 0.000000e+00 : f32
    %58 = vector.broadcast %cst_22 : f32 to vector<16x128xf32>
    %59 = arith.subf %58, %57 : vector<16x128xf32>
    %60 = math.exp %59 : vector<16x128xf32>
    %cst_23 = arith.constant 1.000000e+00 : f32
    %61 = vector.broadcast %cst_23 : f32 to vector<16x128xf32>
    %62 = arith.addf %61, %60 : vector<16x128xf32>
    %63 = tpu.reciprocal %62 {approx = true} : vector<16x128xf32> -> vector<16x128xf32>
    %64 = arith.mulf %57, %63 : vector<16x128xf32>
    %65 = arith.truncf %64 : vector<16x128xf32> to vector<16x128xbf16>
    %c0_24 = arith.constant 0 : index
    %c0_25 = arith.constant 0 : index
    %66 = vector.load %arg14[%c0_24, %c0_25] : memref<128x128xbf16, #tpu.memory_space<vmem>>, vector<128x128xbf16>
    %cst_26 = arith.constant dense<0.000000e+00> : vector<16x128xf32>
    %67 = tpu.matmul %65, %66, %cst_26 {dimension_numbers = #tpu.dot_dimension_numbers<[1], [0], [0], [1], [0, 0, 1, 1], [], []>} : vector<16x128xbf16>, vector<128x128xbf16>, vector<16x128xf32> -> vector<16x128xf32>
    %c0_27 = arith.constant 0 : index
    %c0_28 = arith.constant 0 : index
    %68 = vector.load %arg15[%c0_27, %c0_28] : memref<1x128xf32, #tpu.memory_space<vmem>>, vector<1x128xf32>
    %69 = vector.broadcast %68 : vector<1x128xf32> to vector<16x128xf32>
    %70 = arith.addf %67, %69 : vector<16x128xf32>
    %c0_29 = arith.constant 0 : index
    %c0_30 = arith.constant 0 : index
    %71 = vector.load %arg16[%c0_29, %c0_30] : memref<128x128xbf16, #tpu.memory_space<vmem>>, vector<128x128xbf16>
    %cst_31 = arith.constant dense<0.000000e+00> : vector<16x128xf32>
    %72 = tpu.matmul %65, %71, %cst_31 {dimension_numbers = #tpu.dot_dimension_numbers<[1], [0], [0], [1], [0, 0, 1, 1], [], []>} : vector<16x128xbf16>, vector<128x128xbf16>, vector<16x128xf32> -> vector<16x128xf32>
    %c0_32 = arith.constant 0 : index
    %c0_33 = arith.constant 0 : index
    %73 = vector.load %arg17[%c0_32, %c0_33] : memref<1x128xf32, #tpu.memory_space<vmem>>, vector<1x128xf32>
    %74 = vector.broadcast %73 : vector<1x128xf32> to vector<16x128xf32>
    %75 = arith.addf %72, %74 : vector<16x128xf32>
    %c0_34 = arith.constant 0 : index
    %c0_35 = arith.constant 0 : index
    %76 = vector.load %arg4[%c0_34, %c0_35] : memref<16x20xbf16, #tpu.memory_space<vmem>>, vector<16x20xbf16>
    %c0_36 = arith.constant 0 : index
    %c0_37 = arith.constant 0 : index
    %77 = vector.load %arg18[%c0_36, %c0_37] : memref<20x128xbf16, #tpu.memory_space<vmem>>, vector<20x128xbf16>
    %cst_38 = arith.constant dense<0.000000e+00> : vector<16x128xf32>
    %78 = tpu.matmul %76, %77, %cst_38 {dimension_numbers = #tpu.dot_dimension_numbers<[1], [0], [0], [1], [0, 0, 1, 1], [], []>} : vector<16x20xbf16>, vector<20x128xbf16>, vector<16x128xf32> -> vector<16x128xf32>
    %c0_39 = arith.constant 0 : index
    %c0_40 = arith.constant 0 : index
    %79 = vector.load %arg19[%c0_39, %c0_40] : memref<1x128xf32, #tpu.memory_space<vmem>>, vector<1x128xf32>
    %80 = vector.broadcast %79 : vector<1x128xf32> to vector<16x128xf32>
    %81 = arith.addf %78, %80 : vector<16x128xf32>
    %c0_41 = arith.constant 0 : index
    %c0_42 = arith.constant 0 : index
    %82 = vector.load %arg20[%c0_41, %c0_42] : memref<20x128xbf16, #tpu.memory_space<vmem>>, vector<20x128xbf16>
    %cst_43 = arith.constant dense<0.000000e+00> : vector<16x128xf32>
    %83 = tpu.matmul %76, %82, %cst_43 {dimension_numbers = #tpu.dot_dimension_numbers<[1], [0], [0], [1], [0, 0, 1, 1], [], []>} : vector<16x20xbf16>, vector<20x128xbf16>, vector<16x128xf32> -> vector<16x128xf32>
    %c0_44 = arith.constant 0 : index
    %c0_45 = arith.constant 0 : index
    %84 = vector.load %arg21[%c0_44, %c0_45] : memref<1x128xf32, #tpu.memory_space<vmem>>, vector<1x128xf32>
    %85 = vector.broadcast %84 : vector<1x128xf32> to vector<16x128xf32>
    %86 = arith.addf %83, %85 : vector<16x128xf32>
    %c0_46 = arith.constant 0 : index
    %c0_47 = arith.constant 0 : index
    %87 = vector.load %arg6[%c0_46, %c0_47] : memref<16x8xf32, #tpu.memory_space<vmem>>, vector<16x8xf32>
    %c0_48 = arith.constant 0 : index
    %c0_49 = arith.constant 0 : index
    %88 = vector.load %arg22[%c0_48, %c0_49] : memref<8x128xf32, #tpu.memory_space<vmem>>, vector<8x128xf32>
    %cst_50 = arith.constant dense<0.000000e+00> : vector<16x128xf32>
    %89 = tpu.matmul %87, %88, %cst_50 {dimension_numbers = #tpu.dot_dimension_numbers<[1], [0], [0], [1], [0, 0, 1, 1], [], []>} : vector<16x8xf32>, vector<8x128xf32>, vector<16x128xf32> -> vector<16x128xf32>
    %90 = arith.mulf %70, %81 : vector<16x128xf32>
    %c0_51 = arith.constant 0 : index
    %c0_52 = arith.constant 0 : index
    %91 = vector.load %arg5[%c0_51, %c0_52] : memref<16x128xbf16, #tpu.memory_space<vmem>>, vector<16x128xbf16>
    %92 = arith.extf %91 : vector<16x128xbf16> to vector<16x128xf32>
    %93 = arith.mulf %90, %92 : vector<16x128xf32>
    %94 = arith.mulf %75, %86 : vector<16x128xf32>
    %95 = arith.mulf %94, %89 : vector<16x128xf32>
    %96 = arith.addf %93, %95 : vector<16x128xf32>
    %c0_53 = arith.constant 0 : index
    %c0_54 = arith.constant 0 : index
    %c0_55 = arith.constant 0 : index
    %97 = vector.load %arg23[%c0_53, %c0_54, %c0_55] : memref<1x8x128xf32, #tpu.memory_space<vmem>>, vector<1x8x128xf32>
    %98 = vector.shape_cast %97 : vector<1x8x128xf32> to vector<8x128xf32>
    %99 = arith.truncf %96 : vector<16x128xf32> to vector<16x128xbf16>
    %cst_56 = arith.constant dense<0.000000e+00> : vector<8x128xf32>
    %100 = tpu.matmul %19, %99, %cst_56 {dimension_numbers = #tpu.dot_dimension_numbers<[1], [0], [0], [1], [0, 0, 1, 1], [], []>} : vector<8x16xbf16>, vector<16x128xbf16>, vector<8x128xf32> -> vector<8x128xf32>
    %101 = arith.addf %98, %100 : vector<8x128xf32>
    %c0_57 = arith.constant 0 : index
    %c0_58 = arith.constant 0 : index
    %c0_59 = arith.constant 0 : index
    %102 = vector.load %arg23[%c0_57, %c0_58, %c0_59] : memref<1x8x128xf32, #tpu.memory_space<vmem>>, vector<1x8x128xf32>
    %103 = vector.shape_cast %102 : vector<1x8x128xf32> to vector<8x128xf32>
    %104 = vector.shape_cast %101 : vector<8x128xf32> to vector<1x8x128xf32>
    tpu.vector_store %arg23[%c0_57, %c0_58, %c0_59], %104 {strides = array<i32>} : memref<1x8x128xf32, #tpu.memory_space<vmem>>, vector<1x8x128xf32>,
    return
  }
  func.func @transform_0(%arg0: i32, %arg1: i32) -> (i32, i32) {
    %c4_i32 = arith.constant 4 : i32
    %0 = arith.muli %arg0, %c4_i32 : i32
    %1 = arith.addi %0, %arg1 : i32
    %c0_i32 = arith.constant 0 : i32
    %c0_i32_0 = arith.constant 0 : i32
    return %1, %c0_i32 : i32, i32
  }
  func.func @transform_1(%arg0: i32, %arg1: i32) -> (i32, i32) {
    %c4_i32 = arith.constant 4 : i32
    %0 = arith.muli %arg0, %c4_i32 : i32
    %1 = arith.addi %0, %arg1 : i32
    %c0_i32 = arith.constant 0 : i32
    %c0_i32_0 = arith.constant 0 : i32
    return %1, %c0_i32 : i32, i32
  }
  func.func @transform_2(%arg0: i32, %arg1: i32) -> (i32, i32) {
    %c4_i32 = arith.constant 4 : i32
    %0 = arith.muli %arg0, %c4_i32 : i32
    %1 = arith.addi %0, %arg1 : i32
    %c0_i32 = arith.constant 0 : i32
    %c0_i32_0 = arith.constant 0 : i32
    return %1, %c0_i32 : i32, i32
  }
  func.func @transform_3(%arg0: i32, %arg1: i32) -> (i32, i32) {
    %c4_i32 = arith.constant 4 : i32
    %0 = arith.muli %arg0, %c4_i32 : i32
    %1 = arith.addi %0, %arg1 : i32
    %c0_i32 = arith.constant 0 : i32
    %c0_i32_0 = arith.constant 0 : i32
    return %1, %c0_i32 : i32, i32
  }
  func.func @transform_4(%arg0: i32, %arg1: i32) -> (i32, i32) {
    %c4_i32 = arith.constant 4 : i32
    %0 = arith.muli %arg0, %c4_i32 : i32
    %1 = arith.addi %0, %arg1 : i32
    %c0_i32 = arith.constant 0 : i32
    %c0_i32_0 = arith.constant 0 : i32
    return %1, %c0_i32 : i32, i32
  }
  func.func @transform_5(%arg0: i32, %arg1: i32) -> (i32, i32) {
    %c4_i32 = arith.constant 4 : i32
    %0 = arith.muli %arg0, %c4_i32 : i32
    %1 = arith.addi %0, %arg1 : i32
    %c0_i32 = arith.constant 0 : i32
    %c0_i32_0 = arith.constant 0 : i32
    return %1, %c0_i32 : i32, i32
  }
  func.func @transform_6(%arg0: i32, %arg1: i32) -> (i32, i32, i32) {
    %c4_i32 = arith.constant 4 : i32
    %0 = arith.muli %arg0, %c4_i32 : i32
    %1 = arith.addi %0, %arg1 : i32
    %c0_i32 = arith.constant 0 : i32
    %c0_i32_0 = arith.constant 0 : i32
    %c0_i32_1 = arith.constant 0 : i32
    return %1, %c0_i32, %c0_i32_0 : i32, i32, i32
  }
  func.func @transform_7(%arg0: i32, %arg1: i32) -> (i32, i32) {
    %c0_i32 = arith.constant 0 : i32
    %c0_i32_0 = arith.constant 0 : i32
    %c0_i32_1 = arith.constant 0 : i32
    return %c0_i32, %c0_i32_0 : i32, i32
  }
  func.func @transform_8(%arg0: i32, %arg1: i32) -> (i32, i32) {
    %c0_i32 = arith.constant 0 : i32
    %c0_i32_0 = arith.constant 0 : i32
    %c0_i32_1 = arith.constant 0 : i32
    return %c0_i32, %c0_i32_0 : i32, i32
  }
  func.func @transform_9(%arg0: i32, %arg1: i32) -> (i32, i32) {
    %c0_i32 = arith.constant 0 : i32
    %c0_i32_0 = arith.constant 0 : i32
    %c0_i32_1 = arith.constant 0 : i32
    return %c0_i32, %c0_i32_0 : i32, i32
  }
  func.func @transform_10(%arg0: i32, %arg1: i32) -> (i32, i32) {
    %c0_i32 = arith.constant 0 : i32
    %c0_i32_0 = arith.constant 0 : i32
    %c0_i32_1 = arith.constant 0 : i32
    return %c0_i32, %c0_i32_0 : i32, i32
  }
  func.func @transform_11(%arg0: i32, %arg1: i32) -> (i32, i32) {
    %c0_i32 = arith.constant 0 : i32
    %c0_i32_0 = arith.constant 0 : i32
    %c0_i32_1 = arith.constant 0 : i32
    return %c0_i32, %c0_i32_0 : i32, i32
  }
  func.func @transform_12(%arg0: i32, %arg1: i32) -> (i32, i32) {
    %c0_i32 = arith.constant 0 : i32
    %c0_i32_0 = arith.constant 0 : i32
    %c0_i32_1 = arith.constant 0 : i32
    return %c0_i32, %c0_i32_0 : i32, i32
  }
  func.func @transform_13(%arg0: i32, %arg1: i32) -> (i32, i32) {
    %c0_i32 = arith.constant 0 : i32
    %c0_i32_0 = arith.constant 0 : i32
    %c0_i32_1 = arith.constant 0 : i32
    return %c0_i32, %c0_i32_0 : i32, i32
  }
  func.func @transform_14(%arg0: i32, %arg1: i32) -> (i32, i32) {
    %c0_i32 = arith.constant 0 : i32
    %c0_i32_0 = arith.constant 0 : i32
    %c0_i32_1 = arith.constant 0 : i32
    return %c0_i32, %c0_i32_0 : i32, i32
  }
  func.func @transform_15(%arg0: i32, %arg1: i32) -> (i32, i32) {
    %c0_i32 = arith.constant 0 : i32
    %c0_i32_0 = arith.constant 0 : i32
    %c0_i32_1 = arith.constant 0 : i32
    return %c0_i32, %c0_i32_0 : i32, i32
  }
  func.func @transform_16(%arg0: i32, %arg1: i32) -> (i32, i32) {
    %c0_i32 = arith.constant 0 : i32
    %c0_i32_0 = arith.constant 0 : i32
    %c0_i32_1 = arith.constant 0 : i32
    return %c0_i32, %c0_i32_0 : i32, i32
  }
  func.func @transform_17(%arg0: i32, %arg1: i32) -> (i32, i32) {
    %c0_i32 = arith.constant 0 : i32
    %c0_i32_0 = arith.constant 0 : i32
    %c0_i32_1 = arith.constant 0 : i32
    return %c0_i32, %c0_i32_0 : i32, i32
  }
  func.func @transform_18(%arg0: i32, %arg1: i32) -> (i32, i32) {
    %c0_i32 = arith.constant 0 : i32
    %c0_i32_0 = arith.constant 0 : i32
    %c0_i32_1 = arith.constant 0 : i32
    return %c0_i32, %c0_i32_0 : i32, i32
  }
  func.func @transform_19(%arg0: i32, %arg1: i32) -> (i32, i32) {
    %c0_i32 = arith.constant 0 : i32
    %c0_i32_0 = arith.constant 0 : i32
    %c0_i32_1 = arith.constant 0 : i32
    return %c0_i32, %c0_i32_0 : i32, i32
  }
  func.func @transform_20(%arg0: i32, %arg1: i32) -> (i32, i32) {
    %c0_i32 = arith.constant 0 : i32
    %c0_i32_0 = arith.constant 0 : i32
    %c0_i32_1 = arith.constant 0 : i32
    return %c0_i32, %c0_i32_0 : i32, i32
  }
  func.func @transform_21(%arg0: i32, %arg1: i32) -> (i32, i32, i32) {
    %c0_i32 = arith.constant 0 : i32
    %c0_i32_0 = arith.constant 0 : i32
    %c0_i32_1 = arith.constant 0 : i32
    return %arg0, %c0_i32, %c0_i32_0 : i32, i32, i32
  }
}

</mosaic_0001>

<llo_original>
// kernel: mp_block_forward.2
$region0: #{mp_block_forward.2}
  #allocation0 [shape = 'u32[]', space=smem, size = 0x4, offset = 0x4, fixed_abs, tag = 'smem constant byte address 0x4 - core index']
  #allocation1 [shape = 'u32[144,128]{1,0:T(1,128)}', space=vmem, size = 0x12000, scoped, tag = 'internal scratch']
  %s0 = inlined_call_operand.vmem [shape: bf16[64,24], index: 0, kind: input, shape index: {}]
  %s1 = inlined_call_operand.vmem [shape: s32[4,1,16], index: 1, kind: input, shape index: {}]
  %s2 = inlined_call_operand.vmem [shape: bf16[24,32], index: 2, kind: input, shape index: {}]
  %s3 = inlined_call_operand.vmem [shape: f32[1,32], index: 3, kind: input, shape index: {}]
  %s4 = inlined_call_operand.vmem [shape: bf16[32,128], index: 4, kind: input, shape index: {}]
  %s5 = inlined_call_operand.vmem [shape: f32[1,128], index: 5, kind: input, shape index: {}]
  %s6 = inlined_call_operand.vmem [shape: bf16[128,512], index: 6, kind: input, shape index: {}]
  %s7 = inlined_call_operand.vmem [shape: f32[512,8], index: 7, kind: input, shape index: {}]
  %s8 = inlined_call_operand.vmem [shape: bf16[64,128], index: 8, kind: output, shape index: {0}]
  %s9 = inlined_call_operand.vmem [shape: f32[64,8], index: 9, kind: output, shape index: {1}]
  %s10 = inlined_call_operand.vmem [shape: f32[1,8,8], index: 10, kind: output, shape index: {2}]
  %s11 = inlined_call_operand.vmem [shape: f32[1,8,8], index: 11, kind: output, shape index: {3}]
  %12 = xla_tuple %s8, %s9, %s10, %s11
  %s13 = sld [smem:[#allocation0]]
  $region93: #{mp_block_forward.2} parent=0
    _
  %s15 = ssub.s32 1, %s13
  %s16 = scalar_select 0, %s15, %s13
  loop: start=0, step=1, limit=6
  $region2: #{mp_block_forward.2} parent=0 // loop_pre_header
    _
  $region3: #{mp_block_forward.2} parent=0 // loop_header
    %s18 = sphi 0, %s22
    %p19 = scmp.ge.s32.totalorder %s18, 6
    %s25 = sphi 0, %s37
    %s26 = sphi 0, %s33
    %s27 = sphi 0, %s25
    %s28 = sphi 0, %s26
    %s29 = sphi 0, %s27
    %s30 = sphi 0, %s28
    %s44 = sphi 0, %s46
    %s47 = sphi 0, %s44
    %s48 = sphi 0, %s47
    %s64 = sphi 0, %s48
    %s74 = sphi 0, %s76
    %s77 = sphi 0, %s74
    %s78 = sphi 0, %s77
    %s94 = sphi 0, %s78
    %s98 = sphi 0, %s98
    %s100 = sphi 0, %s98
    %s101 = sphi 0, %s100
    %s115 = sphi 0, %s101
    %s119 = sphi 0, %s119
    %s121 = sphi 0, %s119
    %s122 = sphi 0, %s121
    %s136 = sphi 0, %s122
    %s140 = sphi 0, %s140
    %s142 = sphi 0, %s140
    %s143 = sphi 0, %s142
    %s157 = sphi 0, %s143
    %s161 = sphi 0, %s161
    %s163 = sphi 0, %s161
    %s164 = sphi 0, %s163
    %s178 = sphi 0, %s164
    %s182 = sphi 0, %s182
    %s184 = sphi 0, %s182
    %s185 = sphi 0, %s184
    %s199 = sphi 0, %s185
    %s203 = sphi 0, %s203
    %s205 = sphi 0, %s203
    %s206 = sphi 0, %s205
    %s220 = sphi 0, %s206
    %s230 = sphi 0, %s232
    %s233 = sphi 0, %s230
    %s234 = sphi 0, %s233
    %s250 = sphi 0, %s234
    %s260 = sphi 0, %s262
    %s263 = sphi 0, %s260
    %s264 = sphi 0, %s263
    %s280 = sphi 0, %s264
    %s286 = sphi 0, %s288
    %s289 = sphi 0, %s286
    %s290 = sphi 0, %s289
    %s306 = sphi 0, %s290
    %s312 = sphi 0, %s314
    %s315 = sphi 0, %s312
    %s316 = sphi 0, %s315
    %s332 = sphi 0, %s316
  $region4: #{mp_block_forward.2} parent=0 // loop_header_branch
    %21 = sbr.rel (%p19) target = $region8
  $region5: #{mp_block_forward.2} parent=0 // loop_body
    %s23 = ssub.s32 %s18, 1
    %s24 = ssub.s32 %s18, 2
    %s31 = sadd.s32 1, %s26
    %p32 = scmp.ge.s32.totalorder %s31, 4
    %s33 = scalar_select %p32, 0, %s31
    %s34 = sadd.s32 1, %s25
    %s35 = scalar_select %p32, %s34, %s25
    %p36 = scmp.ge.s32.totalorder %s35, 1
    %s37 = scalar_select %p36, 0, %s35
    %s38 = smul.u32 %s25, 4
    %s39 = sadd.s32 %s38, %s26
    %s40 = smul.u32 %s37, 4
    %s41 = sadd.s32 %s40, %s33
    %s42 = ssub.s32 %s39, %s41
    %p43 = scmp.eq.s32.totalorder %s42, 0
    %s45 = sadd.s32 %s44, 1
    %s46 = scalar_select %p43, %s44, %s45
    %p49 = pneg %p43
    %p50 = scmp.eq.s32.totalorder %s18, 3
    %p51 = por %p49, %p50
    %p52 = scmp.ne.s32.totalorder %s44, %s47
    %p53 = scmp.eq.s32.totalorder %s18, 0
    %p54 = por %p52, %p53
    %p55 = scmp.ne.s32.totalorder %s44, %s47
    %p56 = scmp.eq.s32.totalorder %s23, 3
    %p57 = por %p55, %p56
    %p58 = scmp.ne.s32.totalorder %s47, %s48
    %p59 = scmp.eq.s32.totalorder %s23, 0
    %p60 = por %p58, %p59
    %p61 = scmp.ne.s32.totalorder %s47, %s48
    %p62 = scmp.eq.s32.totalorder %s24, 3
    %p63 = por %p61, %p62
    %p65 = scmp.ne.s32.totalorder %s48, %s64
    %p66 = scmp.eq.s32.totalorder %s24, 0
    %p67 = por %p65, %p66
    %s68 = smul.u32 %s25, 4
    %s69 = sadd.s32 %s68, %s26
    %s70 = smul.u32 %s37, 4
    %s71 = sadd.s32 %s70, %s33
    %s72 = ssub.s32 %s69, %s71
    %p73 = scmp.eq.s32.totalorder %s72, 0
    %s75 = sadd.s32 %s74, 1
    %s76 = scalar_select %p73, %s74, %s75
    %p79 = pneg %p73
    %p80 = scmp.eq.s32.totalorder %s18, 3
    %p81 = por %p79, %p80
    %p82 = scmp.ne.s32.totalorder %s74, %s77
    %p83 = scmp.eq.s32.totalorder %s18, 0
    %p84 = por %p82, %p83
    %p85 = scmp.ne.s32.totalorder %s74, %s77
    %p86 = scmp.eq.s32.totalorder %s23, 3
    %p87 = por %p85, %p86
    %p88 = scmp.ne.s32.totalorder %s77, %s78
    %p89 = scmp.eq.s32.totalorder %s23, 0
    %p90 = por %p88, %p89
    %p91 = scmp.ne.s32.totalorder %s77, %s78
    %p92 = scmp.eq.s32.totalorder %s24, 3
    %p93 = por %p91, %p92
    %p95 = scmp.ne.s32.totalorder %s78, %s94
    %p96 = scmp.eq.s32.totalorder %s24, 0
    %p97 = por %p95, %p96
    %s99 = sadd.s32 %s98, 1
    %p102 = scmp.eq.s32.totalorder %s18, 3
    %p103 = scmp.ne.s32.totalorder %s98, %s100
    %p104 = scmp.eq.s32.totalorder %s18, 0
    %p105 = por %p103, %p104
    %p106 = scmp.ne.s32.totalorder %s98, %s100
    %p107 = scmp.eq.s32.totalorder %s23, 3
    %p108 = por %p106, %p107
    %p109 = scmp.ne.s32.totalorder %s100, %s101
    %p110 = scmp.eq.s32.totalorder %s23, 0
    %p111 = por %p109, %p110
    %p112 = scmp.ne.s32.totalorder %s100, %s101
    %p113 = scmp.eq.s32.totalorder %s24, 3
    %p114 = por %p112, %p113
    %p116 = scmp.ne.s32.totalorder %s101, %s115
    %p117 = scmp.eq.s32.totalorder %s24, 0
    %p118 = por %p116, %p117
    %s120 = sadd.s32 %s119, 1
    %p123 = scmp.eq.s32.totalorder %s18, 3
    %p124 = scmp.ne.s32.totalorder %s119, %s121
    %p125 = scmp.eq.s32.totalorder %s18, 0
    %p126 = por %p124, %p125
    %p127 = scmp.ne.s32.totalorder %s119, %s121
    %p128 = scmp.eq.s32.totalorder %s23, 3
    %p129 = por %p127, %p128
    %p130 = scmp.ne.s32.totalorder %s121, %s122
    %p131 = scmp.eq.s32.totalorder %s23, 0
    %p132 = por %p130, %p131
    %p133 = scmp.ne.s32.totalorder %s121, %s122
    %p134 = scmp.eq.s32.totalorder %s24, 3
    %p135 = por %p133, %p134
    %p137 = scmp.ne.s32.totalorder %s122, %s136
    %p138 = scmp.eq.s32.totalorder %s24, 0
    %p139 = por %p137, %p138
    %s141 = sadd.s32 %s140, 1
    %p144 = scmp.eq.s32.totalorder %s18, 3
    %p145 = scmp.ne.s32.totalorder %s140, %s142
    %p146 = scmp.eq.s32.totalorder %s18, 0
    %p147 = por %p145, %p146
    %p148 = scmp.ne.s32.totalorder %s140, %s142
    %p149 = scmp.eq.s32.totalorder %s23, 3
    %p150 = por %p148, %p149
    %p151 = scmp.ne.s32.totalorder %s142, %s143
    %p152 = scmp.eq.s32.totalorder %s23, 0
    %p153 = por %p151, %p152
    %p154 = scmp.ne.s32.totalorder %s142, %s143
    %p155 = scmp.eq.s32.totalorder %s24, 3
    %p156 = por %p154, %p155
    %p158 = scmp.ne.s32.totalorder %s143, %s157
    %p159 = scmp.eq.s32.totalorder %s24, 0
    %p160 = por %p158, %p159
    %s162 = sadd.s32 %s161, 1
    %p165 = scmp.eq.s32.totalorder %s18, 3
    %p166 = scmp.ne.s32.totalorder %s161, %s163
    %p167 = scmp.eq.s32.totalorder %s18, 0
    %p168 = por %p166, %p167
    %p169 = scmp.ne.s32.totalorder %s161, %s163
    %p170 = scmp.eq.s32.totalorder %s23, 3
    %p171 = por %p169, %p170
    %p172 = scmp.ne.s32.totalorder %s163, %s164
    %p173 = scmp.eq.s32.totalorder %s23, 0
    %p174 = por %p172, %p173
    %p175 = scmp.ne.s32.totalorder %s163, %s164
    %p176 = scmp.eq.s32.totalorder %s24, 3
    %p177 = por %p175, %p176
    %p179 = scmp.ne.s32.totalorder %s164, %s178
    %p180 = scmp.eq.s32.totalorder %s24, 0
    %p181 = por %p179, %p180
    %s183 = sadd.s32 %s182, 1
    %p186 = scmp.eq.s32.totalorder %s18, 3
    %p187 = scmp.ne.s32.totalorder %s182, %s184
    %p188 = scmp.eq.s32.totalorder %s18, 0
    %p189 = por %p187, %p188
    %p190 = scmp.ne.s32.totalorder %s182, %s184
    %p191 = scmp.eq.s32.totalorder %s23, 3
    %p192 = por %p190, %p191
    %p193 = scmp.ne.s32.totalorder %s184, %s185
    %p194 = scmp.eq.s32.totalorder %s23, 0
    %p195 = por %p193, %p194
    %p196 = scmp.ne.s32.totalorder %s184, %s185
    %p197 = scmp.eq.s32.totalorder %s24, 3
    %p198 = por %p196, %p197
    %p200 = scmp.ne.s32.totalorder %s185, %s199
    %p201 = scmp.eq.s32.totalorder %s24, 0
    %p202 = por %p200, %p201
    %s204 = sadd.s32 %s203, 1
    %p207 = scmp.eq.s32.totalorder %s18, 3
    %p208 = scmp.ne.s32.totalorder %s203, %s205
    %p209 = scmp.eq.s32.totalorder %s18, 0
    %p210 = por %p208, %p209
    %p211 = scmp.ne.s32.totalorder %s203, %s205
    %p212 = scmp.eq.s32.totalorder %s23, 3
    %p213 = por %p211, %p212
    %p214 = scmp.ne.s32.totalorder %s205, %s206
    %p215 = scmp.eq.s32.totalorder %s23, 0
    %p216 = por %p214, %p215
    %p217 = scmp.ne.s32.totalorder %s205, %s206
    %p218 = scmp.eq.s32.totalorder %s24, 3
    %p219 = por %p217, %p218
    %p221 = scmp.ne.s32.totalorder %s206, %s220
    %p222 = scmp.eq.s32.totalorder %s24, 0
    %p223 = por %p221, %p222
    %s224 = smul.u32 %s25, 4
    %s225 = sadd.s32 %s224, %s26
    %s226 = smul.u32 %s37, 4
    %s227 = sadd.s32 %s226, %s33
    %s228 = ssub.s32 %s225, %s227
    %p229 = scmp.eq.s32.totalorder %s228, 0
    %s231 = sadd.s32 %s230, 1
    %s232 = scalar_select %p229, %s230, %s231
    %p235 = pneg %p229
    %p236 = scmp.eq.s32.totalorder %s18, 3
    %p237 = por %p235, %p236
    %p238 = scmp.ne.s32.totalorder %s230, %s233
    %p239 = scmp.eq.s32.totalorder %s18, 0
    %p240 = por %p238, %p239
    %p241 = scmp.ne.s32.totalorder %s230, %s233
    %p242 = scmp.eq.s32.totalorder %s23, 3
    %p243 = por %p241, %p242
    %p244 = scmp.ne.s32.totalorder %s233, %s234
    %p245 = scmp.eq.s32.totalorder %s23, 0
    %p246 = por %p244, %p245
    %p247 = scmp.ne.s32.totalorder %s233, %s234
    %p248 = scmp.eq.s32.totalorder %s24, 3
    %p249 = por %p247, %p248
    %p251 = scmp.ne.s32.totalorder %s234, %s250
    %p252 = scmp.eq.s32.totalorder %s24, 0
    %p253 = por %p251, %p252
    %s254 = smul.u32 %s25, 4
    %s255 = sadd.s32 %s254, %s26
    %s256 = smul.u32 %s37, 4
    %s257 = sadd.s32 %s256, %s33
    %s258 = ssub.s32 %s255, %s257
    %p259 = scmp.eq.s32.totalorder %s258, 0
    %s261 = sadd.s32 %s260, 1
    %s262 = scalar_select %p259, %s260, %s261
    %p265 = pneg %p259
    %p266 = scmp.eq.s32.totalorder %s18, 3
    %p267 = por %p265, %p266
    %p268 = scmp.ne.s32.totalorder %s260, %s263
    %p269 = scmp.eq.s32.totalorder %s18, 0
    %p270 = por %p268, %p269
    %p271 = scmp.ne.s32.totalorder %s260, %s263
    %p272 = scmp.eq.s32.totalorder %s23, 3
    %p273 = por %p271, %p272
    %p274 = scmp.ne.s32.totalorder %s263, %s264
    %p275 = scmp.eq.s32.totalorder %s23, 0
    %p276 = por %p274, %p275
    %p277 = scmp.ne.s32.totalorder %s263, %s264
    %p278 = scmp.eq.s32.totalorder %s24, 3
    %p279 = por %p277, %p278
    %p281 = scmp.ne.s32.totalorder %s264, %s280
    %p282 = scmp.eq.s32.totalorder %s24, 0
    %p283 = por %p281, %p282
    %s284 = ssub.s32 %s25, %s37
    %p285 = scmp.eq.s32.totalorder %s284, 0
    %s287 = sadd.s32 %s286, 1
    %s288 = scalar_select %p285, %s286, %s287
    %p291 = pneg %p285
    %p292 = scmp.eq.s32.totalorder %s18, 3
    %p293 = por %p291, %p292
    %p294 = scmp.ne.s32.totalorder %s286, %s289
    %p295 = scmp.eq.s32.totalorder %s18, 0
    %p296 = por %p294, %p295
    %p297 = scmp.ne.s32.totalorder %s286, %s289
    %p298 = scmp.eq.s32.totalorder %s23, 3
    %p299 = por %p297, %p298
    %p300 = scmp.ne.s32.totalorder %s289, %s290
    %p301 = scmp.eq.s32.totalorder %s23, 0
    %p302 = por %p300, %p301
    %p303 = scmp.ne.s32.totalorder %s289, %s290
    %p304 = scmp.eq.s32.totalorder %s24, 3
    %p305 = por %p303, %p304
    %p307 = scmp.ne.s32.totalorder %s290, %s306
    %p308 = scmp.eq.s32.totalorder %s24, 0
    %p309 = por %p307, %p308
    %s310 = ssub.s32 %s25, %s37
    %p311 = scmp.eq.s32.totalorder %s310, 0
    %s313 = sadd.s32 %s312, 1
    %s314 = scalar_select %p311, %s312, %s313
    %p317 = pneg %p311
    %p318 = scmp.eq.s32.totalorder %s18, 3
    %p319 = por %p317, %p318
    %p320 = scmp.ne.s32.totalorder %s312, %s315
    %p321 = scmp.eq.s32.totalorder %s18, 0
    %p322 = por %p320, %p321
    %p323 = scmp.ne.s32.totalorder %s312, %s315
    %p324 = scmp.eq.s32.totalorder %s23, 3
    %p325 = por %p323, %p324
    %p326 = scmp.ne.s32.totalorder %s315, %s316
    %p327 = scmp.eq.s32.totalorder %s23, 0
    %p328 = por %p326, %p327
    %p329 = scmp.ne.s32.totalorder %s315, %s316
    %p330 = scmp.eq.s32.totalorder %s24, 3
    %p331 = por %p329, %p330
    %p333 = scmp.ne.s32.totalorder %s316, %s332
    %p334 = scmp.eq.s32.totalorder %s24, 0
    %p335 = por %p333, %p334
    %p336 = scmp.le.s32.totalorder 1, %s18
    %p337 = scmp.lt.s32.totalorder %s18, 5
    %p338 = pnand %p336, %p337
    %p339 = pneg %p338
    // Predicated region
    $region9: #{mp_block_forward.2} parent=5 // pred_check
      _
    $region10: #{mp_block_forward.2} parent=5 // pred_check_branch
      %341 = sbr.rel (%p338) target = $region12
    $region11: #{mp_block_forward.2} parent=5 // pred_region
      %s342 = ssub.s32 %s18, 1
      // Predicated region
      $region13: #{mp_block_forward.2} parent=11 // pred_check
        %p343 = pneg %p111
      $region14: #{mp_block_forward.2} parent=11 // pred_check_branch
        %345 = sbr.rel (%p343) target = $region16
      $region15: #{mp_block_forward.2} parent=11 // pred_region
        _
      $region16: #{mp_block_forward.2} parent=11 // pred_fallthru
        _
      // Predicated region
      $region17: #{mp_block_forward.2} parent=11 // pred_check
        %p346 = pneg %p132
      $region18: #{mp_block_forward.2} parent=11 // pred_check_branch
        %348 = sbr.rel (%p346) target = $region20
      $region19: #{mp_block_forward.2} parent=11 // pred_region
        _
      $region20: #{mp_block_forward.2} parent=11 // pred_fallthru
        _
      // Predicated region
      $region21: #{mp_block_forward.2} parent=11 // pred_check
        %p349 = pneg %p153
      $region22: #{mp_block_forward.2} parent=11 // pred_check_branch
        %351 = sbr.rel (%p349) target = $region24
      $region23: #{mp_block_forward.2} parent=11 // pred_region
        _
      $region24: #{mp_block_forward.2} parent=11 // pred_fallthru
        _
      // Predicated region
      $region25: #{mp_block_forward.2} parent=11 // pred_check
        %p352 = pneg %p174
      $region26: #{mp_block_forward.2} parent=11 // pred_check_branch
        %354 = sbr.rel (%p352) target = $region28
      $region27: #{mp_block_forward.2} parent=11 // pred_region
        _
      $region28: #{mp_block_forward.2} parent=11 // pred_fallthru
        _
      // Predicated region
      $region29: #{mp_block_forward.2} parent=11 // pred_check
        %p355 = pneg %p195
      $region30: #{mp_block_forward.2} parent=11 // pred_check_branch
        %357 = sbr.rel (%p355) target = $region32
      $region31: #{mp_block_forward.2} parent=11 // pred_region
        _
      $region32: #{mp_block_forward.2} parent=11 // pred_fallthru
        _
      // Predicated region
      $region33: #{mp_block_forward.2} parent=11 // pred_check
        %p358 = pneg %p216
      $region34: #{mp_block_forward.2} parent=11 // pred_check_branch
        %360 = sbr.rel (%p358) target = $region36
      $region35: #{mp_block_forward.2} parent=11 // pred_region
        _
      $region36: #{mp_block_forward.2} parent=11 // pred_fallthru
        _
    $region12: #{mp_block_forward.2} parent=5 // pred_fallthru
      _
    %p361 = scmp.lt.s32.totalorder %s18, 4
    // Predicated region
    $region37: #{mp_block_forward.2} parent=5 // pred_check
      %p362 = pneg %p361
    $region38: #{mp_block_forward.2} parent=5 // pred_check_branch
      %364 = sbr.rel (%p362) target = $region40
    $region39: #{mp_block_forward.2} parent=5 // pred_region
      // Predicated region
      $region41: #{mp_block_forward.2} parent=39 // pred_check
        %p365 = pneg %p54
      $region42: #{mp_block_forward.2} parent=39 // pred_check_branch
        %367 = sbr.rel (%p365) target = $region44
      $region43: #{mp_block_forward.2} parent=39 // pred_region
        %s368 = smul.u32 %s25, 4
        %s369 = sadd.s32 %s368, %s26
        %s370 = smul.u32 2, %s369
        %p371 = scmp.lt.s32.totalorder %s370, 7
        %s372 = scalar_select %p371, %s370, 7
        %s373 = smul.addr %s372, 4
        %s374 = scalar_lea.vmem %s0, %s373
        %s375 = smul.u32 %s25, 4
        %s376 = sadd.s32 %s375, %s26
        %s377 = smul.u32 2, %s376
      $region44: #{mp_block_forward.2} parent=39 // pred_fallthru
        _
      // Predicated region
      $region45: #{mp_block_forward.2} parent=39 // pred_check
        %p378 = pneg %p84
      $region46: #{mp_block_forward.2} parent=39 // pred_check_branch
        %380 = sbr.rel (%p378) target = $region48
      $region47: #{mp_block_forward.2} parent=39 // pred_region
        %s381 = smul.u32 %s25, 4
        %s382 = sadd.s32 %s381, %s26
        %p383 = scmp.lt.s32.totalorder %s382, 3
        %s384 = scalar_select %p383, %s382, 3
        %s385 = scalar_lea.vmem %s1, %s384
        %s386 = smul.u32 %s25, 4
        %s387 = sadd.s32 %s386, %s26
      $region48: #{mp_block_forward.2} parent=39 // pred_fallthru
        _
    $region40: #{mp_block_forward.2} parent=5 // pred_fallthru
      _
    %p388 = scmp.le.s32.totalorder 1, %s18
    %p389 = scmp.lt.s32.totalorder %s18, 5
    %p390 = pnand %p388, %p389
    %p391 = pneg %p390
    // Predicated region
    $region49: #{mp_block_forward.2} parent=5 // pred_check
      _
    $region50: #{mp_block_forward.2} parent=5 // pred_check_branch
      %393 = sbr.rel (%p390) target = $region52
    $region51: #{mp_block_forward.2} parent=5 // pred_region
      %s394 = ssub.s32 %s18, 1
      %s395 = smul.u32 %s27, 4
      %s396 = sadd.s32 %s395, %s28
      %s397 = smul.u32 2, %s396
      %p398 = scmp.lt.s32.totalorder %s397, 7
      %s399 = scalar_select %p398, %s397, 7
      %s400 = smul.addr %s399, 4
      %s401 = scalar_lea.vmem %s0, %s400
      %p402 = pneg %p60
      %p403 = pneg %p57
      %s404 = smul.u32 %s27, 4
      %s405 = sadd.s32 %s404, %s28
      %p406 = scmp.lt.s32.totalorder %s405, 3
      %s407 = scalar_select %p406, %s405, 3
      %s408 = scalar_lea.vmem %s1, %s407
      %p409 = pneg %p90
      %p410 = pneg %p87
      %p411 = pneg %p111
      %p412 = pneg %p108
      %p413 = pneg %p132
      %p414 = pneg %p129
      %p415 = pneg %p153
      %p416 = pneg %p150
      %p417 = pneg %p174
      %p418 = pneg %p171
      %p419 = pneg %p195
      %p420 = pneg %p192
      %p421 = pneg %p216
      %p422 = pneg %p213
      %p423 = pneg %p246
      %p424 = pneg %p243
      %s425 = smul.u32 %s27, 4
      %s426 = sadd.s32 %s425, %s28
      %s427 = smul.u32 2, %s426
      %p428 = scmp.lt.s32.totalorder %s427, 7
      %s429 = scalar_select %p428, %s427, 7
      %s430 = smul.addr %s429, 4
      %s431 = scalar_lea.vmem %s8, %s430
      %p432 = pneg %p276
      %p433 = pneg %p273
      %s434 = smul.u32 %s27, 4
      %s435 = sadd.s32 %s434, %s28
      %s436 = smul.u32 2, %s435
      %p437 = scmp.lt.s32.totalorder %s436, 7
      %s438 = scalar_select %p437, %s436, 7
      %s439 = smul.addr %s438, 8
      %s440 = scalar_lea.vmem %s9, %s439
      %p441 = pneg %p302
      %p442 = pneg %p299
      %p443 = scmp.lt.s32.totalorder %s27, 0
      %s444 = scalar_select %p443, %s27, 0
      %s445 = smul.addr %s444, 8
      %s446 = scalar_lea.vmem %s10, %s445
      %p447 = pneg %p328
      %p448 = pneg %p325
      %p449 = scmp.lt.s32.totalorder %s27, 0
      %s450 = scalar_select %p449, %s27, 0
      %s451 = smul.addr %s450, 8
      %s452 = scalar_lea.vmem %s11, %s451
      %s453 = smul.u32 %s27, 4
      %s454 = sadd.s32 %s453, %s28
      %s455 = smul.u32 2, %s454
      %p456 = scmp.lt.s32.totalorder %s455, 7
      %s457 = scalar_select %p456, %s455, 7
      %s458 = smul.addr %s457, 4
      %s459 = scalar_lea.vmem %s0, %s458
      %s460 = smul.u32 %s27, 4
      %s461 = sadd.s32 %s460, %s28
      %s462 = smul.u32 2, %s461
      %s463 = smul.u32 %s27, 4
      %s464 = sadd.s32 %s463, %s28
      %p465 = scmp.lt.s32.totalorder %s464, 3
      %s466 = scalar_select %p465, %s464, 3
      %s467 = scalar_lea.vmem %s1, %s466
      %s468 = smul.u32 %s27, 4
      %s469 = sadd.s32 %s468, %s28
      %s470 = smul.u32 %s27, 4
      %s471 = sadd.s32 %s470, %s28
      %s472 = smul.u32 2, %s471
      %p473 = scmp.lt.s32.totalorder %s472, 7
      %s474 = scalar_select %p473, %s472, 7
      %s475 = smul.addr %s474, 4
      %s476 = scalar_lea.vmem %s8, %s475
      %s477 = smul.u32 %s27, 4
      %s478 = sadd.s32 %s477, %s28
      %s479 = smul.u32 2, %s478
      %s480 = smul.u32 %s27, 4
      %s481 = sadd.s32 %s480, %s28
      %s482 = smul.u32 2, %s481
      %p483 = scmp.lt.s32.totalorder %s482, 7
      %s484 = scalar_select %p483, %s482, 7
      %s485 = smul.addr %s484, 8
      %s486 = scalar_lea.vmem %s9, %s485
      %s487 = smul.u32 %s27, 4
      %s488 = sadd.s32 %s487, %s28
      %s489 = smul.u32 2, %s488
      %p490 = scmp.lt.s32.totalorder %s27, 0
      %s491 = scalar_select %p490, %s27, 0
      %s492 = smul.addr %s491, 8
      %s493 = scalar_lea.vmem %s10, %s492
      %p494 = scmp.lt.s32.totalorder %s27, 0
      %s495 = scalar_select %p494, %s27, 0
      %s496 = smul.addr %s495, 8
      %s497 = scalar_lea.vmem %s11, %s496
      %p499 = scmp.eq.s32.totalorder %s28, 0
      // Predicated region
      $region53: #{mp_block_forward.2} parent=51 // pred_check
        %p500 = pneg %p499
      $region54: #{mp_block_forward.2} parent=51 // pred_check_branch
        %502 = sbr.rel (%p500) target = $region56
      $region55: #{mp_block_forward.2} parent=51 // pred_region
        %vm503 = vcmask 64512
        %504 = vst.msk [vmem:[%s493] sm:$0xff] %vm503, -1.2676506e+30
        %505 = vst.msk [vmem:[%s497] sm:$0xff] %vm503, 0.0
      $region56: #{mp_block_forward.2} parent=51 // pred_fallthru
        _
      %v506 = vld [vmem:[%s459] sm:$0xf]
      %v507 = vld [vmem:[%s459 + $0x4] sm:$0xf]
      %v508 = vld [vmem:[%s2] sm:$0xf]
      %v509 = vld [vmem:[%s2 + $0x4] sm:$0xf]
      %v510 = vld [vmem:[%s2 + $0x8] sm:$0xf]
      %v511 = vld [vmem:[%s3] sm:$0x1]
      %v513 = vlaneseq
      %v514 = vshrl.u32 %v513, 7
      %v515 = vsub.s32 0, %v514
      %v516 = vrot.slane %v511, %v515
      %v520 = vunpack.c.l.b16 %v506
      %v521 = vunpack.c.l.b16 %v507
      %v522 = vpack.c.b16 %v521, %v520
      %v526 = vunpack.c.l.b16 %v508
      %v527 = vunpack.c.l.b16 %v509
      %v528 = vunpack.c.l.b16 %v510
      %v529 = vpack.c.b16 %v527, %v526
      %v530 = vpack.c.b16 %v528, %v528
      %vm532 = vcmask 195584
      %v534 = vsel %vm532, %v522, 0
      %vm536 = vcmask 1043456
      %v538 = vsel %vm536, %v530, 0
      %540 = vmatprep.subr.bf16.mxu0 0
      %541 = vmatpush1.bf16.msra.mxu0 %v529
      %542 = vmatprep.subr.bf16.mxu0 0
      %543 = vmatpush1.bf16.msra.mxu0 %v538
      %544 = vmatprep.subr.bf16.mxu0 0
      %545 = vmatpush1.bf16.msra.mxu0 0
      %546 = vmatprep.subr.bf16.mxu0 0
      %547 = vmatpush1.bf16.msra.mxu0 0
      %548 = vmatprep.subr.bf16.mxu0 0
      %549 = vmatpush1.bf16.msra.mxu0 0
      %550 = vmatprep.subr.bf16.mxu0 0
      %551 = vmatpush1.bf16.msra.mxu0 0
      %552 = vmatprep.subr.bf16.mxu0 0
      %553 = vmatpush1.bf16.msra.mxu0 0
      %554 = vmatprep.subr.bf16.mxu0 0
      %555 = vmatpush1.bf16.msra.mxu0 0
      %556 = vmatprep.subr.bf16.mxu0 0
      %557 = vmatpush1.bf16.msra.mxu0 0
      %558 = vmatprep.subr.bf16.mxu0 0
      %559 = vmatpush1.bf16.msra.mxu0 0
      %560 = vmatprep.subr.bf16.mxu0 0
      %561 = vmatpush1.bf16.msra.mxu0 0
      %562 = vmatprep.subr.bf16.mxu0 0
      %563 = vmatpush1.bf16.msra.mxu0 0
      %564 = vmatprep.subr.bf16.mxu0 0
      %565 = vmatpush1.bf16.msra.mxu0 0
      %566 = vmatprep.subr.bf16.mxu0 0
      %567 = vmatpush1.bf16.msra.mxu0 0
      %568 = vmatprep.subr.bf16.mxu0 0
      %569 = vmatpush1.bf16.msra.mxu0 0
      %570 = vmatprep.subr.bf16.mxu0 0
      %571 = vmatpush1.bf16.msra.mxu0 0
      %572 = vmatprep.mubr.bf16.mxu0 0
      %573 = vmatmul.mubr.bf16.gmra.mrb[0].mxu0 %v534
      %v574 = vpop.f32.mrb[0].mxu0
      %v575 = vadd.f32 %v516, %v574
      %v576 = vpop.f32.mrb[0].mxu0
      %v577 = vpop.f32.mrb[0].mxu0
      %v578 = vadd.f32 %v516, %v577
      %v579 = vpop.f32.mrb[0].mxu0
      %580 = vdwg.mxu0
      %v581 = vsub.f32 0.0, %v575
      %v582 = vsub.f32 0.0, %v578
      %v583 = vmul.f32 %v581, 1.442695
      %v584 = vpow.pop %v583
      %v585 = vmul.f32 %v582, 1.442695
      %v586 = vpow.pop %v585
      %v587 = vadd.f32 %v584, 1.0
      %v588 = vadd.f32 %v586, 1.0
      %v589 = vrcp.pop %v587
      %v590 = vrcp.pop %v588
      %v591 = vmul.f32 %v575, %v589
      %v592 = vmul.f32 %v578, %v590
      %v593 = vpack.c.bf16 %v592, %v591
      %v594 = vld [vmem:[%s4] sm:$0xf]
      %v595 = vld [vmem:[%s4 + $0x4] sm:$0xf]
      %v596 = vld [vmem:[%s4 + $0x8] sm:$0xf]
      %v597 = vld [vmem:[%s4 + $0xc] sm:$0xf]
      %v598 = vld [vmem:[%s5] sm:$0x1]
      %v600 = vlaneseq
      %v601 = vshrl.u32 %v600, 7
      %v602 = vsub.s32 0, %v601
      %v603 = vrot.slane %v598, %v602
      %v609 = vunpack.c.l.b16 %v594
      %v610 = vunpack.c.l.b16 %v595
      %v611 = vunpack.c.l.b16 %v596
      %v612 = vunpack.c.l.b16 %v597
      %v613 = vpack.c.b16 %v610, %v609
      %v614 = vpack.c.b16 %v612, %v611
      %vm617 = vcmask 261120
      %v619 = vsel %vm617, %v593, 0
      %621 = vmatprep.subr.bf16.mxu0 0
      %622 = vmatpush1.bf16.msra.mxu0 %v613
      %623 = vmatprep.subr.bf16.mxu0 0
      %624 = vmatpush1.bf16.msra.mxu0 %v614
      %625 = vmatprep.subr.bf16.mxu0 0
      %626 = vmatpush1.bf16.msra.mxu0 0
      %627 = vmatprep.subr.bf16.mxu0 0
      %628 = vmatpush1.bf16.msra.mxu0 0
      %629 = vmatprep.subr.bf16.mxu0 0
      %630 = vmatpush1.bf16.msra.mxu0 0
      %631 = vmatprep.subr.bf16.mxu0 0
      %632 = vmatpush1.bf16.msra.mxu0 0
      %633 = vmatprep.subr.bf16.mxu0 0
      %634 = vmatpush1.bf16.msra.mxu0 0
      %635 = vmatprep.subr.bf16.mxu0 0
      %636 = vmatpush1.bf16.msra.mxu0 0
      %637 = vmatprep.subr.bf16.mxu0 0
      %638 = vmatpush1.bf16.msra.mxu0 0
      %639 = vmatprep.subr.bf16.mxu0 0
      %640 = vmatpush1.bf16.msra.mxu0 0
      %641 = vmatprep.subr.bf16.mxu0 0
      %642 = vmatpush1.bf16.msra.mxu0 0
      %643 = vmatprep.subr.bf16.mxu0 0
      %644 = vmatpush1.bf16.msra.mxu0 0
      %645 = vmatprep.subr.bf16.mxu0 0
      %646 = vmatpush1.bf16.msra.mxu0 0
      %647 = vmatprep.subr.bf16.mxu0 0
      %648 = vmatpush1.bf16.msra.mxu0 0
      %649 = vmatprep.subr.bf16.mxu0 0
      %650 = vmatpush1.bf16.msra.mxu0 0
      %651 = vmatprep.subr.bf16.mxu0 0
      %652 = vmatpush1.bf16.msra.mxu0 0
      %653 = vmatprep.mubr.bf16.mxu0 0
      %654 = vmatmul.mubr.bf16.gmra.mrb[0].mxu0 %v619
      %v655 = vpop.f32.mrb[0].mxu0
      %v656 = vadd.f32 %v603, %v655
      %v657 = vpop.f32.mrb[0].mxu0
      %v658 = vpop.f32.mrb[0].mxu0
      %v659 = vadd.f32 %v603, %v658
      %v660 = vpop.f32.mrb[0].mxu0
      %661 = vdwg.mxu0
      %v662 = vpack.c.bf16 %v659, %v656
      %v664 = vunpack.c.l.b16 %v662
      %v665 = vunpack.c.h.b16 %v662
      %v666 = vpack.c.b16 %v664, %v664
      %v667 = vpack.c.b16 %v665, %v665
      %670 = vst [vmem:[%s476] sm:$0xf] %v666
      %671 = vst [vmem:[%s476 + $0x4] sm:$0xf] %v667
      %v672 = vld [vmem:[%s6] sm:$0xff]
      %v673 = vld [vmem:[%s6 + $0x8] sm:$0xff]
      %v674 = vld [vmem:[%s6 + $0x10] sm:$0xff]
      %v675 = vld [vmem:[%s6 + $0x18] sm:$0xff]
      %v676 = vld [vmem:[%s6 + $0x20] sm:$0xff]
      %v677 = vld [vmem:[%s6 + $0x28] sm:$0xff]
      %v678 = vld [vmem:[%s6 + $0x30] sm:$0xff]
      %v679 = vld [vmem:[%s6 + $0x38] sm:$0xff]
      %v680 = vld [vmem:[%s6 + $0x40] sm:$0xff]
      %v681 = vld [vmem:[%s6 + $0x48] sm:$0xff]
      %v682 = vld [vmem:[%s6 + $0x50] sm:$0xff]
      %v683 = vld [vmem:[%s6 + $0x58] sm:$0xff]
      %v684 = vld [vmem:[%s6 + $0x60] sm:$0xff]
      %v685 = vld [vmem:[%s6 + $0x68] sm:$0xff]
      %v686 = vld [vmem:[%s6 + $0x70] sm:$0xff]
      %v687 = vld [vmem:[%s6 + $0x78] sm:$0xff]
      %v688 = vld [vmem:[%s6 + $0x80] sm:$0xff]
      %v689 = vld [vmem:[%s6 + $0x88] sm:$0xff]
      %v690 = vld [vmem:[%s6 + $0x90] sm:$0xff]
      %v691 = vld [vmem:[%s6 + $0x98] sm:$0xff]
      %v692 = vld [vmem:[%s6 + $0xa0] sm:$0xff]
      %v693 = vld [vmem:[%s6 + $0xa8] sm:$0xff]
      %v694 = vld [vmem:[%s6 + $0xb0] sm:$0xff]
      %v695 = vld [vmem:[%s6 + $0xb8] sm:$0xff]
      %v696 = vld [vmem:[%s6 + $0xc0] sm:$0xff]
      %v697 = vld [vmem:[%s6 + $0xc8] sm:$0xff]
      %v698 = vld [vmem:[%s6 + $0xd0] sm:$0xff]
      %v699 = vld [vmem:[%s6 + $0xd8] sm:$0xff]
      %v700 = vld [vmem:[%s6 + $0xe0] sm:$0xff]
      %v701 = vld [vmem:[%s6 + $0xe8] sm:$0xff]
      %v702 = vld [vmem:[%s6 + $0xf0] sm:$0xff]
      %v703 = vld [vmem:[%s6 + $0xf8] sm:$0xff]
      %v736 = vunpack.c.l.b16 %v672
      %v737 = vunpack.c.h.b16 %v672
      %v738 = vunpack.c.l.b16 %v673
      %v739 = vunpack.c.h.b16 %v673
      %v740 = vunpack.c.l.b16 %v674
      %v741 = vunpack.c.h.b16 %v674
      %v742 = vunpack.c.l.b16 %v675
      %v743 = vunpack.c.h.b16 %v675
      %v744 = vunpack.c.l.b16 %v676
      %v745 = vunpack.c.h.b16 %v676
      %v746 = vunpack.c.l.b16 %v677
      %v747 = vunpack.c.h.b16 %v677
      %v748 = vunpack.c.l.b16 %v678
      %v749 = vunpack.c.h.b16 %v678
      %v750 = vunpack.c.l.b16 %v679
      %v751 = vunpack.c.h.b16 %v679
      %v752 = vunpack.c.l.b16 %v680
      %v753 = vunpack.c.h.b16 %v680
      %v754 = vunpack.c.l.b16 %v681
      %v755 = vunpack.c.h.b16 %v681
      %v756 = vunpack.c.l.b16 %v682
      %v757 = vunpack.c.h.b16 %v682
      %v758 = vunpack.c.l.b16 %v683
      %v759 = vunpack.c.h.b16 %v683
      %v760 = vunpack.c.l.b16 %v684
      %v761 = vunpack.c.h.b16 %v684
      %v762 = vunpack.c.l.b16 %v685
      %v763 = vunpack.c.h.b16 %v685
      %v764 = vunpack.c.l.b16 %v686
      %v765 = vunpack.c.h.b16 %v686
      %v766 = vunpack.c.l.b16 %v687
      %v767 = vunpack.c.h.b16 %v687
      %v768 = vunpack.c.l.b16 %v688
      %v769 = vunpack.c.h.b16 %v688
      %v770 = vunpack.c.l.b16 %v689
      %v771 = vunpack.c.h.b16 %v689
      %v772 = vunpack.c.l.b16 %v690
      %v773 = vunpack.c.h.b16 %v690
      %v774 = vunpack.c.l.b16 %v691
      %v775 = vunpack.c.h.b16 %v691
      %v776 = vunpack.c.l.b16 %v692
      %v777 = vunpack.c.h.b16 %v692
      %v778 = vunpack.c.l.b16 %v693
      %v779 = vunpack.c.h.b16 %v693
      %v780 = vunpack.c.l.b16 %v694
      %v781 = vunpack.c.h.b16 %v694
      %v782 = vunpack.c.l.b16 %v695
      %v783 = vunpack.c.h.b16 %v695
      %v784 = vunpack.c.l.b16 %v696
      %v785 = vunpack.c.h.b16 %v696
      %v786 = vunpack.c.l.b16 %v697
      %v787 = vunpack.c.h.b16 %v697
      %v788 = vunpack.c.l.b16 %v698
      %v789 = vunpack.c.h.b16 %v698
      %v790 = vunpack.c.l.b16 %v699
      %v791 = vunpack.c.h.b16 %v699
      %v792 = vunpack.c.l.b16 %v700
      %v793 = vunpack.c.h.b16 %v700
      %v794 = vunpack.c.l.b16 %v701
      %v795 = vunpack.c.h.b16 %v701
      %v796 = vunpack.c.l.b16 %v702
      %v797 = vunpack.c.h.b16 %v702
      %v798 = vunpack.c.l.b16 %v703
      %v799 = vunpack.c.h.b16 %v703
      %v800 = vpack.c.b16 %v740, %v736
      %v801 = vpack.c.b16 %v741, %v737
      %v802 = vpack.c.b16 %v742, %v738
      %v803 = vpack.c.b16 %v743, %v739
      %v804 = vpack.c.b16 %v748, %v744
      %v805 = vpack.c.b16 %v749, %v745
      %v806 = vpack.c.b16 %v750, %v746
      %v807 = vpack.c.b16 %v751, %v747
      %v808 = vpack.c.b16 %v756, %v752
      %v809 = vpack.c.b16 %v757, %v753
      %v810 = vpack.c.b16 %v758, %v754
      %v811 = vpack.c.b16 %v759, %v755
      %v812 = vpack.c.b16 %v764, %v760
      %v813 = vpack.c.b16 %v765, %v761
      %v814 = vpack.c.b16 %v766, %v762
      %v815 = vpack.c.b16 %v767, %v763
      %v816 = vpack.c.b16 %v772, %v768
      %v817 = vpack.c.b16 %v773, %v769
      %v818 = vpack.c.b16 %v774, %v770
      %v819 = vpack.c.b16 %v775, %v771
      %v820 = vpack.c.b16 %v780, %v776
      %v821 = vpack.c.b16 %v781, %v777
      %v822 = vpack.c.b16 %v782, %v778
      %v823 = vpack.c.b16 %v783, %v779
      %v824 = vpack.c.b16 %v788, %v784
      %v825 = vpack.c.b16 %v789, %v785
      %v826 = vpack.c.b16 %v790, %v786
      %v827 = vpack.c.b16 %v791, %v787
      %v828 = vpack.c.b16 %v796, %v792
      %v829 = vpack.c.b16 %v797, %v793
      %v830 = vpack.c.b16 %v798, %v794
      %v831 = vpack.c.b16 %v799, %v795
      %864 = vmatprep.subr.bf16.mxu0 %v801
      %865 = vmatpush1.bf16.msra.mxu0 %v800
      %866 = vmatprep.subr.bf16.mxu0 %v805
      %867 = vmatpush1.bf16.msra.mxu0 %v804
      %868 = vmatprep.subr.bf16.mxu0 %v809
      %869 = vmatpush1.bf16.msra.mxu0 %v808
      %870 = vmatprep.subr.bf16.mxu0 %v813
      %871 = vmatpush1.bf16.msra.mxu0 %v812
      %872 = vmatprep.subr.bf16.mxu0 %v817
      %873 = vmatpush1.bf16.msra.mxu0 %v816
      %874 = vmatprep.subr.bf16.mxu0 %v821
      %875 = vmatpush1.bf16.msra.mxu0 %v820
      %876 = vmatprep.subr.bf16.mxu0 %v825
      %877 = vmatpush1.bf16.msra.mxu0 %v824
      %878 = vmatprep.subr.bf16.mxu0 %v829
      %879 = vmatpush1.bf16.msra.mxu0 %v828
      %880 = vmatprep.subr.bf16.mxu0 0
      %881 = vmatpush1.bf16.msra.mxu0 0
      %882 = vmatprep.subr.bf16.mxu0 0
      %883 = vmatpush1.bf16.msra.mxu0 0
      %884 = vmatprep.subr.bf16.mxu0 0
      %885 = vmatpush1.bf16.msra.mxu0 0
      %886 = vmatprep.subr.bf16.mxu0 0
      %887 = vmatpush1.bf16.msra.mxu0 0
      %888 = vmatprep.subr.bf16.mxu0 0
      %889 = vmatpush1.bf16.msra.mxu0 0
      %890 = vmatprep.subr.bf16.mxu0 0
      %891 = vmatpush1.bf16.msra.mxu0 0
      %892 = vmatprep.subr.bf16.mxu0 0
      %893 = vmatpush1.bf16.msra.mxu0 0
      %894 = vmatprep.subr.bf16.mxu0 0
      %895 = vmatpush1.bf16.msra.mxu0 0
      %896 = vmatprep.mubr.bf16.mxu0 0
      %897 = vmatmul.mubr.bf16.gmra.mrb[0].mxu0 %v662
      %v898 = vpop.f32.mrb[0].mxu0
      %v899 = vadd.f32 0.0, %v898
      %v900 = vpop.f32.mrb[0].mxu0
      %v901 = vadd.f32 0.0, %v900
      %v902 = vpop.f32.mrb[0].mxu0
      %v903 = vadd.f32 0.0, %v902
      %v904 = vpop.f32.mrb[0].mxu0
      %v905 = vadd.f32 0.0, %v904
      %906 = vdwg.mxu0
      %907 = vmatprep.subr.bf16.mxu0 %v803
      %908 = vmatpush1.bf16.msra.mxu0 %v802
      %909 = vmatprep.subr.bf16.mxu0 %v807
      %910 = vmatpush1.bf16.msra.mxu0 %v806
      %911 = vmatprep.subr.bf16.mxu0 %v811
      %912 = vmatpush1.bf16.msra.mxu0 %v810
      %913 = vmatprep.subr.bf16.mxu0 %v815
      %914 = vmatpush1.bf16.msra.mxu0 %v814
      %915 = vmatprep.subr.bf16.mxu0 %v819
      %916 = vmatpush1.bf16.msra.mxu0 %v818
      %917 = vmatprep.subr.bf16.mxu0 %v823
      %918 = vmatpush1.bf16.msra.mxu0 %v822
      %919 = vmatprep.subr.bf16.mxu0 %v827
      %920 = vmatpush1.bf16.msra.mxu0 %v826
      %921 = vmatprep.subr.bf16.mxu0 %v831
      %922 = vmatpush1.bf16.msra.mxu0 %v830
      %923 = vmatprep.subr.bf16.mxu0 0
      %924 = vmatpush1.bf16.msra.mxu0 0
      %925 = vmatprep.subr.bf16.mxu0 0
      %926 = vmatpush1.bf16.msra.mxu0 0
      %927 = vmatprep.subr.bf16.mxu0 0
      %928 = vmatpush1.bf16.msra.mxu0 0
      %929 = vmatprep.subr.bf16.mxu0 0
      %930 = vmatpush1.bf16.msra.mxu0 0
      %931 = vmatprep.subr.bf16.mxu0 0
      %932 = vmatpush1.bf16.msra.mxu0 0
      %933 = vmatprep.subr.bf16.mxu0 0
      %934 = vmatpush1.bf16.msra.mxu0 0
      %935 = vmatprep.subr.bf16.mxu0 0
      %936 = vmatpush1.bf16.msra.mxu0 0
      %937 = vmatprep.subr.bf16.mxu0 0
      %938 = vmatpush1.bf16.msra.mxu0 0
      %939 = vmatprep.mubr.bf16.mxu0 0
      %940 = vmatmul.mubr.bf16.gmra.mrb[0].mxu0 %v662
      %v941 = vpop.f32.mrb[0].mxu0
      %v942 = vadd.f32 0.0, %v941
      %v943 = vpop.f32.mrb[0].mxu0
      %v944 = vadd.f32 0.0, %v943
      %v945 = vpop.f32.mrb[0].mxu0
      %v946 = vadd.f32 0.0, %v945
      %v947 = vpop.f32.mrb[0].mxu0
      %v948 = vadd.f32 0.0, %v947
      %949 = vdwg.mxu0
      %v950 = vmul.f32 %v899, %v656
      %v951 = vmul.f32 %v901, %v656
      %v952 = vmul.f32 %v942, %v656
      %v953 = vmul.f32 %v944, %v656
      %v954 = vmul.f32 %v903, %v659
      %v955 = vmul.f32 %v905, %v659
      %v956 = vmul.f32 %v946, %v659
      %v957 = vmul.f32 %v948, %v659
      %v958 = vld [vmem:[%s7] sm:$0xff]
      %v959 = vld [vmem:[%s7 + $0x8] sm:$0xff]
      %v960 = vld [vmem:[%s7 + $0x10] sm:$0xff]
      %v961 = vld [vmem:[%s7 + $0x18] sm:$0xff]
      %v962 = vld [vmem:[%s7 + $0x20] sm:$0xff]
      %v963 = vld [vmem:[%s7 + $0x28] sm:$0xff]
      %v964 = vld [vmem:[%s7 + $0x30] sm:$0xff]
      %v965 = vld [vmem:[%s7 + $0x38] sm:$0xff]
      %v966 = vld [vmem:[%s7 + $0x40] sm:$0xff]
      %v967 = vld [vmem:[%s7 + $0x48] sm:$0xff]
      %v968 = vld [vmem:[%s7 + $0x50] sm:$0xff]
      %v969 = vld [vmem:[%s7 + $0x58] sm:$0xff]
      %v970 = vld [vmem:[%s7 + $0x60] sm:$0xff]
      %v971 = vld [vmem:[%s7 + $0x68] sm:$0xff]
      %v972 = vld [vmem:[%s7 + $0x70] sm:$0xff]
      %v973 = vld [vmem:[%s7 + $0x78] sm:$0xff]
      %v974 = vld [vmem:[%s7 + $0x80] sm:$0xff]
      %v975 = vld [vmem:[%s7 + $0x88] sm:$0xff]
      %v976 = vld [vmem:[%s7 + $0x90] sm:$0xff]
      %v977 = vld [vmem:[%s7 + $0x98] sm:$0xff]
      %v978 = vld [vmem:[%s7 + $0xa0] sm:$0xff]
      %v979 = vld [vmem:[%s7 + $0xa8] sm:$0xff]
      %v980 = vld [vmem:[%s7 + $0xb0] sm:$0xff]
      %v981 = vld [vmem:[%s7 + $0xb8] sm:$0xff]
      %v982 = vld [vmem:[%s7 + $0xc0] sm:$0xff]
      %v983 = vld [vmem:[%s7 + $0xc8] sm:$0xff]
      %v984 = vld [vmem:[%s7 + $0xd0] sm:$0xff]
      %v985 = vld [vmem:[%s7 + $0xd8] sm:$0xff]
      %v986 = vld [vmem:[%s7 + $0xe0] sm:$0xff]
      %v987 = vld [vmem:[%s7 + $0xe8] sm:$0xff]
      %v988 = vld [vmem:[%s7 + $0xf0] sm:$0xff]
      %v989 = vld [vmem:[%s7 + $0xf8] sm:$0xff]
      %v990 = vld [vmem:[%s7 + $0x100] sm:$0xff]
      %v991 = vld [vmem:[%s7 + $0x108] sm:$0xff]
      %v992 = vld [vmem:[%s7 + $0x110] sm:$0xff]
      %v993 = vld [vmem:[%s7 + $0x118] sm:$0xff]
      %v994 = vld [vmem:[%s7 + $0x120] sm:$0xff]
      %v995 = vld [vmem:[%s7 + $0x128] sm:$0xff]
      %v996 = vld [vmem:[%s7 + $0x130] sm:$0xff]
      %v997 = vld [vmem:[%s7 + $0x138] sm:$0xff]
      %v998 = vld [vmem:[%s7 + $0x140] sm:$0xff]
      %v999 = vld [vmem:[%s7 + $0x148] sm:$0xff]
      %v1000 = vld [vmem:[%s7 + $0x150] sm:$0xff]
      %v1001 = vld [vmem:[%s7 + $0x158] sm:$0xff]
      %v1002 = vld [vmem:[%s7 + $0x160] sm:$0xff]
      %v1003 = vld [vmem:[%s7 + $0x168] sm:$0xff]
      %v1004 = vld [vmem:[%s7 + $0x170] sm:$0xff]
      %v1005 = vld [vmem:[%s7 + $0x178] sm:$0xff]
      %v1006 = vld [vmem:[%s7 + $0x180] sm:$0xff]
      %v1007 = vld [vmem:[%s7 + $0x188] sm:$0xff]
      %v1008 = vld [vmem:[%s7 + $0x190] sm:$0xff]
      %v1009 = vld [vmem:[%s7 + $0x198] sm:$0xff]
      %v1010 = vld [vmem:[%s7 + $0x1a0] sm:$0xff]
      %v1011 = vld [vmem:[%s7 + $0x1a8] sm:$0xff]
      %v1012 = vld [vmem:[%s7 + $0x1b0] sm:$0xff]
      %v1013 = vld [vmem:[%s7 + $0x1b8] sm:$0xff]
      %v1014 = vld [vmem:[%s7 + $0x1c0] sm:$0xff]
      %v1015 = vld [vmem:[%s7 + $0x1c8] sm:$0xff]
      %v1016 = vld [vmem:[%s7 + $0x1d0] sm:$0xff]
      %v1017 = vld [vmem:[%s7 + $0x1d8] sm:$0xff]
      %v1018 = vld [vmem:[%s7 + $0x1e0] sm:$0xff]
      %v1019 = vld [vmem:[%s7 + $0x1e8] sm:$0xff]
      %v1020 = vld [vmem:[%s7 + $0x1f0] sm:$0xff]
      %v1021 = vld [vmem:[%s7 + $0x1f8] sm:$0xff]
      %1022 = vmatprep.subr.mxu0 0.0
      %1023 = vmatpush1.msra.mxu0 %v958
      %1024 = vmatprep.subr.mxu0 0.0
      %1025 = vmatpush1.msra.mxu0 %v959
      %1026 = vmatprep.subr.mxu0 0.0
      %1027 = vmatpush1.msra.mxu0 %v960
      %1028 = vmatprep.subr.mxu0 0.0
      %1029 = vmatpush1.msra.mxu0 %v961
      %1030 = vmatprep.subr.mxu0 0.0
      %1031 = vmatpush1.msra.mxu0 %v962
      %1032 = vmatprep.subr.mxu0 0.0
      %1033 = vmatpush1.msra.mxu0 %v963
      %1034 = vmatprep.subr.mxu0 0.0
      %1035 = vmatpush1.msra.mxu0 %v964
      %1036 = vmatprep.subr.mxu0 0.0
      %1037 = vmatpush1.msra.mxu0 %v965
      %1038 = vmatprep.subr.mxu0 0.0
      %1039 = vmatpush1.msra.mxu0 %v966
      %1040 = vmatprep.subr.mxu0 0.0
      %1041 = vmatpush1.msra.mxu0 %v967
      %1042 = vmatprep.subr.mxu0 0.0
      %1043 = vmatpush1.msra.mxu0 %v968
      %1044 = vmatprep.subr.mxu0 0.0
      %1045 = vmatpush1.msra.mxu0 %v969
      %1046 = vmatprep.subr.mxu0 0.0
      %1047 = vmatpush1.msra.mxu0 %v970
      %1048 = vmatprep.subr.mxu0 0.0
      %1049 = vmatpush1.msra.mxu0 %v971
      %1050 = vmatprep.subr.mxu0 0.0
      %1051 = vmatpush1.msra.mxu0 %v972
      %1052 = vmatprep.subr.mxu0 0.0
      %1053 = vmatpush1.msra.mxu0 %v973
      %1054 = vmatprep.subr.mxu0 0.0
      %1055 = vmatpush1.msra.mxu0 %v974
      %1056 = vmatprep.subr.mxu0 0.0
      %1057 = vmatpush1.msra.mxu0 %v975
      %1058 = vmatprep.subr.mxu0 0.0
      %1059 = vmatpush1.msra.mxu0 %v976
      %1060 = vmatprep.subr.mxu0 0.0
      %1061 = vmatpush1.msra.mxu0 %v977
      %1062 = vmatprep.subr.mxu0 0.0
      %1063 = vmatpush1.msra.mxu0 %v978
      %1064 = vmatprep.subr.mxu0 0.0
      %1065 = vmatpush1.msra.mxu0 %v979
      %1066 = vmatprep.subr.mxu0 0.0
      %1067 = vmatpush1.msra.mxu0 %v980
      %1068 = vmatprep.subr.mxu0 0.0
      %1069 = vmatpush1.msra.mxu0 %v981
      %1070 = vmatprep.subr.mxu0 0.0
      %1071 = vmatpush1.msra.mxu0 %v982
      %1072 = vmatprep.subr.mxu0 0.0
      %1073 = vmatpush1.msra.mxu0 %v983
      %1074 = vmatprep.subr.mxu0 0.0
      %1075 = vmatpush1.msra.mxu0 %v984
      %1076 = vmatprep.subr.mxu0 0.0
      %1077 = vmatpush1.msra.mxu0 %v985
      %1078 = vmatprep.subr.mxu0 0.0
      %1079 = vmatpush1.msra.mxu0 %v986
      %1080 = vmatprep.subr.mxu0 0.0
      %1081 = vmatpush1.msra.mxu0 %v987
      %1082 = vmatprep.subr.mxu0 0.0
      %1083 = vmatpush1.msra.mxu0 %v988
      %1084 = vmatprep.subr.mxu0 0.0
      %1085 = vmatpush1.msra.mxu0 %v989
      %1086 = vmatprep.mubr.f32.mxu0 %v951
      %1087 = vmatmul.mubr.f32.gmra.mrb[0].mxu0 %v950
      %v1088 = vpop.f32.mrb[0].mxu0
      %v1089 = vadd.f32 0.0, %v1088
      %v1090 = vpop.f32.mrb[0].mxu0
      %1091 = vmatprep.mubr.f32.mxu0 %v955
      %1092 = vmatmul.mubr.f32.gmra.mrb[0].mxu0 %v954
      %v1093 = vpop.f32.mrb[0].mxu0
      %v1094 = vadd.f32 0.0, %v1093
      %v1095 = vpop.f32.mrb[0].mxu0
      %1096 = vdwg.mxu0
      %1097 = vmatprep.subr.mxu0 0.0
      %1098 = vmatpush1.msra.mxu0 %v990
      %1099 = vmatprep.subr.mxu0 0.0
      %1100 = vmatpush1.msra.mxu0 %v991
      %1101 = vmatprep.subr.mxu0 0.0
      %1102 = vmatpush1.msra.mxu0 %v992
      %1103 = vmatprep.subr.mxu0 0.0
      %1104 = vmatpush1.msra.mxu0 %v993
      %1105 = vmatprep.subr.mxu0 0.0
      %1106 = vmatpush1.msra.mxu0 %v994
      %1107 = vmatprep.subr.mxu0 0.0
      %1108 = vmatpush1.msra.mxu0 %v995
      %1109 = vmatprep.subr.mxu0 0.0
      %1110 = vmatpush1.msra.mxu0 %v996
      %1111 = vmatprep.subr.mxu0 0.0
      %1112 = vmatpush1.msra.mxu0 %v997
      %1113 = vmatprep.subr.mxu0 0.0
      %1114 = vmatpush1.msra.mxu0 %v998
      %1115 = vmatprep.subr.mxu0 0.0
      %1116 = vmatpush1.msra.mxu0 %v999
      %1117 = vmatprep.subr.mxu0 0.0
      %1118 = vmatpush1.msra.mxu0 %v1000
      %1119 = vmatprep.subr.mxu0 0.0
      %1120 = vmatpush1.msra.mxu0 %v1001
      %1121 = vmatprep.subr.mxu0 0.0
      %1122 = vmatpush1.msra.mxu0 %v1002
      %1123 = vmatprep.subr.mxu0 0.0
      %1124 = vmatpush1.msra.mxu0 %v1003
      %1125 = vmatprep.subr.mxu0 0.0
      %1126 = vmatpush1.msra.mxu0 %v1004
      %1127 = vmatprep.subr.mxu0 0.0
      %1128 = vmatpush1.msra.mxu0 %v1005
      %1129 = vmatprep.subr.mxu0 0.0
      %1130 = vmatpush1.msra.mxu0 %v1006
      %1131 = vmatprep.subr.mxu0 0.0
      %1132 = vmatpush1.msra.mxu0 %v1007
      %1133 = vmatprep.subr.mxu0 0.0
      %1134 = vmatpush1.msra.mxu0 %v1008
      %1135 = vmatprep.subr.mxu0 0.0
      %1136 = vmatpush1.msra.mxu0 %v1009
      %1137 = vmatprep.subr.mxu0 0.0
      %1138 = vmatpush1.msra.mxu0 %v1010
      %1139 = vmatprep.subr.mxu0 0.0
      %1140 = vmatpush1.msra.mxu0 %v1011
      %1141 = vmatprep.subr.mxu0 0.0
      %1142 = vmatpush1.msra.mxu0 %v1012
      %1143 = vmatprep.subr.mxu0 0.0
      %1144 = vmatpush1.msra.mxu0 %v1013
      %1145 = vmatprep.subr.mxu0 0.0
      %1146 = vmatpush1.msra.mxu0 %v1014
      %1147 = vmatprep.subr.mxu0 0.0
      %1148 = vmatpush1.msra.mxu0 %v1015
      %1149 = vmatprep.subr.mxu0 0.0
      %1150 = vmatpush1.msra.mxu0 %v1016
      %1151 = vmatprep.subr.mxu0 0.0
      %1152 = vmatpush1.msra.mxu0 %v1017
      %1153 = vmatprep.subr.mxu0 0.0
      %1154 = vmatpush1.msra.mxu0 %v1018
      %1155 = vmatprep.subr.mxu0 0.0
      %1156 = vmatpush1.msra.mxu0 %v1019
      %1157 = vmatprep.subr.mxu0 0.0
      %1158 = vmatpush1.msra.mxu0 %v1020
      %1159 = vmatprep.subr.mxu0 0.0
      %1160 = vmatpush1.msra.mxu0 %v1021
      %1161 = vmatprep.mubr.f32.mxu0 %v953
      %1162 = vmatmul.mubr.f32.gmra.mrb[0].mxu0 %v952
      %v1163 = vpop.f32.mrb[0].mxu0
      %v1164 = vadd.f32 %v1089, %v1163
      %v1165 = vpop.f32.mrb[0].mxu0
      %1166 = vmatprep.mubr.f32.mxu0 %v957
      %1167 = vmatmul.mubr.f32.gmra.mrb[0].mxu0 %v956
      %v1168 = vpop.f32.mrb[0].mxu0
      %v1169 = vadd.f32 %v1094, %v1168
      %v1170 = vpop.f32.mrb[0].mxu0
      %1171 = vdwg.mxu0
      %vm1172 = vcmask 64512
      %1173 = vst.msk [vmem:[%s486] sm:$0xff] %vm1172, %v1164
      %1174 = vst.msk [vmem:[%s486 + $0x8] sm:$0xff] %vm1172, %v1169
      %v1175 = vld [vmem:[%s493] sm:$0xff]
      %v1176 = vsel %vm1172, %v1164, -inf
      %v1177 = vsel %vm1172, %v1169, -inf
      %v1178 = vmax.f32 %v1176, %v1177
      %v1179 = vrot.slane %v1178, 4
      %v1180 = vmax.f32 %v1178, %v1179
      %v1181 = vrot.slane %v1180, 2
      %v1182 = vmax.f32 %v1180, %v1181
      %v1183 = vrot.slane %v1182, 1
      %v1184 = vmax.f32 %v1182, %v1183
      %v1185 = vmax.f32 %v1175, %v1184
      %v1186 = vsub.f32 %v1175, %v1185
      %v1187 = vmul.f32 %v1186, 1.442695
      %v1188 = vpow.pop %v1187
      %v1189 = vlaneseq
      %v1190 = vshrl.u32 %v1189, 7
      %v1191 = vsub.s32 0, %v1190
      %v1192 = vrot.slane %v1185, %v1191
      %v1193 = vsub.f32 %v1164, %v1192
      %v1194 = vsub.f32 %v1169, %v1192
      %v1195 = vmul.f32 %v1193, 1.442695
      %v1196 = vpow.pop %v1195
      %v1197 = vmul.f32 %v1194, 1.442695
      %v1198 = vpow.pop %v1197
      %v1199 = vld [vmem:[%s467] sm:$0x1]
      %v1200 = vlaneseq
      %v1201 = vshrl.u32 %v1200, 7
      %v1202 = vlaneseq
      %v1203 = vshrl.u32 %v1202, 7
      %v1204 = vsub.s32 0, %v1203
      %v1205 = vrot.slane %v1199, %v1204
      %vm1206 = vcmp.eq.s32.totalorder %v1201, %v1205
      %v1207 = vsel %vm1206, 1, 0
      %v1208 = vcvt.s32.f32 %v1207
      %v1209 = vpack.c.bf16 %v1208, %v1208
      %v1210 = vld [vmem:[%s497] sm:$0xff]
      %v1211 = vlaneseq
      %v1212 = vshrl.u32 %v1211, 7
      %v1213 = vsub.s32 0, %v1212
      %v1214 = vrot.slane %v1188, %v1213
      %v1215 = vmul.f32 %v1210, %v1214
      %v1216 = vpack.c.bf16 %v1198, %v1196
      %vm1217 = vcmask 130048
      %v1219 = vsel %vm1217, %v1209, 0
      %1221 = vmatprep.subr.bf16.mxu0 0
      %1222 = vmatpush1.bf16.msra.mxu0 %v1216
      %1223 = vmatprep.subr.bf16.mxu0 0
      %1224 = vmatpush1.bf16.msra.mxu0 0
      %1225 = vmatprep.subr.bf16.mxu0 0
      %1226 = vmatpush1.bf16.msra.mxu0 0
      %1227 = vmatprep.subr.bf16.mxu0 0
      %1228 = vmatpush1.bf16.msra.mxu0 0
      %1229 = vmatprep.subr.bf16.mxu0 0
      %1230 = vmatpush1.bf16.msra.mxu0 0
      %1231 = vmatprep.subr.bf16.mxu0 0
      %1232 = vmatpush1.bf16.msra.mxu0 0
      %1233 = vmatprep.subr.bf16.mxu0 0
      %1234 = vmatpush1.bf16.msra.mxu0 0
      %1235 = vmatprep.subr.bf16.mxu0 0
      %1236 = vmatpush1.bf16.msra.mxu0 0
      %1237 = vmatprep.subr.bf16.mxu0 0
      %1238 = vmatpush1.bf16.msra.mxu0 0
      %1239 = vmatprep.subr.bf16.mxu0 0
      %1240 = vmatpush1.bf16.msra.mxu0 0
      %1241 = vmatprep.subr.bf16.mxu0 0
      %1242 = vmatpush1.bf16.msra.mxu0 0
      %1243 = vmatprep.subr.bf16.mxu0 0
      %1244 = vmatpush1.bf16.msra.mxu0 0
      %1245 = vmatprep.subr.bf16.mxu0 0
      %1246 = vmatpush1.bf16.msra.mxu0 0
      %1247 = vmatprep.subr.bf16.mxu0 0
      %1248 = vmatpush1.bf16.msra.mxu0 0
      %1249 = vmatprep.subr.bf16.mxu0 0
      %1250 = vmatpush1.bf16.msra.mxu0 0
      %1251 = vmatprep.subr.bf16.mxu0 0
      %1252 = vmatpush1.bf16.msra.mxu0 0
      %1253 = vmatprep.mubr.bf16.mxu0 0
      %1254 = vmatmul.mubr.bf16.gmra.mrb[0].mxu0 %v1219
      %v1255 = vpop.f32.mrb[0].mxu0
      %v1256 = vadd.f32 0.0, %v1255
      %v1257 = vpop.f32.mrb[0].mxu0
      %v1258 = vpop.f32.mrb[0].mxu0
      %v1259 = vpop.f32.mrb[0].mxu0
      %1260 = vdwg.mxu0
      %v1261 = vadd.f32 %v1215, %v1256
      %1262 = vst.msk [vmem:[%s497] sm:$0xff] %vm1172, %v1261
      %1263 = vst.msk [vmem:[%s493] sm:$0xff] %vm1172, %v1185
      %s1264 = smul.u32 %s27, 4
      %s1265 = sadd.s32 %s1264, %s28
      %s1266 = smul.u32 2, %s1265
      %p1267 = scmp.lt.s32.totalorder %s1266, 7
      %s1268 = scalar_select %p1267, %s1266, 7
      %s1269 = smul.addr %s1268, 4
      %s1270 = scalar_lea.vmem %s8, %s1269
      %s1271 = smul.u32 %s27, 4
      %s1272 = sadd.s32 %s1271, %s28
      %s1273 = smul.u32 2, %s1272
      %p1274 = scmp.lt.s32.totalorder %s1273, 7
      %s1275 = scalar_select %p1274, %s1273, 7
      %s1276 = smul.addr %s1275, 8
      %s1277 = scalar_lea.vmem %s9, %s1276
      %p1278 = scmp.lt.s32.totalorder %s27, 0
      %s1279 = scalar_select %p1278, %s27, 0
      %s1280 = smul.addr %s1279, 8
      %s1281 = scalar_lea.vmem %s10, %s1280
      %p1282 = scmp.lt.s32.totalorder %s27, 0
      %s1283 = scalar_select %p1282, %s27, 0
      %s1284 = smul.addr %s1283, 8
      %s1285 = scalar_lea.vmem %s11, %s1284
      // Predicated region
      $region57: #{mp_block_forward.2} parent=51 // pred_check
        %p1286 = pneg %p243
      $region58: #{mp_block_forward.2} parent=51 // pred_check_branch
        %1288 = sbr.rel (%p1286) target = $region60
      $region59: #{mp_block_forward.2} parent=51 // pred_region
        %s1289 = smul.u32 %s27, 4
        %s1290 = sadd.s32 %s1289, %s28
        %s1291 = smul.u32 2, %s1290
      $region60: #{mp_block_forward.2} parent=51 // pred_fallthru
        _
      // Predicated region
      $region61: #{mp_block_forward.2} parent=51 // pred_check
        %p1292 = pneg %p273
      $region62: #{mp_block_forward.2} parent=51 // pred_check_branch
        %1294 = sbr.rel (%p1292) target = $region64
      $region63: #{mp_block_forward.2} parent=51 // pred_region
        %s1295 = smul.u32 %s27, 4
        %s1296 = sadd.s32 %s1295, %s28
        %s1297 = smul.u32 2, %s1296
      $region64: #{mp_block_forward.2} parent=51 // pred_fallthru
        _
      // Predicated region
      $region65: #{mp_block_forward.2} parent=51 // pred_check
        %p1298 = pneg %p299
      $region66: #{mp_block_forward.2} parent=51 // pred_check_branch
        %1300 = sbr.rel (%p1298) target = $region68
      $region67: #{mp_block_forward.2} parent=51 // pred_region
        _
      $region68: #{mp_block_forward.2} parent=51 // pred_fallthru
        _
      // Predicated region
      $region69: #{mp_block_forward.2} parent=51 // pred_check
        %p1301 = pneg %p325
      $region70: #{mp_block_forward.2} parent=51 // pred_check_branch
        %1303 = sbr.rel (%p1301) target = $region72
      $region71: #{mp_block_forward.2} parent=51 // pred_region
        _
      $region72: #{mp_block_forward.2} parent=51 // pred_fallthru
        _
      // Predicated region
      $region73: #{mp_block_forward.2} parent=51 // pred_check
        %p1304 = pneg %p299
      $region74: #{mp_block_forward.2} parent=51 // pred_check_branch
        %1306 = sbr.rel (%p1304) target = $region76
      $region75: #{mp_block_forward.2} parent=51 // pred_region
        %p1307 = scmp.lt.s32.totalorder %s27, 0
        %s1308 = scalar_select %p1307, %s27, 0
        %s1309 = smul.addr %s1308, 8
        %s1310 = scalar_lea.vmem %s10, %s1309
      $region76: #{mp_block_forward.2} parent=51 // pred_fallthru
        _
      // Predicated region
      $region77: #{mp_block_forward.2} parent=51 // pred_check
        %p1311 = pneg %p325
      $region78: #{mp_block_forward.2} parent=51 // pred_check_branch
        %1313 = sbr.rel (%p1311) target = $region80
      $region79: #{mp_block_forward.2} parent=51 // pred_region
        %p1314 = scmp.lt.s32.totalorder %s27, 0
        %s1315 = scalar_select %p1314, %s27, 0
        %s1316 = smul.addr %s1315, 8
        %s1317 = scalar_lea.vmem %s11, %s1316
      $region80: #{mp_block_forward.2} parent=51 // pred_fallthru
        _
    $region52: #{mp_block_forward.2} parent=5 // pred_fallthru
      _
    %p1318 = scmp.le.s32.totalorder 2, %s18
    // Predicated region
    $region81: #{mp_block_forward.2} parent=5 // pred_check
      %p1319 = pneg %p1318
    $region82: #{mp_block_forward.2} parent=5 // pred_check_branch
      %1321 = sbr.rel (%p1319) target = $region84
    $region83: #{mp_block_forward.2} parent=5 // pred_region
      %s1322 = ssub.s32 %s18, 2
      // Predicated region
      $region85: #{mp_block_forward.2} parent=83 // pred_check
        %p1323 = pneg %p249
      $region86: #{mp_block_forward.2} parent=83 // pred_check_branch
        %1325 = sbr.rel (%p1323) target = $region88
      $region87: #{mp_block_forward.2} parent=83 // pred_region
        %s1326 = smul.u32 %s29, 4
        %s1327 = sadd.s32 %s1326, %s30
        %s1328 = smul.u32 2, %s1327
        %p1329 = scmp.lt.s32.totalorder %s1328, 7
        %s1330 = scalar_select %p1329, %s1328, 7
        %s1331 = smul.addr %s1330, 4
        %s1332 = scalar_lea.vmem %s8, %s1331
      $region88: #{mp_block_forward.2} parent=83 // pred_fallthru
        _
      // Predicated region
      $region89: #{mp_block_forward.2} parent=83 // pred_check
        %p1333 = pneg %p279
      $region90: #{mp_block_forward.2} parent=83 // pred_check_branch
        %1335 = sbr.rel (%p1333) target = $region92
      $region91: #{mp_block_forward.2} parent=83 // pred_region
        %s1336 = smul.u32 %s29, 4
        %s1337 = sadd.s32 %s1336, %s30
        %s1338 = smul.u32 2, %s1337
        %p1339 = scmp.lt.s32.totalorder %s1338, 7
        %s1340 = scalar_select %p1339, %s1338, 7
        %s1341 = smul.addr %s1340, 8
        %s1342 = scalar_lea.vmem %s9, %s1341
      $region92: #{mp_block_forward.2} parent=83 // pred_fallthru
        _
    $region84: #{mp_block_forward.2} parent=5 // pred_fallthru
      _
  $region6: #{mp_block_forward.2} parent=0 // loop_footer
    %s22 = sadd.s32 1, %s18
  $region7: #{mp_block_forward.2} parent=0 // loop_footer_branch
    %17 = sbr.rel target = $region3
  $region8: #{mp_block_forward.2} parent=0 // loop_exit
    _

// kernel: mp_block_forward.3
$region0: #{mp_block_forward.3}
  #allocation0 [shape = 'u32[]', space=smem, size = 0x4, offset = 0x4, fixed_abs, tag = 'smem constant byte address 0x4 - core index']
  #allocation1 [shape = 'u32[144,128]{1,0:T(1,128)}', space=vmem, size = 0x12000, scoped, tag = 'internal scratch']
  %s0 = inlined_call_operand.vmem [shape: bf16[64,128], index: 0, kind: input, shape index: {}]
  %s1 = inlined_call_operand.vmem [shape: f32[64,8], index: 1, kind: input, shape index: {}]
  %s2 = inlined_call_operand.vmem [shape: bf16[64,20], index: 2, kind: input, shape index: {}]
  %s3 = inlined_call_operand.vmem [shape: bf16[64,128], index: 3, kind: input, shape index: {}]
  %s4 = inlined_call_operand.vmem [shape: f32[64,8], index: 4, kind: input, shape index: {}]
  %s5 = inlined_call_operand.vmem [shape: s32[64,1], index: 5, kind: input, shape index: {}]
  %s6 = inlined_call_operand.vmem [shape: s32[4,1,16], index: 6, kind: input, shape index: {}]
  %s7 = inlined_call_operand.vmem [shape: f32[8,8], index: 7, kind: input, shape index: {}]
  %s8 = inlined_call_operand.vmem [shape: f32[8,8], index: 8, kind: input, shape index: {}]
  %s9 = inlined_call_operand.vmem [shape: bf16[128,512], index: 9, kind: input, shape index: {}]
  %s10 = inlined_call_operand.vmem [shape: bf16[128,128], index: 10, kind: input, shape index: {}]
  %s11 = inlined_call_operand.vmem [shape: f32[1,128], index: 11, kind: input, shape index: {}]
  %s12 = inlined_call_operand.vmem [shape: bf16[128,128], index: 12, kind: input, shape index: {}]
  %s13 = inlined_call_operand.vmem [shape: f32[1,128], index: 13, kind: input, shape index: {}]
  %s14 = inlined_call_operand.vmem [shape: bf16[128,128], index: 14, kind: input, shape index: {}]
  %s15 = inlined_call_operand.vmem [shape: f32[1,128], index: 15, kind: input, shape index: {}]
  %s16 = inlined_call_operand.vmem [shape: bf16[20,128], index: 16, kind: input, shape index: {}]
  %s17 = inlined_call_operand.vmem [shape: f32[1,128], index: 17, kind: input, shape index: {}]
  %s18 = inlined_call_operand.vmem [shape: bf16[20,128], index: 18, kind: input, shape index: {}]
  %s19 = inlined_call_operand.vmem [shape: f32[1,128], index: 19, kind: input, shape index: {}]
  %s20 = inlined_call_operand.vmem [shape: f32[8,128], index: 20, kind: input, shape index: {}]
  %s21 = inlined_call_operand.vmem [shape: f32[1,8,128], index: 21, kind: output, shape index: {}]
  %s22 = sld [smem:[#allocation0]]
  $region121: #{mp_block_forward.3} parent=0
    _
  %s24 = ssub.s32 1, %s22
  %s25 = scalar_select 0, %s24, %s22
  loop: start=0, step=1, limit=6
  $region2: #{mp_block_forward.3} parent=0 // loop_pre_header
    _
  $region3: #{mp_block_forward.3} parent=0 // loop_header
    %s27 = sphi 0, %s31
    %p28 = scmp.ge.s32.totalorder %s27, 6
    %s34 = sphi 0, %s46
    %s35 = sphi 0, %s42
    %s36 = sphi 0, %s34
    %s37 = sphi 0, %s35
    %s38 = sphi 0, %s36
    %s39 = sphi 0, %s37
    %s53 = sphi 0, %s55
    %s56 = sphi 0, %s53
    %s57 = sphi 0, %s56
    %s73 = sphi 0, %s57
    %s83 = sphi 0, %s85
    %s86 = sphi 0, %s83
    %s87 = sphi 0, %s86
    %s103 = sphi 0, %s87
    %s113 = sphi 0, %s115
    %s116 = sphi 0, %s113
    %s117 = sphi 0, %s116
    %s133 = sphi 0, %s117
    %s143 = sphi 0, %s145
    %s146 = sphi 0, %s143
    %s147 = sphi 0, %s146
    %s163 = sphi 0, %s147
    %s173 = sphi 0, %s175
    %s176 = sphi 0, %s173
    %s177 = sphi 0, %s176
    %s193 = sphi 0, %s177
    %s203 = sphi 0, %s205
    %s206 = sphi 0, %s203
    %s207 = sphi 0, %s206
    %s223 = sphi 0, %s207
    %s233 = sphi 0, %s235
    %s236 = sphi 0, %s233
    %s237 = sphi 0, %s236
    %s253 = sphi 0, %s237
    %s257 = sphi 0, %s257
    %s259 = sphi 0, %s257
    %s260 = sphi 0, %s259
    %s274 = sphi 0, %s260
    %s278 = sphi 0, %s278
    %s280 = sphi 0, %s278
    %s281 = sphi 0, %s280
    %s295 = sphi 0, %s281
    %s299 = sphi 0, %s299
    %s301 = sphi 0, %s299
    %s302 = sphi 0, %s301
    %s316 = sphi 0, %s302
    %s320 = sphi 0, %s320
    %s322 = sphi 0, %s320
    %s323 = sphi 0, %s322
    %s337 = sphi 0, %s323
    %s341 = sphi 0, %s341
    %s343 = sphi 0, %s341
    %s344 = sphi 0, %s343
    %s358 = sphi 0, %s344
    %s362 = sphi 0, %s362
    %s364 = sphi 0, %s362
    %s365 = sphi 0, %s364
    %s379 = sphi 0, %s365
    %s383 = sphi 0, %s383
    %s385 = sphi 0, %s383
    %s386 = sphi 0, %s385
    %s400 = sphi 0, %s386
    %s404 = sphi 0, %s404
    %s406 = sphi 0, %s404
    %s407 = sphi 0, %s406
    %s421 = sphi 0, %s407
    %s425 = sphi 0, %s425
    %s427 = sphi 0, %s425
    %s428 = sphi 0, %s427
    %s442 = sphi 0, %s428
    %s446 = sphi 0, %s446
    %s448 = sphi 0, %s446
    %s449 = sphi 0, %s448
    %s463 = sphi 0, %s449
    %s467 = sphi 0, %s467
    %s469 = sphi 0, %s467
    %s470 = sphi 0, %s469
    %s484 = sphi 0, %s470
    %s488 = sphi 0, %s488
    %s490 = sphi 0, %s488
    %s491 = sphi 0, %s490
    %s505 = sphi 0, %s491
    %s509 = sphi 0, %s509
    %s511 = sphi 0, %s509
    %s512 = sphi 0, %s511
    %s526 = sphi 0, %s512
    %s530 = sphi 0, %s530
    %s532 = sphi 0, %s530
    %s533 = sphi 0, %s532
    %s547 = sphi 0, %s533
    %s553 = sphi 0, %s555
    %s556 = sphi 0, %s553
    %s557 = sphi 0, %s556
    %s573 = sphi 0, %s557
  $region4: #{mp_block_forward.3} parent=0 // loop_header_branch
    %30 = sbr.rel (%p28) target = $region8
  $region5: #{mp_block_forward.3} parent=0 // loop_body
    %s32 = ssub.s32 %s27, 1
    %s33 = ssub.s32 %s27, 2
    %s40 = sadd.s32 1, %s35
    %p41 = scmp.ge.s32.totalorder %s40, 4
    %s42 = scalar_select %p41, 0, %s40
    %s43 = sadd.s32 1, %s34
    %s44 = scalar_select %p41, %s43, %s34
    %p45 = scmp.ge.s32.totalorder %s44, 1
    %s46 = scalar_select %p45, 0, %s44
    %s47 = smul.u32 %s34, 4
    %s48 = sadd.s32 %s47, %s35
    %s49 = smul.u32 %s46, 4
    %s50 = sadd.s32 %s49, %s42
    %s51 = ssub.s32 %s48, %s50
    %p52 = scmp.eq.s32.totalorder %s51, 0
    %s54 = sadd.s32 %s53, 1
    %s55 = scalar_select %p52, %s53, %s54
    %p58 = pneg %p52
    %p59 = scmp.eq.s32.totalorder %s27, 3
    %p60 = por %p58, %p59
    %p61 = scmp.ne.s32.totalorder %s53, %s56
    %p62 = scmp.eq.s32.totalorder %s27, 0
    %p63 = por %p61, %p62
    %p64 = scmp.ne.s32.totalorder %s53, %s56
    %p65 = scmp.eq.s32.totalorder %s32, 3
    %p66 = por %p64, %p65
    %p67 = scmp.ne.s32.totalorder %s56, %s57
    %p68 = scmp.eq.s32.totalorder %s32, 0
    %p69 = por %p67, %p68
    %p70 = scmp.ne.s32.totalorder %s56, %s57
    %p71 = scmp.eq.s32.totalorder %s33, 3
    %p72 = por %p70, %p71
    %p74 = scmp.ne.s32.totalorder %s57, %s73
    %p75 = scmp.eq.s32.totalorder %s33, 0
    %p76 = por %p74, %p75
    %s77 = smul.u32 %s34, 4
    %s78 = sadd.s32 %s77, %s35
    %s79 = smul.u32 %s46, 4
    %s80 = sadd.s32 %s79, %s42
    %s81 = ssub.s32 %s78, %s80
    %p82 = scmp.eq.s32.totalorder %s81, 0
    %s84 = sadd.s32 %s83, 1
    %s85 = scalar_select %p82, %s83, %s84
    %p88 = pneg %p82
    %p89 = scmp.eq.s32.totalorder %s27, 3
    %p90 = por %p88, %p89
    %p91 = scmp.ne.s32.totalorder %s83, %s86
    %p92 = scmp.eq.s32.totalorder %s27, 0
    %p93 = por %p91, %p92
    %p94 = scmp.ne.s32.totalorder %s83, %s86
    %p95 = scmp.eq.s32.totalorder %s32, 3
    %p96 = por %p94, %p95
    %p97 = scmp.ne.s32.totalorder %s86, %s87
    %p98 = scmp.eq.s32.totalorder %s32, 0
    %p99 = por %p97, %p98
    %p100 = scmp.ne.s32.totalorder %s86, %s87
    %p101 = scmp.eq.s32.totalorder %s33, 3
    %p102 = por %p100, %p101
    %p104 = scmp.ne.s32.totalorder %s87, %s103
    %p105 = scmp.eq.s32.totalorder %s33, 0
    %p106 = por %p104, %p105
    %s107 = smul.u32 %s34, 4
    %s108 = sadd.s32 %s107, %s35
    %s109 = smul.u32 %s46, 4
    %s110 = sadd.s32 %s109, %s42
    %s111 = ssub.s32 %s108, %s110
    %p112 = scmp.eq.s32.totalorder %s111, 0
    %s114 = sadd.s32 %s113, 1
    %s115 = scalar_select %p112, %s113, %s114
    %p118 = pneg %p112
    %p119 = scmp.eq.s32.totalorder %s27, 3
    %p120 = por %p118, %p119
    %p121 = scmp.ne.s32.totalorder %s113, %s116
    %p122 = scmp.eq.s32.totalorder %s27, 0
    %p123 = por %p121, %p122
    %p124 = scmp.ne.s32.totalorder %s113, %s116
    %p125 = scmp.eq.s32.totalorder %s32, 3
    %p126 = por %p124, %p125
    %p127 = scmp.ne.s32.totalorder %s116, %s117
    %p128 = scmp.eq.s32.totalorder %s32, 0
    %p129 = por %p127, %p128
    %p130 = scmp.ne.s32.totalorder %s116, %s117
    %p131 = scmp.eq.s32.totalorder %s33, 3
    %p132 = por %p130, %p131
    %p134 = scmp.ne.s32.totalorder %s117, %s133
    %p135 = scmp.eq.s32.totalorder %s33, 0
    %p136 = por %p134, %p135
    %s137 = smul.u32 %s34, 4
    %s138 = sadd.s32 %s137, %s35
    %s139 = smul.u32 %s46, 4
    %s140 = sadd.s32 %s139, %s42
    %s141 = ssub.s32 %s138, %s140
    %p142 = scmp.eq.s32.totalorder %s141, 0
    %s144 = sadd.s32 %s143, 1
    %s145 = scalar_select %p142, %s143, %s144
    %p148 = pneg %p142
    %p149 = scmp.eq.s32.totalorder %s27, 3
    %p150 = por %p148, %p149
    %p151 = scmp.ne.s32.totalorder %s143, %s146
    %p152 = scmp.eq.s32.totalorder %s27, 0
    %p153 = por %p151, %p152
    %p154 = scmp.ne.s32.totalorder %s143, %s146
    %p155 = scmp.eq.s32.totalorder %s32, 3
    %p156 = por %p154, %p155
    %p157 = scmp.ne.s32.totalorder %s146, %s147
    %p158 = scmp.eq.s32.totalorder %s32, 0
    %p159 = por %p157, %p158
    %p160 = scmp.ne.s32.totalorder %s146, %s147
    %p161 = scmp.eq.s32.totalorder %s33, 3
    %p162 = por %p160, %p161
    %p164 = scmp.ne.s32.totalorder %s147, %s163
    %p165 = scmp.eq.s32.totalorder %s33, 0
    %p166 = por %p164, %p165
    %s167 = smul.u32 %s34, 4
    %s168 = sadd.s32 %s167, %s35
    %s169 = smul.u32 %s46, 4
    %s170 = sadd.s32 %s169, %s42
    %s171 = ssub.s32 %s168, %s170
    %p172 = scmp.eq.s32.totalorder %s171, 0
    %s174 = sadd.s32 %s173, 1
    %s175 = scalar_select %p172, %s173, %s174
    %p178 = pneg %p172
    %p179 = scmp.eq.s32.totalorder %s27, 3
    %p180 = por %p178, %p179
    %p181 = scmp.ne.s32.totalorder %s173, %s176
    %p182 = scmp.eq.s32.totalorder %s27, 0
    %p183 = por %p181, %p182
    %p184 = scmp.ne.s32.totalorder %s173, %s176
    %p185 = scmp.eq.s32.totalorder %s32, 3
    %p186 = por %p184, %p185
    %p187 = scmp.ne.s32.totalorder %s176, %s177
    %p188 = scmp.eq.s32.totalorder %s32, 0
    %p189 = por %p187, %p188
    %p190 = scmp.ne.s32.totalorder %s176, %s177
    %p191 = scmp.eq.s32.totalorder %s33, 3
    %p192 = por %p190, %p191
    %p194 = scmp.ne.s32.totalorder %s177, %s193
    %p195 = scmp.eq.s32.totalorder %s33, 0
    %p196 = por %p194, %p195
    %s197 = smul.u32 %s34, 4
    %s198 = sadd.s32 %s197, %s35
    %s199 = smul.u32 %s46, 4
    %s200 = sadd.s32 %s199, %s42
    %s201 = ssub.s32 %s198, %s200
    %p202 = scmp.eq.s32.totalorder %s201, 0
    %s204 = sadd.s32 %s203, 1
    %s205 = scalar_select %p202, %s203, %s204
    %p208 = pneg %p202
    %p209 = scmp.eq.s32.totalorder %s27, 3
    %p210 = por %p208, %p209
    %p211 = scmp.ne.s32.totalorder %s203, %s206
    %p212 = scmp.eq.s32.totalorder %s27, 0
    %p213 = por %p211, %p212
    %p214 = scmp.ne.s32.totalorder %s203, %s206
    %p215 = scmp.eq.s32.totalorder %s32, 3
    %p216 = por %p214, %p215
    %p217 = scmp.ne.s32.totalorder %s206, %s207
    %p218 = scmp.eq.s32.totalorder %s32, 0
    %p219 = por %p217, %p218
    %p220 = scmp.ne.s32.totalorder %s206, %s207
    %p221 = scmp.eq.s32.totalorder %s33, 3
    %p222 = por %p220, %p221
    %p224 = scmp.ne.s32.totalorder %s207, %s223
    %p225 = scmp.eq.s32.totalorder %s33, 0
    %p226 = por %p224, %p225
    %s227 = smul.u32 %s34, 4
    %s228 = sadd.s32 %s227, %s35
    %s229 = smul.u32 %s46, 4
    %s230 = sadd.s32 %s229, %s42
    %s231 = ssub.s32 %s228, %s230
    %p232 = scmp.eq.s32.totalorder %s231, 0
    %s234 = sadd.s32 %s233, 1
    %s235 = scalar_select %p232, %s233, %s234
    %p238 = pneg %p232
    %p239 = scmp.eq.s32.totalorder %s27, 3
    %p240 = por %p238, %p239
    %p241 = scmp.ne.s32.totalorder %s233, %s236
    %p242 = scmp.eq.s32.totalorder %s27, 0
    %p243 = por %p241, %p242
    %p244 = scmp.ne.s32.totalorder %s233, %s236
    %p245 = scmp.eq.s32.totalorder %s32, 3
    %p246 = por %p244, %p245
    %p247 = scmp.ne.s32.totalorder %s236, %s237
    %p248 = scmp.eq.s32.totalorder %s32, 0
    %p249 = por %p247, %p248
    %p250 = scmp.ne.s32.totalorder %s236, %s237
    %p251 = scmp.eq.s32.totalorder %s33, 3
    %p252 = por %p250, %p251
    %p254 = scmp.ne.s32.totalorder %s237, %s253
    %p255 = scmp.eq.s32.totalorder %s33, 0
    %p256 = por %p254, %p255
    %s258 = sadd.s32 %s257, 1
    %p261 = scmp.eq.s32.totalorder %s27, 3
    %p262 = scmp.ne.s32.totalorder %s257, %s259
    %p263 = scmp.eq.s32.totalorder %s27, 0
    %p264 = por %p262, %p263
    %p265 = scmp.ne.s32.totalorder %s257, %s259
    %p266 = scmp.eq.s32.totalorder %s32, 3
    %p267 = por %p265, %p266
    %p268 = scmp.ne.s32.totalorder %s259, %s260
    %p269 = scmp.eq.s32.totalorder %s32, 0
    %p270 = por %p268, %p269
    %p271 = scmp.ne.s32.totalorder %s259, %s260
    %p272 = scmp.eq.s32.totalorder %s33, 3
    %p273 = por %p271, %p272
    %p275 = scmp.ne.s32.totalorder %s260, %s274
    %p276 = scmp.eq.s32.totalorder %s33, 0
    %p277 = por %p275, %p276
    %s279 = sadd.s32 %s278, 1
    %p282 = scmp.eq.s32.totalorder %s27, 3
    %p283 = scmp.ne.s32.totalorder %s278, %s280
    %p284 = scmp.eq.s32.totalorder %s27, 0
    %p285 = por %p283, %p284
    %p286 = scmp.ne.s32.totalorder %s278, %s280
    %p287 = scmp.eq.s32.totalorder %s32, 3
    %p288 = por %p286, %p287
    %p289 = scmp.ne.s32.totalorder %s280, %s281
    %p290 = scmp.eq.s32.totalorder %s32, 0
    %p291 = por %p289, %p290
    %p292 = scmp.ne.s32.totalorder %s280, %s281
    %p293 = scmp.eq.s32.totalorder %s33, 3
    %p294 = por %p292, %p293
    %p296 = scmp.ne.s32.totalorder %s281, %s295
    %p297 = scmp.eq.s32.totalorder %s33, 0
    %p298 = por %p296, %p297
    %s300 = sadd.s32 %s299, 1
    %p303 = scmp.eq.s32.totalorder %s27, 3
    %p304 = scmp.ne.s32.totalorder %s299, %s301
    %p305 = scmp.eq.s32.totalorder %s27, 0
    %p306 = por %p304, %p305
    %p307 = scmp.ne.s32.totalorder %s299, %s301
    %p308 = scmp.eq.s32.totalorder %s32, 3
    %p309 = por %p307, %p308
    %p310 = scmp.ne.s32.totalorder %s301, %s302
    %p311 = scmp.eq.s32.totalorder %s32, 0
    %p312 = por %p310, %p311
    %p313 = scmp.ne.s32.totalorder %s301, %s302
    %p314 = scmp.eq.s32.totalorder %s33, 3
    %p315 = por %p313, %p314
    %p317 = scmp.ne.s32.totalorder %s302, %s316
    %p318 = scmp.eq.s32.totalorder %s33, 0
    %p319 = por %p317, %p318
    %s321 = sadd.s32 %s320, 1
    %p324 = scmp.eq.s32.totalorder %s27, 3
    %p325 = scmp.ne.s32.totalorder %s320, %s322
    %p326 = scmp.eq.s32.totalorder %s27, 0
    %p327 = por %p325, %p326
    %p328 = scmp.ne.s32.totalorder %s320, %s322
    %p329 = scmp.eq.s32.totalorder %s32, 3
    %p330 = por %p328, %p329
    %p331 = scmp.ne.s32.totalorder %s322, %s323
    %p332 = scmp.eq.s32.totalorder %s32, 0
    %p333 = por %p331, %p332
    %p334 = scmp.ne.s32.totalorder %s322, %s323
    %p335 = scmp.eq.s32.totalorder %s33, 3
    %p336 = por %p334, %p335
    %p338 = scmp.ne.s32.totalorder %s323, %s337
    %p339 = scmp.eq.s32.totalorder %s33, 0
    %p340 = por %p338, %p339
    %s342 = sadd.s32 %s341, 1
    %p345 = scmp.eq.s32.totalorder %s27, 3
    %p346 = scmp.ne.s32.totalorder %s341, %s343
    %p347 = scmp.eq.s32.totalorder %s27, 0
    %p348 = por %p346, %p347
    %p349 = scmp.ne.s32.totalorder %s341, %s343
    %p350 = scmp.eq.s32.totalorder %s32, 3
    %p351 = por %p349, %p350
    %p352 = scmp.ne.s32.totalorder %s343, %s344
    %p353 = scmp.eq.s32.totalorder %s32, 0
    %p354 = por %p352, %p353
    %p355 = scmp.ne.s32.totalorder %s343, %s344
    %p356 = scmp.eq.s32.totalorder %s33, 3
    %p357 = por %p355, %p356
    %p359 = scmp.ne.s32.totalorder %s344, %s358
    %p360 = scmp.eq.s32.totalorder %s33, 0
    %p361 = por %p359, %p360
    %s363 = sadd.s32 %s362, 1
    %p366 = scmp.eq.s32.totalorder %s27, 3
    %p367 = scmp.ne.s32.totalorder %s362, %s364
    %p368 = scmp.eq.s32.totalorder %s27, 0
    %p369 = por %p367, %p368
    %p370 = scmp.ne.s32.totalorder %s362, %s364
    %p371 = scmp.eq.s32.totalorder %s32, 3
    %p372 = por %p370, %p371
    %p373 = scmp.ne.s32.totalorder %s364, %s365
    %p374 = scmp.eq.s32.totalorder %s32, 0
    %p375 = por %p373, %p374
    %p376 = scmp.ne.s32.totalorder %s364, %s365
    %p377 = scmp.eq.s32.totalorder %s33, 3
    %p378 = por %p376, %p377
    %p380 = scmp.ne.s32.totalorder %s365, %s379
    %p381 = scmp.eq.s32.totalorder %s33, 0
    %p382 = por %p380, %p381
    %s384 = sadd.s32 %s383, 1
    %p387 = scmp.eq.s32.totalorder %s27, 3
    %p388 = scmp.ne.s32.totalorder %s383, %s385
    %p389 = scmp.eq.s32.totalorder %s27, 0
    %p390 = por %p388, %p389
    %p391 = scmp.ne.s32.totalorder %s383, %s385
    %p392 = scmp.eq.s32.totalorder %s32, 3
    %p393 = por %p391, %p392
    %p394 = scmp.ne.s32.totalorder %s385, %s386
    %p395 = scmp.eq.s32.totalorder %s32, 0
    %p396 = por %p394, %p395
    %p397 = scmp.ne.s32.totalorder %s385, %s386
    %p398 = scmp.eq.s32.totalorder %s33, 3
    %p399 = por %p397, %p398
    %p401 = scmp.ne.s32.totalorder %s386, %s400
    %p402 = scmp.eq.s32.totalorder %s33, 0
    %p403 = por %p401, %p402
    %s405 = sadd.s32 %s404, 1
    %p408 = scmp.eq.s32.totalorder %s27, 3
    %p409 = scmp.ne.s32.totalorder %s404, %s406
    %p410 = scmp.eq.s32.totalorder %s27, 0
    %p411 = por %p409, %p410
    %p412 = scmp.ne.s32.totalorder %s404, %s406
    %p413 = scmp.eq.s32.totalorder %s32, 3
    %p414 = por %p412, %p413
    %p415 = scmp.ne.s32.totalorder %s406, %s407
    %p416 = scmp.eq.s32.totalorder %s32, 0
    %p417 = por %p415, %p416
    %p418 = scmp.ne.s32.totalorder %s406, %s407
    %p419 = scmp.eq.s32.totalorder %s33, 3
    %p420 = por %p418, %p419
    %p422 = scmp.ne.s32.totalorder %s407, %s421
    %p423 = scmp.eq.s32.totalorder %s33, 0
    %p424 = por %p422, %p423
    %s426 = sadd.s32 %s425, 1
    %p429 = scmp.eq.s32.totalorder %s27, 3
    %p430 = scmp.ne.s32.totalorder %s425, %s427
    %p431 = scmp.eq.s32.totalorder %s27, 0
    %p432 = por %p430, %p431
    %p433 = scmp.ne.s32.totalorder %s425, %s427
    %p434 = scmp.eq.s32.totalorder %s32, 3
    %p435 = por %p433, %p434
    %p436 = scmp.ne.s32.totalorder %s427, %s428
    %p437 = scmp.eq.s32.totalorder %s32, 0
    %p438 = por %p436, %p437
    %p439 = scmp.ne.s32.totalorder %s427, %s428
    %p440 = scmp.eq.s32.totalorder %s33, 3
    %p441 = por %p439, %p440
    %p443 = scmp.ne.s32.totalorder %s428, %s442
    %p444 = scmp.eq.s32.totalorder %s33, 0
    %p445 = por %p443, %p444
    %s447 = sadd.s32 %s446, 1
    %p450 = scmp.eq.s32.totalorder %s27, 3
    %p451 = scmp.ne.s32.totalorder %s446, %s448
    %p452 = scmp.eq.s32.totalorder %s27, 0
    %p453 = por %p451, %p452
    %p454 = scmp.ne.s32.totalorder %s446, %s448
    %p455 = scmp.eq.s32.totalorder %s32, 3
    %p456 = por %p454, %p455
    %p457 = scmp.ne.s32.totalorder %s448, %s449
    %p458 = scmp.eq.s32.totalorder %s32, 0
    %p459 = por %p457, %p458
    %p460 = scmp.ne.s32.totalorder %s448, %s449
    %p461 = scmp.eq.s32.totalorder %s33, 3
    %p462 = por %p460, %p461
    %p464 = scmp.ne.s32.totalorder %s449, %s463
    %p465 = scmp.eq.s32.totalorder %s33, 0
    %p466 = por %p464, %p465
    %s468 = sadd.s32 %s467, 1
    %p471 = scmp.eq.s32.totalorder %s27, 3
    %p472 = scmp.ne.s32.totalorder %s467, %s469
    %p473 = scmp.eq.s32.totalorder %s27, 0
    %p474 = por %p472, %p473
    %p475 = scmp.ne.s32.totalorder %s467, %s469
    %p476 = scmp.eq.s32.totalorder %s32, 3
    %p477 = por %p475, %p476
    %p478 = scmp.ne.s32.totalorder %s469, %s470
    %p479 = scmp.eq.s32.totalorder %s32, 0
    %p480 = por %p478, %p479
    %p481 = scmp.ne.s32.totalorder %s469, %s470
    %p482 = scmp.eq.s32.totalorder %s33, 3
    %p483 = por %p481, %p482
    %p485 = scmp.ne.s32.totalorder %s470, %s484
    %p486 = scmp.eq.s32.totalorder %s33, 0
    %p487 = por %p485, %p486
    %s489 = sadd.s32 %s488, 1
    %p492 = scmp.eq.s32.totalorder %s27, 3
    %p493 = scmp.ne.s32.totalorder %s488, %s490
    %p494 = scmp.eq.s32.totalorder %s27, 0
    %p495 = por %p493, %p494
    %p496 = scmp.ne.s32.totalorder %s488, %s490
    %p497 = scmp.eq.s32.totalorder %s32, 3
    %p498 = por %p496, %p497
    %p499 = scmp.ne.s32.totalorder %s490, %s491
    %p500 = scmp.eq.s32.totalorder %s32, 0
    %p501 = por %p499, %p500
    %p502 = scmp.ne.s32.totalorder %s490, %s491
    %p503 = scmp.eq.s32.totalorder %s33, 3
    %p504 = por %p502, %p503
    %p506 = scmp.ne.s32.totalorder %s491, %s505
    %p507 = scmp.eq.s32.totalorder %s33, 0
    %p508 = por %p506, %p507
    %s510 = sadd.s32 %s509, 1
    %p513 = scmp.eq.s32.totalorder %s27, 3
    %p514 = scmp.ne.s32.totalorder %s509, %s511
    %p515 = scmp.eq.s32.totalorder %s27, 0
    %p516 = por %p514, %p515
    %p517 = scmp.ne.s32.totalorder %s509, %s511
    %p518 = scmp.eq.s32.totalorder %s32, 3
    %p519 = por %p517, %p518
    %p520 = scmp.ne.s32.totalorder %s511, %s512
    %p521 = scmp.eq.s32.totalorder %s32, 0
    %p522 = por %p520, %p521
    %p523 = scmp.ne.s32.totalorder %s511, %s512
    %p524 = scmp.eq.s32.totalorder %s33, 3
    %p525 = por %p523, %p524
    %p527 = scmp.ne.s32.totalorder %s512, %s526
    %p528 = scmp.eq.s32.totalorder %s33, 0
    %p529 = por %p527, %p528
    %s531 = sadd.s32 %s530, 1
    %p534 = scmp.eq.s32.totalorder %s27, 3
    %p535 = scmp.ne.s32.totalorder %s530, %s532
    %p536 = scmp.eq.s32.totalorder %s27, 0
    %p537 = por %p535, %p536
    %p538 = scmp.ne.s32.totalorder %s530, %s532
    %p539 = scmp.eq.s32.totalorder %s32, 3
    %p540 = por %p538, %p539
    %p541 = scmp.ne.s32.totalorder %s532, %s533
    %p542 = scmp.eq.s32.totalorder %s32, 0
    %p543 = por %p541, %p542
    %p544 = scmp.ne.s32.totalorder %s532, %s533
    %p545 = scmp.eq.s32.totalorder %s33, 3
    %p546 = por %p544, %p545
    %p548 = scmp.ne.s32.totalorder %s533, %s547
    %p549 = scmp.eq.s32.totalorder %s33, 0
    %p550 = por %p548, %p549
    %s551 = ssub.s32 %s34, %s46
    %p552 = scmp.eq.s32.totalorder %s551, 0
    %s554 = sadd.s32 %s553, 1
    %s555 = scalar_select %p552, %s553, %s554
    %p558 = pneg %p552
    %p559 = scmp.eq.s32.totalorder %s27, 3
    %p560 = por %p558, %p559
    %p561 = scmp.ne.s32.totalorder %s553, %s556
    %p562 = scmp.eq.s32.totalorder %s27, 0
    %p563 = por %p561, %p562
    %p564 = scmp.ne.s32.totalorder %s553, %s556
    %p565 = scmp.eq.s32.totalorder %s32, 3
    %p566 = por %p564, %p565
    %p567 = scmp.ne.s32.totalorder %s556, %s557
    %p568 = scmp.eq.s32.totalorder %s32, 0
    %p569 = por %p567, %p568
    %p570 = scmp.ne.s32.totalorder %s556, %s557
    %p571 = scmp.eq.s32.totalorder %s33, 3
    %p572 = por %p570, %p571
    %p574 = scmp.ne.s32.totalorder %s557, %s573
    %p575 = scmp.eq.s32.totalorder %s33, 0
    %p576 = por %p574, %p575
    %p577 = scmp.le.s32.totalorder 1, %s27
    %p578 = scmp.lt.s32.totalorder %s27, 5
    %p579 = pnand %p577, %p578
    %p580 = pneg %p579
    // Predicated region
    $region9: #{mp_block_forward.3} parent=5 // pred_check
      _
    $region10: #{mp_block_forward.3} parent=5 // pred_check_branch
      %582 = sbr.rel (%p579) target = $region12
    $region11: #{mp_block_forward.3} parent=5 // pred_region
      %s583 = ssub.s32 %s27, 1
      // Predicated region
      $region13: #{mp_block_forward.3} parent=11 // pred_check
        %p584 = pneg %p270
      $region14: #{mp_block_forward.3} parent=11 // pred_check_branch
        %586 = sbr.rel (%p584) target = $region16
      $region15: #{mp_block_forward.3} parent=11 // pred_region
        _
      $region16: #{mp_block_forward.3} parent=11 // pred_fallthru
        _
      // Predicated region
      $region17: #{mp_block_forward.3} parent=11 // pred_check
        %p587 = pneg %p291
      $region18: #{mp_block_forward.3} parent=11 // pred_check_branch
        %589 = sbr.rel (%p587) target = $region20
      $region19: #{mp_block_forward.3} parent=11 // pred_region
        _
      $region20: #{mp_block_forward.3} parent=11 // pred_fallthru
        _
      // Predicated region
      $region21: #{mp_block_forward.3} parent=11 // pred_check
        %p590 = pneg %p312
      $region22: #{mp_block_forward.3} parent=11 // pred_check_branch
        %592 = sbr.rel (%p590) target = $region24
      $region23: #{mp_block_forward.3} parent=11 // pred_region
        _
      $region24: #{mp_block_forward.3} parent=11 // pred_fallthru
        _
      // Predicated region
      $region25: #{mp_block_forward.3} parent=11 // pred_check
        %p593 = pneg %p333
      $region26: #{mp_block_forward.3} parent=11 // pred_check_branch
        %595 = sbr.rel (%p593) target = $region28
      $region27: #{mp_block_forward.3} parent=11 // pred_region
        _
      $region28: #{mp_block_forward.3} parent=11 // pred_fallthru
        _
      // Predicated region
      $region29: #{mp_block_forward.3} parent=11 // pred_check
        %p596 = pneg %p354
      $region30: #{mp_block_forward.3} parent=11 // pred_check_branch
        %598 = sbr.rel (%p596) target = $region32
      $region31: #{mp_block_forward.3} parent=11 // pred_region
        _
      $region32: #{mp_block_forward.3} parent=11 // pred_fallthru
        _
      // Predicated region
      $region33: #{mp_block_forward.3} parent=11 // pred_check
        %p599 = pneg %p375
      $region34: #{mp_block_forward.3} parent=11 // pred_check_branch
        %601 = sbr.rel (%p599) target = $region36
      $region35: #{mp_block_forward.3} parent=11 // pred_region
        _
      $region36: #{mp_block_forward.3} parent=11 // pred_fallthru
        _
      // Predicated region
      $region37: #{mp_block_forward.3} parent=11 // pred_check
        %p602 = pneg %p396
      $region38: #{mp_block_forward.3} parent=11 // pred_check_branch
        %604 = sbr.rel (%p602) target = $region40
      $region39: #{mp_block_forward.3} parent=11 // pred_region
        _
      $region40: #{mp_block_forward.3} parent=11 // pred_fallthru
        _
      // Predicated region
      $region41: #{mp_block_forward.3} parent=11 // pred_check
        %p605 = pneg %p417
      $region42: #{mp_block_forward.3} parent=11 // pred_check_branch
        %607 = sbr.rel (%p605) target = $region44
      $region43: #{mp_block_forward.3} parent=11 // pred_region
        _
      $region44: #{mp_block_forward.3} parent=11 // pred_fallthru
        _
      // Predicated region
      $region45: #{mp_block_forward.3} parent=11 // pred_check
        %p608 = pneg %p438
      $region46: #{mp_block_forward.3} parent=11 // pred_check_branch
        %610 = sbr.rel (%p608) target = $region48
      $region47: #{mp_block_forward.3} parent=11 // pred_region
        _
      $region48: #{mp_block_forward.3} parent=11 // pred_fallthru
        _
      // Predicated region
      $region49: #{mp_block_forward.3} parent=11 // pred_check
        %p611 = pneg %p459
      $region50: #{mp_block_forward.3} parent=11 // pred_check_branch
        %613 = sbr.rel (%p611) target = $region52
      $region51: #{mp_block_forward.3} parent=11 // pred_region
        _
      $region52: #{mp_block_forward.3} parent=11 // pred_fallthru
        _
      // Predicated region
      $region53: #{mp_block_forward.3} parent=11 // pred_check
        %p614 = pneg %p480
      $region54: #{mp_block_forward.3} parent=11 // pred_check_branch
        %616 = sbr.rel (%p614) target = $region56
      $region55: #{mp_block_forward.3} parent=11 // pred_region
        _
      $region56: #{mp_block_forward.3} parent=11 // pred_fallthru
        _
      // Predicated region
      $region57: #{mp_block_forward.3} parent=11 // pred_check
        %p617 = pneg %p501
      $region58: #{mp_block_forward.3} parent=11 // pred_check_branch
        %619 = sbr.rel (%p617) target = $region60
      $region59: #{mp_block_forward.3} parent=11 // pred_region
        _
      $region60: #{mp_block_forward.3} parent=11 // pred_fallthru
        _
      // Predicated region
      $region61: #{mp_block_forward.3} parent=11 // pred_check
        %p620 = pneg %p522
      $region62: #{mp_block_forward.3} parent=11 // pred_check_branch
        %622 = sbr.rel (%p620) target = $region64
      $region63: #{mp_block_forward.3} parent=11 // pred_region
        _
      $region64: #{mp_block_forward.3} parent=11 // pred_fallthru
        _
      // Predicated region
      $region65: #{mp_block_forward.3} parent=11 // pred_check
        %p623 = pneg %p543
      $region66: #{mp_block_forward.3} parent=11 // pred_check_branch
        %625 = sbr.rel (%p623) target = $region68
      $region67: #{mp_block_forward.3} parent=11 // pred_region
        _
      $region68: #{mp_block_forward.3} parent=11 // pred_fallthru
        _
    $region12: #{mp_block_forward.3} parent=5 // pred_fallthru
      _
    %p626 = scmp.lt.s32.totalorder %s27, 4
    // Predicated region
    $region69: #{mp_block_forward.3} parent=5 // pred_check
      %p627 = pneg %p626
    $region70: #{mp_block_forward.3} parent=5 // pred_check_branch
      %629 = sbr.rel (%p627) target = $region72
    $region71: #{mp_block_forward.3} parent=5 // pred_region
      // Predicated region
      $region73: #{mp_block_forward.3} parent=71 // pred_check
        %p630 = pneg %p63
      $region74: #{mp_block_forward.3} parent=71 // pred_check_branch
        %632 = sbr.rel (%p630) target = $region76
      $region75: #{mp_block_forward.3} parent=71 // pred_region
        %s633 = smul.u32 %s34, 4
        %s634 = sadd.s32 %s633, %s35
        %s635 = smul.u32 2, %s634
        %p636 = scmp.lt.s32.totalorder %s635, 7
        %s637 = scalar_select %p636, %s635, 7
        %s638 = smul.addr %s637, 4
        %s639 = scalar_lea.vmem %s0, %s638
        %s640 = smul.u32 %s34, 4
        %s641 = sadd.s32 %s640, %s35
        %s642 = smul.u32 2, %s641
      $region76: #{mp_block_forward.3} parent=71 // pred_fallthru
        _
      // Predicated region
      $region77: #{mp_block_forward.3} parent=71 // pred_check
        %p643 = pneg %p93
      $region78: #{mp_block_forward.3} parent=71 // pred_check_branch
        %645 = sbr.rel (%p643) target = $region80
      $region79: #{mp_block_forward.3} parent=71 // pred_region
        %s646 = smul.u32 %s34, 4
        %s647 = sadd.s32 %s646, %s35
        %s648 = smul.u32 2, %s647
        %p649 = scmp.lt.s32.totalorder %s648, 7
        %s650 = scalar_select %p649, %s648, 7
        %s651 = smul.addr %s650, 8
        %s652 = scalar_lea.vmem %s1, %s651
        %s653 = smul.u32 %s34, 4
        %s654 = sadd.s32 %s653, %s35
        %s655 = smul.u32 2, %s654
      $region80: #{mp_block_forward.3} parent=71 // pred_fallthru
        _
      // Predicated region
      $region81: #{mp_block_forward.3} parent=71 // pred_check
        %p656 = pneg %p123
      $region82: #{mp_block_forward.3} parent=71 // pred_check_branch
        %658 = sbr.rel (%p656) target = $region84
      $region83: #{mp_block_forward.3} parent=71 // pred_region
        %s659 = smul.u32 %s34, 4
        %s660 = sadd.s32 %s659, %s35
        %s661 = smul.u32 2, %s660
        %p662 = scmp.lt.s32.totalorder %s661, 7
        %s663 = scalar_select %p662, %s661, 7
        %s664 = smul.addr %s663, 4
        %s665 = scalar_lea.vmem %s2, %s664
        %s666 = smul.u32 %s34, 4
        %s667 = sadd.s32 %s666, %s35
        %s668 = smul.u32 2, %s667
      $region84: #{mp_block_forward.3} parent=71 // pred_fallthru
        _
      // Predicated region
      $region85: #{mp_block_forward.3} parent=71 // pred_check
        %p669 = pneg %p153
      $region86: #{mp_block_forward.3} parent=71 // pred_check_branch
        %671 = sbr.rel (%p669) target = $region88
      $region87: #{mp_block_forward.3} parent=71 // pred_region
        %s672 = smul.u32 %s34, 4
        %s673 = sadd.s32 %s672, %s35
        %s674 = smul.u32 2, %s673
        %p675 = scmp.lt.s32.totalorder %s674, 7
        %s676 = scalar_select %p675, %s674, 7
        %s677 = smul.addr %s676, 4
        %s678 = scalar_lea.vmem %s3, %s677
        %s679 = smul.u32 %s34, 4
        %s680 = sadd.s32 %s679, %s35
        %s681 = smul.u32 2, %s680
      $region88: #{mp_block_forward.3} parent=71 // pred_fallthru
        _
      // Predicated region
      $region89: #{mp_block_forward.3} parent=71 // pred_check
        %p682 = pneg %p183
      $region90: #{mp_block_forward.3} parent=71 // pred_check_branch
        %684 = sbr.rel (%p682) target = $region92
      $region91: #{mp_block_forward.3} parent=71 // pred_region
        %s685 = smul.u32 %s34, 4
        %s686 = sadd.s32 %s685, %s35
        %s687 = smul.u32 2, %s686
        %p688 = scmp.lt.s32.totalorder %s687, 7
        %s689 = scalar_select %p688, %s687, 7
        %s690 = smul.addr %s689, 8
        %s691 = scalar_lea.vmem %s4, %s690
        %s692 = smul.u32 %s34, 4
        %s693 = sadd.s32 %s692, %s35
        %s694 = smul.u32 2, %s693
      $region92: #{mp_block_forward.3} parent=71 // pred_fallthru
        _
      // Predicated region
      $region93: #{mp_block_forward.3} parent=71 // pred_check
        %p695 = pneg %p213
      $region94: #{mp_block_forward.3} parent=71 // pred_check_branch
        %697 = sbr.rel (%p695) target = $region96
      $region95: #{mp_block_forward.3} parent=71 // pred_region
        %s698 = smul.u32 %s34, 4
        %s699 = sadd.s32 %s698, %s35
        %s700 = smul.u32 2, %s699
        %p701 = scmp.lt.s32.totalorder %s700, 7
        %s702 = scalar_select %p701, %s700, 7
        %s703 = smul.addr %s702, 8
        %s704 = scalar_lea.vmem %s5, %s703
        %s705 = smul.u32 %s34, 4
        %s706 = sadd.s32 %s705, %s35
        %s707 = smul.u32 2, %s706
      $region96: #{mp_block_forward.3} parent=71 // pred_fallthru
        _
      // Predicated region
      $region97: #{mp_block_forward.3} parent=71 // pred_check
        %p708 = pneg %p243
      $region98: #{mp_block_forward.3} parent=71 // pred_check_branch
        %710 = sbr.rel (%p708) target = $region100
      $region99: #{mp_block_forward.3} parent=71 // pred_region
        %s711 = smul.u32 %s34, 4
        %s712 = sadd.s32 %s711, %s35
        %p713 = scmp.lt.s32.totalorder %s712, 3
        %s714 = scalar_select %p713, %s712, 3
        %s715 = scalar_lea.vmem %s6, %s714
        %s716 = smul.u32 %s34, 4
        %s717 = sadd.s32 %s716, %s35
      $region100: #{mp_block_forward.3} parent=71 // pred_fallthru
        _
    $region72: #{mp_block_forward.3} parent=5 // pred_fallthru
      _
    %p718 = scmp.le.s32.totalorder 1, %s27
    %p719 = scmp.lt.s32.totalorder %s27, 5
    %p720 = pnand %p718, %p719
    %p721 = pneg %p720
    // Predicated region
    $region101: #{mp_block_forward.3} parent=5 // pred_check
      _
    $region102: #{mp_block_forward.3} parent=5 // pred_check_branch
      %723 = sbr.rel (%p720) target = $region104
    $region103: #{mp_block_forward.3} parent=5 // pred_region
      %s724 = ssub.s32 %s27, 1
      %s725 = smul.u32 %s36, 4
      %s726 = sadd.s32 %s725, %s37
      %s727 = smul.u32 2, %s726
      %p728 = scmp.lt.s32.totalorder %s727, 7
      %s729 = scalar_select %p728, %s727, 7
      %s730 = smul.addr %s729, 4
      %s731 = scalar_lea.vmem %s0, %s730
      %p732 = pneg %p69
      %p733 = pneg %p66
      %s734 = smul.u32 %s36, 4
      %s735 = sadd.s32 %s734, %s37
      %s736 = smul.u32 2, %s735
      %p737 = scmp.lt.s32.totalorder %s736, 7
      %s738 = scalar_select %p737, %s736, 7
      %s739 = smul.addr %s738, 8
      %s740 = scalar_lea.vmem %s1, %s739
      %p741 = pneg %p99
      %p742 = pneg %p96
      %s743 = smul.u32 %s36, 4
      %s744 = sadd.s32 %s743, %s37
      %s745 = smul.u32 2, %s744
      %p746 = scmp.lt.s32.totalorder %s745, 7
      %s747 = scalar_select %p746, %s745, 7
      %s748 = smul.addr %s747, 4
      %s749 = scalar_lea.vmem %s2, %s748
      %p750 = pneg %p129
      %p751 = pneg %p126
      %s752 = smul.u32 %s36, 4
      %s753 = sadd.s32 %s752, %s37
      %s754 = smul.u32 2, %s753
      %p755 = scmp.lt.s32.totalorder %s754, 7
      %s756 = scalar_select %p755, %s754, 7
      %s757 = smul.addr %s756, 4
      %s758 = scalar_lea.vmem %s3, %s757
      %p759 = pneg %p159
      %p760 = pneg %p156
      %s761 = smul.u32 %s36, 4
      %s762 = sadd.s32 %s761, %s37
      %s763 = smul.u32 2, %s762
      %p764 = scmp.lt.s32.totalorder %s763, 7
      %s765 = scalar_select %p764, %s763, 7
      %s766 = smul.addr %s765, 8
      %s767 = scalar_lea.vmem %s4, %s766
      %p768 = pneg %p189
      %p769 = pneg %p186
      %s770 = smul.u32 %s36, 4
      %s771 = sadd.s32 %s770, %s37
      %s772 = smul.u32 2, %s771
      %p773 = scmp.lt.s32.totalorder %s772, 7
      %s774 = scalar_select %p773, %s772, 7
      %s775 = smul.addr %s774, 8
      %s776 = scalar_lea.vmem %s5, %s775
      %p777 = pneg %p219
      %p778 = pneg %p216
      %s779 = smul.u32 %s36, 4
      %s780 = sadd.s32 %s779, %s37
      %p781 = scmp.lt.s32.totalorder %s780, 3
      %s782 = scalar_select %p781, %s780, 3
      %s783 = scalar_lea.vmem %s6, %s782
      %p784 = pneg %p249
      %p785 = pneg %p246
      %p786 = pneg %p270
      %p787 = pneg %p267
      %p788 = pneg %p291
      %p789 = pneg %p288
      %p790 = pneg %p312
      %p791 = pneg %p309
      %p792 = pneg %p333
      %p793 = pneg %p330
      %p794 = pneg %p354
      %p795 = pneg %p351
      %p796 = pneg %p375
      %p797 = pneg %p372
      %p798 = pneg %p396
      %p799 = pneg %p393
      %p800 = pneg %p417
      %p801 = pneg %p414
      %p802 = pneg %p438
      %p803 = pneg %p435
      %p804 = pneg %p459
      %p805 = pneg %p456
      %p806 = pneg %p480
      %p807 = pneg %p477
      %p808 = pneg %p501
      %p809 = pneg %p498
      %p810 = pneg %p522
      %p811 = pneg %p519
      %p812 = pneg %p543
      %p813 = pneg %p540
      %p814 = pneg %p569
      %p815 = pneg %p566
      %p816 = scmp.lt.s32.totalorder %s36, 0
      %s817 = scalar_select %p816, %s36, 0
      %s818 = smul.addr %s817, 8
      %s819 = scalar_lea.vmem %s21, %s818
      %s820 = smul.u32 %s36, 4
      %s821 = sadd.s32 %s820, %s37
      %s822 = smul.u32 2, %s821
      %p823 = scmp.lt.s32.totalorder %s822, 7
      %s824 = scalar_select %p823, %s822, 7
      %s825 = smul.addr %s824, 4
      %s826 = scalar_lea.vmem %s0, %s825
      %s827 = smul.u32 %s36, 4
      %s828 = sadd.s32 %s827, %s37
      %s829 = smul.u32 2, %s828
      %s830 = smul.u32 %s36, 4
      %s831 = sadd.s32 %s830, %s37
      %s832 = smul.u32 2, %s831
      %p833 = scmp.lt.s32.totalorder %s832, 7
      %s834 = scalar_select %p833, %s832, 7
      %s835 = smul.addr %s834, 8
      %s836 = scalar_lea.vmem %s1, %s835
      %s837 = smul.u32 %s36, 4
      %s838 = sadd.s32 %s837, %s37
      %s839 = smul.u32 2, %s838
      %s840 = smul.u32 %s36, 4
      %s841 = sadd.s32 %s840, %s37
      %s842 = smul.u32 2, %s841
      %p843 = scmp.lt.s32.totalorder %s842, 7
      %s844 = scalar_select %p843, %s842, 7
      %s845 = smul.addr %s844, 4
      %s846 = scalar_lea.vmem %s2, %s845
      %s847 = smul.u32 %s36, 4
      %s848 = sadd.s32 %s847, %s37
      %s849 = smul.u32 2, %s848
      %s850 = smul.u32 %s36, 4
      %s851 = sadd.s32 %s850, %s37
      %s852 = smul.u32 2, %s851
      %p853 = scmp.lt.s32.totalorder %s852, 7
      %s854 = scalar_select %p853, %s852, 7
      %s855 = smul.addr %s854, 4
      %s856 = scalar_lea.vmem %s3, %s855
      %s857 = smul.u32 %s36, 4
      %s858 = sadd.s32 %s857, %s37
      %s859 = smul.u32 2, %s858
      %s860 = smul.u32 %s36, 4
      %s861 = sadd.s32 %s860, %s37
      %s862 = smul.u32 2, %s861
      %p863 = scmp.lt.s32.totalorder %s862, 7
      %s864 = scalar_select %p863, %s862, 7
      %s865 = smul.addr %s864, 8
      %s866 = scalar_lea.vmem %s4, %s865
      %s867 = smul.u32 %s36, 4
      %s868 = sadd.s32 %s867, %s37
      %s869 = smul.u32 2, %s868
      %s870 = smul.u32 %s36, 4
      %s871 = sadd.s32 %s870, %s37
      %s872 = smul.u32 2, %s871
      %p873 = scmp.lt.s32.totalorder %s872, 7
      %s874 = scalar_select %p873, %s872, 7
      %s875 = smul.addr %s874, 8
      %s876 = scalar_lea.vmem %s5, %s875
      %s877 = smul.u32 %s36, 4
      %s878 = sadd.s32 %s877, %s37
      %s879 = smul.u32 2, %s878
      %s880 = smul.u32 %s36, 4
      %s881 = sadd.s32 %s880, %s37
      %p882 = scmp.lt.s32.totalorder %s881, 3
      %s883 = scalar_select %p882, %s881, 3
      %s884 = scalar_lea.vmem %s6, %s883
      %s885 = smul.u32 %s36, 4
      %s886 = sadd.s32 %s885, %s37
      %p887 = scmp.lt.s32.totalorder %s36, 0
      %s888 = scalar_select %p887, %s36, 0
      %s889 = smul.addr %s888, 8
      %s890 = scalar_lea.vmem %s21, %s889
      %p892 = scmp.eq.s32.totalorder %s37, 0
      // Predicated region
      $region105: #{mp_block_forward.3} parent=103 // pred_check
        %p893 = pneg %p892
      $region106: #{mp_block_forward.3} parent=103 // pred_check_branch
        %895 = sbr.rel (%p893) target = $region108
      $region107: #{mp_block_forward.3} parent=103 // pred_region
        %896 = vst [vmem:[%s890] sm:$0xff] 0.0
      $region108: #{mp_block_forward.3} parent=103 // pred_fallthru
        _
      %v897 = vld [vmem:[%s826] sm:$0xf]
      %v898 = vld [vmem:[%s826 + $0x4] sm:$0xf]
      %v899 = vld [vmem:[%s836] sm:$0xff]
      %v900 = vld [vmem:[%s836 + $0x8] sm:$0xff]
      %v901 = vld [vmem:[%s876] sm:$0xff]
      %v902 = vld [vmem:[%s876 + $0x8] sm:$0xff]
      %v903 = vlaneseq
      %v904 = vand.u32 %v903, 127
      %905 = vset.pattern.permute.xlu0 0
      %906 = vperm.xlu0 %905, %v901
      %v907 = vpop.permute.xlu0 %906
      %908 = vset.pattern.permute.xlu0 0
      %909 = vperm.xlu0 %908, %v902
      %v910 = vpop.permute.xlu0 %909
      %vm911 = vcmp.eq.s32.totalorder %v907, %v904
      %vm912 = vcmp.eq.s32.totalorder %v910, %v904
      %v913 = vsel %vm911, 1, 0
      %v914 = vsel %vm912, 1, 0
      %v915 = vcvt.s32.f32 %v913
      %v916 = vcvt.s32.f32 %v914
      %v917 = vpack.c.bf16 %v916, %v915
      %v918 = vld [vmem:[%s884] sm:$0x1]
      %v919 = vlaneseq
      %v920 = vshrl.u32 %v919, 7
      %v921 = vlaneseq
      %v922 = vshrl.u32 %v921, 7
      %v923 = vsub.s32 0, %v922
      %v924 = vrot.slane %v918, %v923
      %vm925 = vcmp.eq.s32.totalorder %v920, %v924
      %v926 = vsel %vm925, 1, 0
      %v927 = vcvt.s32.f32 %v926
      %v928 = vpack.c.bf16 %v927, %v927
      %v929 = vld [vmem:[%s7] sm:$0xff]
      %v930 = vpack.c.bf16 %v929, %v929
      %vm931 = vcmask 64512
      %v933 = vsel %vm931, %v917, 0
      %vm935 = vcmask 1043456
      %v937 = vsel %vm935, %v930, 0
      %939 = vmatprep.subr.bf16.mxu0 0
      %940 = vmatpush1.bf16.msra.mxu0 %v937
      %941 = vmatprep.subr.bf16.mxu0 0
      %942 = vmatpush1.bf16.msra.mxu0 0
      %943 = vmatprep.subr.bf16.mxu0 0
      %944 = vmatpush1.bf16.msra.mxu0 0
      %945 = vmatprep.subr.bf16.mxu0 0
      %946 = vmatpush1.bf16.msra.mxu0 0
      %947 = vmatprep.subr.bf16.mxu0 0
      %948 = vmatpush1.bf16.msra.mxu0 0
      %949 = vmatprep.subr.bf16.mxu0 0
      %950 = vmatpush1.bf16.msra.mxu0 0
      %951 = vmatprep.subr.bf16.mxu0 0
      %952 = vmatpush1.bf16.msra.mxu0 0
      %953 = vmatprep.subr.bf16.mxu0 0
      %954 = vmatpush1.bf16.msra.mxu0 0
      %955 = vmatprep.subr.bf16.mxu0 0
      %956 = vmatpush1.bf16.msra.mxu0 0
      %957 = vmatprep.subr.bf16.mxu0 0
      %958 = vmatpush1.bf16.msra.mxu0 0
      %959 = vmatprep.subr.bf16.mxu0 0
      %960 = vmatpush1.bf16.msra.mxu0 0
      %961 = vmatprep.subr.bf16.mxu0 0
      %962 = vmatpush1.bf16.msra.mxu0 0
      %963 = vmatprep.subr.bf16.mxu0 0
      %964 = vmatpush1.bf16.msra.mxu0 0
      %965 = vmatprep.subr.bf16.mxu0 0
      %966 = vmatpush1.bf16.msra.mxu0 0
      %967 = vmatprep.subr.bf16.mxu0 0
      %968 = vmatpush1.bf16.msra.mxu0 0
      %969 = vmatprep.subr.bf16.mxu0 0
      %970 = vmatpush1.bf16.msra.mxu0 0
      %971 = vmatprep.mubr.bf16.mxu0 0
      %972 = vmatmul.mubr.bf16.gmra.mrb[0].mxu0 %v933
      %v973 = vpop.f32.mrb[0].mxu0
      %v974 = vadd.f32 0.0, %v973
      %v975 = vpop.f32.mrb[0].mxu0
      %v976 = vpop.f32.mrb[0].mxu0
      %v977 = vadd.f32 0.0, %v976
      %v978 = vpop.f32.mrb[0].mxu0
      %979 = vdwg.mxu0
      %v980 = vld [vmem:[%s8] sm:$0xff]
      %v981 = vlaneseq
      %v982 = vshrl.u32 %v981, 7
      %v983 = vsub.s32 0, %v982
      %v984 = vrot.slane %v980, %v983
      %v985 = vsub.f32 %v899, %v984
      %v986 = vsub.f32 %v900, %v984
      %v987 = vmul.f32 %v985, 1.442695
      %v988 = vpow.pop %v987
      %v989 = vmul.f32 %v986, 1.442695
      %v990 = vpow.pop %v989
      %v991 = vmul.f32 %v988, %v974
      %v992 = vmul.f32 %v990, %v977
      %v993 = vld [vmem:[%s9] sm:$0xff]
      %v994 = vld [vmem:[%s9 + $0x8] sm:$0xff]
      %v995 = vld [vmem:[%s9 + $0x10] sm:$0xff]
      %v996 = vld [vmem:[%s9 + $0x18] sm:$0xff]
      %v997 = vld [vmem:[%s9 + $0x20] sm:$0xff]
      %v998 = vld [vmem:[%s9 + $0x28] sm:$0xff]
      %v999 = vld [vmem:[%s9 + $0x30] sm:$0xff]
      %v1000 = vld [vmem:[%s9 + $0x38] sm:$0xff]
      %v1001 = vld [vmem:[%s9 + $0x40] sm:$0xff]
      %v1002 = vld [vmem:[%s9 + $0x48] sm:$0xff]
      %v1003 = vld [vmem:[%s9 + $0x50] sm:$0xff]
      %v1004 = vld [vmem:[%s9 + $0x58] sm:$0xff]
      %v1005 = vld [vmem:[%s9 + $0x60] sm:$0xff]
      %v1006 = vld [vmem:[%s9 + $0x68] sm:$0xff]
      %v1007 = vld [vmem:[%s9 + $0x70] sm:$0xff]
      %v1008 = vld [vmem:[%s9 + $0x78] sm:$0xff]
      %v1009 = vld [vmem:[%s9 + $0x80] sm:$0xff]
      %v1010 = vld [vmem:[%s9 + $0x88] sm:$0xff]
      %v1011 = vld [vmem:[%s9 + $0x90] sm:$0xff]
      %v1012 = vld [vmem:[%s9 + $0x98] sm:$0xff]
      %v1013 = vld [vmem:[%s9 + $0xa0] sm:$0xff]
      %v1014 = vld [vmem:[%s9 + $0xa8] sm:$0xff]
      %v1015 = vld [vmem:[%s9 + $0xb0] sm:$0xff]
      %v1016 = vld [vmem:[%s9 + $0xb8] sm:$0xff]
      %v1017 = vld [vmem:[%s9 + $0xc0] sm:$0xff]
      %v1018 = vld [vmem:[%s9 + $0xc8] sm:$0xff]
      %v1019 = vld [vmem:[%s9 + $0xd0] sm:$0xff]
      %v1020 = vld [vmem:[%s9 + $0xd8] sm:$0xff]
      %v1021 = vld [vmem:[%s9 + $0xe0] sm:$0xff]
      %v1022 = vld [vmem:[%s9 + $0xe8] sm:$0xff]
      %v1023 = vld [vmem:[%s9 + $0xf0] sm:$0xff]
      %v1024 = vld [vmem:[%s9 + $0xf8] sm:$0xff]
      %v1027 = vunpack.c.l.b16 %v897
      %v1028 = vunpack.c.l.b16 %v898
      %v1029 = vpack.c.b16 %v1028, %v1027
      %v1063 = vunpack.c.l.b16 %v993
      %v1064 = vunpack.c.h.b16 %v993
      %v1065 = vunpack.c.l.b16 %v994
      %v1066 = vunpack.c.h.b16 %v994
      %v1067 = vunpack.c.l.b16 %v995
      %v1068 = vunpack.c.h.b16 %v995
      %v1069 = vunpack.c.l.b16 %v996
      %v1070 = vunpack.c.h.b16 %v996
      %v1071 = vunpack.c.l.b16 %v997
      %v1072 = vunpack.c.h.b16 %v997
      %v1073 = vunpack.c.l.b16 %v998
      %v1074 = vunpack.c.h.b16 %v998
      %v1075 = vunpack.c.l.b16 %v999
      %v1076 = vunpack.c.h.b16 %v999
      %v1077 = vunpack.c.l.b16 %v1000
      %v1078 = vunpack.c.h.b16 %v1000
      %v1079 = vunpack.c.l.b16 %v1001
      %v1080 = vunpack.c.h.b16 %v1001
      %v1081 = vunpack.c.l.b16 %v1002
      %v1082 = vunpack.c.h.b16 %v1002
      %v1083 = vunpack.c.l.b16 %v1003
      %v1084 = vunpack.c.h.b16 %v1003
      %v1085 = vunpack.c.l.b16 %v1004
      %v1086 = vunpack.c.h.b16 %v1004
      %v1087 = vunpack.c.l.b16 %v1005
      %v1088 = vunpack.c.h.b16 %v1005
      %v1089 = vunpack.c.l.b16 %v1006
      %v1090 = vunpack.c.h.b16 %v1006
      %v1091 = vunpack.c.l.b16 %v1007
      %v1092 = vunpack.c.h.b16 %v1007
      %v1093 = vunpack.c.l.b16 %v1008
      %v1094 = vunpack.c.h.b16 %v1008
      %v1095 = vunpack.c.l.b16 %v1009
      %v1096 = vunpack.c.h.b16 %v1009
      %v1097 = vunpack.c.l.b16 %v1010
      %v1098 = vunpack.c.h.b16 %v1010
      %v1099 = vunpack.c.l.b16 %v1011
      %v1100 = vunpack.c.h.b16 %v1011
      %v1101 = vunpack.c.l.b16 %v1012
      %v1102 = vunpack.c.h.b16 %v1012
      %v1103 = vunpack.c.l.b16 %v1013
      %v1104 = vunpack.c.h.b16 %v1013
      %v1105 = vunpack.c.l.b16 %v1014
      %v1106 = vunpack.c.h.b16 %v1014
      %v1107 = vunpack.c.l.b16 %v1015
      %v1108 = vunpack.c.h.b16 %v1015
      %v1109 = vunpack.c.l.b16 %v1016
      %v1110 = vunpack.c.h.b16 %v1016
      %v1111 = vunpack.c.l.b16 %v1017
      %v1112 = vunpack.c.h.b16 %v1017
      %v1113 = vunpack.c.l.b16 %v1018
      %v1114 = vunpack.c.h.b16 %v1018
      %v1115 = vunpack.c.l.b16 %v1019
      %v1116 = vunpack.c.h.b16 %v1019
      %v1117 = vunpack.c.l.b16 %v1020
      %v1118 = vunpack.c.h.b16 %v1020
      %v1119 = vunpack.c.l.b16 %v1021
      %v1120 = vunpack.c.h.b16 %v1021
      %v1121 = vunpack.c.l.b16 %v1022
      %v1122 = vunpack.c.h.b16 %v1022
      %v1123 = vunpack.c.l.b16 %v1023
      %v1124 = vunpack.c.h.b16 %v1023
      %v1125 = vunpack.c.l.b16 %v1024
      %v1126 = vunpack.c.h.b16 %v1024
      %v1127 = vpack.c.b16 %v1067, %v1063
      %v1128 = vpack.c.b16 %v1068, %v1064
      %v1129 = vpack.c.b16 %v1069, %v1065
      %v1130 = vpack.c.b16 %v1070, %v1066
      %v1131 = vpack.c.b16 %v1075, %v1071
      %v1132 = vpack.c.b16 %v1076, %v1072
      %v1133 = vpack.c.b16 %v1077, %v1073
      %v1134 = vpack.c.b16 %v1078, %v1074
      %v1135 = vpack.c.b16 %v1083, %v1079
      %v1136 = vpack.c.b16 %v1084, %v1080
      %v1137 = vpack.c.b16 %v1085, %v1081
      %v1138 = vpack.c.b16 %v1086, %v1082
      %v1139 = vpack.c.b16 %v1091, %v1087
      %v1140 = vpack.c.b16 %v1092, %v1088
      %v1141 = vpack.c.b16 %v1093, %v1089
      %v1142 = vpack.c.b16 %v1094, %v1090
      %v1143 = vpack.c.b16 %v1099, %v1095
      %v1144 = vpack.c.b16 %v1100, %v1096
      %v1145 = vpack.c.b16 %v1101, %v1097
      %v1146 = vpack.c.b16 %v1102, %v1098
      %v1147 = vpack.c.b16 %v1107, %v1103
      %v1148 = vpack.c.b16 %v1108, %v1104
      %v1149 = vpack.c.b16 %v1109, %v1105
      %v1150 = vpack.c.b16 %v1110, %v1106
      %v1151 = vpack.c.b16 %v1115, %v1111
      %v1152 = vpack.c.b16 %v1116, %v1112
      %v1153 = vpack.c.b16 %v1117, %v1113
      %v1154 = vpack.c.b16 %v1118, %v1114
      %v1155 = vpack.c.b16 %v1123, %v1119
      %v1156 = vpack.c.b16 %v1124, %v1120
      %v1157 = vpack.c.b16 %v1125, %v1121
      %v1158 = vpack.c.b16 %v1126, %v1122
      %1191 = vmatprep.subr.bf16.mxu0 %v1128
      %1192 = vmatpush1.bf16.msra.mxu0 %v1127
      %1193 = vmatprep.subr.bf16.mxu0 %v1132
      %1194 = vmatpush1.bf16.msra.mxu0 %v1131
      %1195 = vmatprep.subr.bf16.mxu0 %v1136
      %1196 = vmatpush1.bf16.msra.mxu0 %v1135
      %1197 = vmatprep.subr.bf16.mxu0 %v1140
      %1198 = vmatpush1.bf16.msra.mxu0 %v1139
      %1199 = vmatprep.subr.bf16.mxu0 %v1144
      %1200 = vmatpush1.bf16.msra.mxu0 %v1143
      %1201 = vmatprep.subr.bf16.mxu0 %v1148
      %1202 = vmatpush1.bf16.msra.mxu0 %v1147
      %1203 = vmatprep.subr.bf16.mxu0 %v1152
      %1204 = vmatpush1.bf16.msra.mxu0 %v1151
      %1205 = vmatprep.subr.bf16.mxu0 %v1156
      %1206 = vmatpush1.bf16.msra.mxu0 %v1155
      %1207 = vmatprep.subr.bf16.mxu0 0
      %1208 = vmatpush1.bf16.msra.mxu0 0
      %1209 = vmatprep.subr.bf16.mxu0 0
      %1210 = vmatpush1.bf16.msra.mxu0 0
      %1211 = vmatprep.subr.bf16.mxu0 0
      %1212 = vmatpush1.bf16.msra.mxu0 0
      %1213 = vmatprep.subr.bf16.mxu0 0
      %1214 = vmatpush1.bf16.msra.mxu0 0
      %1215 = vmatprep.subr.bf16.mxu0 0
      %1216 = vmatpush1.bf16.msra.mxu0 0
      %1217 = vmatprep.subr.bf16.mxu0 0
      %1218 = vmatpush1.bf16.msra.mxu0 0
      %1219 = vmatprep.subr.bf16.mxu0 0
      %1220 = vmatpush1.bf16.msra.mxu0 0
      %1221 = vmatprep.subr.bf16.mxu0 0
      %1222 = vmatpush1.bf16.msra.mxu0 0
      %1223 = vmatprep.mubr.bf16.mxu0 0
      %1224 = vmatmul.mubr.bf16.gmra.mrb[0].mxu0 %v1029
      %v1225 = vpop.f32.mrb[0].mxu0
      %v1226 = vadd.f32 0.0, %v1225
      %v1227 = vpop.f32.mrb[0].mxu0
      %v1228 = vadd.f32 0.0, %v1227
      %v1229 = vpop.f32.mrb[0].mxu0
      %v1230 = vadd.f32 0.0, %v1229
      %v1231 = vpop.f32.mrb[0].mxu0
      %v1232 = vadd.f32 0.0, %v1231
      %1233 = vdwg.mxu0
      %1234 = vmatprep.subr.bf16.mxu0 %v1130
      %1235 = vmatpush1.bf16.msra.mxu0 %v1129
      %1236 = vmatprep.subr.bf16.mxu0 %v1134
      %1237 = vmatpush1.bf16.msra.mxu0 %v1133
      %1238 = vmatprep.subr.bf16.mxu0 %v1138
      %1239 = vmatpush1.bf16.msra.mxu0 %v1137
      %1240 = vmatprep.subr.bf16.mxu0 %v1142
      %1241 = vmatpush1.bf16.msra.mxu0 %v1141
      %1242 = vmatprep.subr.bf16.mxu0 %v1146
      %1243 = vmatpush1.bf16.msra.mxu0 %v1145
      %1244 = vmatprep.subr.bf16.mxu0 %v1150
      %1245 = vmatpush1.bf16.msra.mxu0 %v1149
      %1246 = vmatprep.subr.bf16.mxu0 %v1154
      %1247 = vmatpush1.bf16.msra.mxu0 %v1153
      %1248 = vmatprep.subr.bf16.mxu0 %v1158
      %1249 = vmatpush1.bf16.msra.mxu0 %v1157
      %1250 = vmatprep.subr.bf16.mxu0 0
      %1251 = vmatpush1.bf16.msra.mxu0 0
      %1252 = vmatprep.subr.bf16.mxu0 0
      %1253 = vmatpush1.bf16.msra.mxu0 0
      %1254 = vmatprep.subr.bf16.mxu0 0
      %1255 = vmatpush1.bf16.msra.mxu0 0
      %1256 = vmatprep.subr.bf16.mxu0 0
      %1257 = vmatpush1.bf16.msra.mxu0 0
      %1258 = vmatprep.subr.bf16.mxu0 0
      %1259 = vmatpush1.bf16.msra.mxu0 0
      %1260 = vmatprep.subr.bf16.mxu0 0
      %1261 = vmatpush1.bf16.msra.mxu0 0
      %1262 = vmatprep.subr.bf16.mxu0 0
      %1263 = vmatpush1.bf16.msra.mxu0 0
      %1264 = vmatprep.subr.bf16.mxu0 0
      %1265 = vmatpush1.bf16.msra.mxu0 0
      %1266 = vmatprep.mubr.bf16.mxu0 0
      %1267 = vmatmul.mubr.bf16.gmra.mrb[0].mxu0 %v1029
      %v1268 = vpop.f32.mrb[0].mxu0
      %v1269 = vadd.f32 0.0, %v1268
      %v1270 = vpop.f32.mrb[0].mxu0
      %v1271 = vadd.f32 0.0, %v1270
      %v1272 = vpop.f32.mrb[0].mxu0
      %v1273 = vadd.f32 0.0, %v1272
      %v1274 = vpop.f32.mrb[0].mxu0
      %v1275 = vadd.f32 0.0, %v1274
      %1276 = vdwg.mxu0
      %1278 = vset.pattern.permute.xlu0 0
      %1279 = vperm.xlu0 %1278, %v991
      %v1280 = vpop.permute.xlu0 %1279
      %1283 = vset.pattern.permute.xlu0 0
      %1284 = vperm.xlu0 %1283, %v992
      %v1285 = vpop.permute.xlu0 %1284
      %v1287 = vmul.f32 %v1280, %v1226
      %v1288 = vmul.f32 %v1285, %v1230
      %v1289 = vadd.f32 %v1287, 0.0
      %v1290 = vadd.f32 %v1288, 0.0
      %1291 = vset.pattern.permute.xlu0 1
      %1292 = vperm.xlu0 %1291, %v991
      %v1293 = vpop.permute.xlu0 %1292
      %1295 = vset.pattern.permute.xlu0 1
      %1296 = vperm.xlu0 %1295, %v992
      %v1297 = vpop.permute.xlu0 %1296
      %v1299 = vmul.f32 %v1293, %v1228
      %v1300 = vmul.f32 %v1297, %v1232
      %v1301 = vadd.f32 %v1289, %v1299
      %v1302 = vadd.f32 %v1290, %v1300
      %1303 = vset.pattern.permute.xlu0 2
      %1304 = vperm.xlu0 %1303, %v991
      %v1305 = vpop.permute.xlu0 %1304
      %1307 = vset.pattern.permute.xlu0 2
      %1308 = vperm.xlu0 %1307, %v992
      %v1309 = vpop.permute.xlu0 %1308
      %v1311 = vmul.f32 %v1305, %v1269
      %v1312 = vmul.f32 %v1309, %v1273
      %v1313 = vadd.f32 %v1301, %v1311
      %v1314 = vadd.f32 %v1302, %v1312
      %1315 = vset.pattern.permute.xlu0 3
      %1316 = vperm.xlu0 %1315, %v991
      %v1317 = vpop.permute.xlu0 %1316
      %1319 = vset.pattern.permute.xlu0 3
      %1320 = vperm.xlu0 %1319, %v992
      %v1321 = vpop.permute.xlu0 %1320
      %v1323 = vmul.f32 %v1317, %v1271
      %v1324 = vmul.f32 %v1321, %v1275
      %v1325 = vadd.f32 %v1313, %v1323
      %v1326 = vadd.f32 %v1314, %v1324
      %v1327 = vpack.c.bf16 %v1326, %v1325
      %v1328 = vld [vmem:[%s10] sm:$0xf]
      %v1329 = vld [vmem:[%s10 + $0x4] sm:$0xf]
      %v1330 = vld [vmem:[%s10 + $0x8] sm:$0xf]
      %v1331 = vld [vmem:[%s10 + $0xc] sm:$0xf]
      %v1332 = vld [vmem:[%s10 + $0x10] sm:$0xf]
      %v1333 = vld [vmem:[%s10 + $0x14] sm:$0xf]
      %v1334 = vld [vmem:[%s10 + $0x18] sm:$0xf]
      %v1335 = vld [vmem:[%s10 + $0x1c] sm:$0xf]
      %v1336 = vld [vmem:[%s10 + $0x20] sm:$0xf]
      %v1337 = vld [vmem:[%s10 + $0x24] sm:$0xf]
      %v1338 = vld [vmem:[%s10 + $0x28] sm:$0xf]
      %v1339 = vld [vmem:[%s10 + $0x2c] sm:$0xf]
      %v1340 = vld [vmem:[%s10 + $0x30] sm:$0xf]
      %v1341 = vld [vmem:[%s10 + $0x34] sm:$0xf]
      %v1342 = vld [vmem:[%s10 + $0x38] sm:$0xf]
      %v1343 = vld [vmem:[%s10 + $0x3c] sm:$0xf]
      %v1344 = vld [vmem:[%s11] sm:$0x1]
      %v1346 = vlaneseq
      %v1347 = vshrl.u32 %v1346, 7
      %v1348 = vsub.s32 0, %v1347
      %v1349 = vrot.slane %v1344, %v1348
      %v1367 = vunpack.c.l.b16 %v1328
      %v1368 = vunpack.c.l.b16 %v1329
      %v1369 = vunpack.c.l.b16 %v1330
      %v1370 = vunpack.c.l.b16 %v1331
      %v1371 = vunpack.c.l.b16 %v1332
      %v1372 = vunpack.c.l.b16 %v1333
      %v1373 = vunpack.c.l.b16 %v1334
      %v1374 = vunpack.c.l.b16 %v1335
      %v1375 = vunpack.c.l.b16 %v1336
      %v1376 = vunpack.c.l.b16 %v1337
      %v1377 = vunpack.c.l.b16 %v1338
      %v1378 = vunpack.c.l.b16 %v1339
      %v1379 = vunpack.c.l.b16 %v1340
      %v1380 = vunpack.c.l.b16 %v1341
      %v1381 = vunpack.c.l.b16 %v1342
      %v1382 = vunpack.c.l.b16 %v1343
      %v1383 = vpack.c.b16 %v1368, %v1367
      %v1384 = vpack.c.b16 %v1370, %v1369
      %v1385 = vpack.c.b16 %v1372, %v1371
      %v1386 = vpack.c.b16 %v1374, %v1373
      %v1387 = vpack.c.b16 %v1376, %v1375
      %v1388 = vpack.c.b16 %v1378, %v1377
      %v1389 = vpack.c.b16 %v1380, %v1379
      %v1390 = vpack.c.b16 %v1382, %v1381
      %1399 = vmatprep.subr.bf16.mxu0 0
      %1400 = vmatpush1.bf16.msra.mxu0 %v1383
      %1401 = vmatprep.subr.bf16.mxu0 0
      %1402 = vmatpush1.bf16.msra.mxu0 %v1384
      %1403 = vmatprep.subr.bf16.mxu0 0
      %1404 = vmatpush1.bf16.msra.mxu0 %v1385
      %1405 = vmatprep.subr.bf16.mxu0 0
      %1406 = vmatpush1.bf16.msra.mxu0 %v1386
      %1407 = vmatprep.subr.bf16.mxu0 0
      %1408 = vmatpush1.bf16.msra.mxu0 %v1387
      %1409 = vmatprep.subr.bf16.mxu0 0
      %1410 = vmatpush1.bf16.msra.mxu0 %v1388
      %1411 = vmatprep.subr.bf16.mxu0 0
      %1412 = vmatpush1.bf16.msra.mxu0 %v1389
      %1413 = vmatprep.subr.bf16.mxu0 0
      %1414 = vmatpush1.bf16.msra.mxu0 %v1390
      %1415 = vmatprep.subr.bf16.mxu0 0
      %1416 = vmatpush1.bf16.msra.mxu0 0
      %1417 = vmatprep.subr.bf16.mxu0 0
      %1418 = vmatpush1.bf16.msra.mxu0 0
      %1419 = vmatprep.subr.bf16.mxu0 0
      %1420 = vmatpush1.bf16.msra.mxu0 0
      %1421 = vmatprep.subr.bf16.mxu0 0
      %1422 = vmatpush1.bf16.msra.mxu0 0
      %1423 = vmatprep.subr.bf16.mxu0 0
      %1424 = vmatpush1.bf16.msra.mxu0 0
      %1425 = vmatprep.subr.bf16.mxu0 0
      %1426 = vmatpush1.bf16.msra.mxu0 0
      %1427 = vmatprep.subr.bf16.mxu0 0
      %1428 = vmatpush1.bf16.msra.mxu0 0
      %1429 = vmatprep.subr.bf16.mxu0 0
      %1430 = vmatpush1.bf16.msra.mxu0 0
      %1431 = vmatprep.mubr.bf16.mxu0 0
      %1432 = vmatmul.mubr.bf16.gmra.mrb[0].mxu0 %v1327
      %v1433 = vpop.f32.mrb[0].mxu0
      %v1434 = vadd.f32 %v1349, %v1433
      %v1435 = vpop.f32.mrb[0].mxu0
      %v1436 = vpop.f32.mrb[0].mxu0
      %v1437 = vadd.f32 %v1349, %v1436
      %v1438 = vpop.f32.mrb[0].mxu0
      %1439 = vdwg.mxu0
      %v1440 = vsub.f32 0.0, %v1434
      %v1441 = vsub.f32 0.0, %v1437
      %v1442 = vmul.f32 %v1440, 1.442695
      %v1443 = vpow.pop %v1442
      %v1444 = vmul.f32 %v1441, 1.442695
      %v1445 = vpow.pop %v1444
      %v1446 = vadd.f32 %v1443, 1.0
      %v1447 = vadd.f32 %v1445, 1.0
      %v1448 = vrcp.pop %v1446
      %v1449 = vrcp.pop %v1447
      %v1450 = vmul.f32 %v1434, %v1448
      %v1451 = vmul.f32 %v1437, %v1449
      %v1452 = vpack.c.bf16 %v1451, %v1450
      %v1453 = vld [vmem:[%s12] sm:$0xf]
      %v1454 = vld [vmem:[%s12 + $0x4] sm:$0xf]
      %v1455 = vld [vmem:[%s12 + $0x8] sm:$0xf]
      %v1456 = vld [vmem:[%s12 + $0xc] sm:$0xf]
      %v1457 = vld [vmem:[%s12 + $0x10] sm:$0xf]
      %v1458 = vld [vmem:[%s12 + $0x14] sm:$0xf]
      %v1459 = vld [vmem:[%s12 + $0x18] sm:$0xf]
      %v1460 = vld [vmem:[%s12 + $0x1c] sm:$0xf]
      %v1461 = vld [vmem:[%s12 + $0x20] sm:$0xf]
      %v1462 = vld [vmem:[%s12 + $0x24] sm:$0xf]
      %v1463 = vld [vmem:[%s12 + $0x28] sm:$0xf]
      %v1464 = vld [vmem:[%s12 + $0x2c] sm:$0xf]
      %v1465 = vld [vmem:[%s12 + $0x30] sm:$0xf]
      %v1466 = vld [vmem:[%s12 + $0x34] sm:$0xf]
      %v1467 = vld [vmem:[%s12 + $0x38] sm:$0xf]
      %v1468 = vld [vmem:[%s12 + $0x3c] sm:$0xf]
      %v1469 = vld [vmem:[%s13] sm:$0x1]
      %v1471 = vlaneseq
      %v1472 = vshrl.u32 %v1471, 7
      %v1473 = vsub.s32 0, %v1472
      %v1474 = vrot.slane %v1469, %v1473
      %v1492 = vunpack.c.l.b16 %v1453
      %v1493 = vunpack.c.l.b16 %v1454
      %v1494 = vunpack.c.l.b16 %v1455
      %v1495 = vunpack.c.l.b16 %v1456
      %v1496 = vunpack.c.l.b16 %v1457
      %v1497 = vunpack.c.l.b16 %v1458
      %v1498 = vunpack.c.l.b16 %v1459
      %v1499 = vunpack.c.l.b16 %v1460
      %v1500 = vunpack.c.l.b16 %v1461
      %v1501 = vunpack.c.l.b16 %v1462
      %v1502 = vunpack.c.l.b16 %v1463
      %v1503 = vunpack.c.l.b16 %v1464
      %v1504 = vunpack.c.l.b16 %v1465
      %v1505 = vunpack.c.l.b16 %v1466
      %v1506 = vunpack.c.l.b16 %v1467
      %v1507 = vunpack.c.l.b16 %v1468
      %v1508 = vpack.c.b16 %v1493, %v1492
      %v1509 = vpack.c.b16 %v1495, %v1494
      %v1510 = vpack.c.b16 %v1497, %v1496
      %v1511 = vpack.c.b16 %v1499, %v1498
      %v1512 = vpack.c.b16 %v1501, %v1500
      %v1513 = vpack.c.b16 %v1503, %v1502
      %v1514 = vpack.c.b16 %v1505, %v1504
      %v1515 = vpack.c.b16 %v1507, %v1506
      %1524 = vmatprep.subr.bf16.mxu0 0
      %1525 = vmatpush1.bf16.msra.mxu0 %v1508
      %1526 = vmatprep.subr.bf16.mxu0 0
      %1527 = vmatpush1.bf16.msra.mxu0 %v1509
      %1528 = vmatprep.subr.bf16.mxu0 0
      %1529 = vmatpush1.bf16.msra.mxu0 %v1510
      %1530 = vmatprep.subr.bf16.mxu0 0
      %1531 = vmatpush1.bf16.msra.mxu0 %v1511
      %1532 = vmatprep.subr.bf16.mxu0 0
      %1533 = vmatpush1.bf16.msra.mxu0 %v1512
      %1534 = vmatprep.subr.bf16.mxu0 0
      %1535 = vmatpush1.bf16.msra.mxu0 %v1513
      %1536 = vmatprep.subr.bf16.mxu0 0
      %1537 = vmatpush1.bf16.msra.mxu0 %v1514
      %1538 = vmatprep.subr.bf16.mxu0 0
      %1539 = vmatpush1.bf16.msra.mxu0 %v1515
      %1540 = vmatprep.subr.bf16.mxu0 0
      %1541 = vmatpush1.bf16.msra.mxu0 0
      %1542 = vmatprep.subr.bf16.mxu0 0
      %1543 = vmatpush1.bf16.msra.mxu0 0
      %1544 = vmatprep.subr.bf16.mxu0 0
      %1545 = vmatpush1.bf16.msra.mxu0 0
      %1546 = vmatprep.subr.bf16.mxu0 0
      %1547 = vmatpush1.bf16.msra.mxu0 0
      %1548 = vmatprep.subr.bf16.mxu0 0
      %1549 = vmatpush1.bf16.msra.mxu0 0
      %1550 = vmatprep.subr.bf16.mxu0 0
      %1551 = vmatpush1.bf16.msra.mxu0 0
      %1552 = vmatprep.subr.bf16.mxu0 0
      %1553 = vmatpush1.bf16.msra.mxu0 0
      %1554 = vmatprep.subr.bf16.mxu0 0
      %1555 = vmatpush1.bf16.msra.mxu0 0
      %1556 = vmatprep.mubr.bf16.mxu0 0
      %1557 = vmatmul.mubr.bf16.gmra.mrb[0].mxu0 %v1452
      %v1558 = vpop.f32.mrb[0].mxu0
      %v1559 = vadd.f32 %v1474, %v1558
      %v1560 = vpop.f32.mrb[0].mxu0
      %v1561 = vpop.f32.mrb[0].mxu0
      %v1562 = vadd.f32 %v1474, %v1561
      %v1563 = vpop.f32.mrb[0].mxu0
      %1564 = vdwg.mxu0
      %v1565 = vld [vmem:[%s14] sm:$0xf]
      %v1566 = vld [vmem:[%s14 + $0x4] sm:$0xf]
      %v1567 = vld [vmem:[%s14 + $0x8] sm:$0xf]
      %v1568 = vld [vmem:[%s14 + $0xc] sm:$0xf]
      %v1569 = vld [vmem:[%s14 + $0x10] sm:$0xf]
      %v1570 = vld [vmem:[%s14 + $0x14] sm:$0xf]
      %v1571 = vld [vmem:[%s14 + $0x18] sm:$0xf]
      %v1572 = vld [vmem:[%s14 + $0x1c] sm:$0xf]
      %v1573 = vld [vmem:[%s14 + $0x20] sm:$0xf]
      %v1574 = vld [vmem:[%s14 + $0x24] sm:$0xf]
      %v1575 = vld [vmem:[%s14 + $0x28] sm:$0xf]
      %v1576 = vld [vmem:[%s14 + $0x2c] sm:$0xf]
      %v1577 = vld [vmem:[%s14 + $0x30] sm:$0xf]
      %v1578 = vld [vmem:[%s14 + $0x34] sm:$0xf]
      %v1579 = vld [vmem:[%s14 + $0x38] sm:$0xf]
      %v1580 = vld [vmem:[%s14 + $0x3c] sm:$0xf]
      %v1581 = vld [vmem:[%s15] sm:$0x1]
      %v1583 = vlaneseq
      %v1584 = vshrl.u32 %v1583, 7
      %v1585 = vsub.s32 0, %v1584
      %v1586 = vrot.slane %v1581, %v1585
      %v1604 = vunpack.c.l.b16 %v1565
      %v1605 = vunpack.c.l.b16 %v1566
      %v1606 = vunpack.c.l.b16 %v1567
      %v1607 = vunpack.c.l.b16 %v1568
      %v1608 = vunpack.c.l.b16 %v1569
      %v1609 = vunpack.c.l.b16 %v1570
      %v1610 = vunpack.c.l.b16 %v1571
      %v1611 = vunpack.c.l.b16 %v1572
      %v1612 = vunpack.c.l.b16 %v1573
      %v1613 = vunpack.c.l.b16 %v1574
      %v1614 = vunpack.c.l.b16 %v1575
      %v1615 = vunpack.c.l.b16 %v1576
      %v1616 = vunpack.c.l.b16 %v1577
      %v1617 = vunpack.c.l.b16 %v1578
      %v1618 = vunpack.c.l.b16 %v1579
      %v1619 = vunpack.c.l.b16 %v1580
      %v1620 = vpack.c.b16 %v1605, %v1604
      %v1621 = vpack.c.b16 %v1607, %v1606
      %v1622 = vpack.c.b16 %v1609, %v1608
      %v1623 = vpack.c.b16 %v1611, %v1610
      %v1624 = vpack.c.b16 %v1613, %v1612
      %v1625 = vpack.c.b16 %v1615, %v1614
      %v1626 = vpack.c.b16 %v1617, %v1616
      %v1627 = vpack.c.b16 %v1619, %v1618
      %1636 = vmatprep.subr.bf16.mxu0 0
      %1637 = vmatpush1.bf16.msra.mxu0 %v1620
      %1638 = vmatprep.subr.bf16.mxu0 0
      %1639 = vmatpush1.bf16.msra.mxu0 %v1621
      %1640 = vmatprep.subr.bf16.mxu0 0
      %1641 = vmatpush1.bf16.msra.mxu0 %v1622
      %1642 = vmatprep.subr.bf16.mxu0 0
      %1643 = vmatpush1.bf16.msra.mxu0 %v1623
      %1644 = vmatprep.subr.bf16.mxu0 0
      %1645 = vmatpush1.bf16.msra.mxu0 %v1624
      %1646 = vmatprep.subr.bf16.mxu0 0
      %1647 = vmatpush1.bf16.msra.mxu0 %v1625
      %1648 = vmatprep.subr.bf16.mxu0 0
      %1649 = vmatpush1.bf16.msra.mxu0 %v1626
      %1650 = vmatprep.subr.bf16.mxu0 0
      %1651 = vmatpush1.bf16.msra.mxu0 %v1627
      %1652 = vmatprep.subr.bf16.mxu0 0
      %1653 = vmatpush1.bf16.msra.mxu0 0
      %1654 = vmatprep.subr.bf16.mxu0 0
      %1655 = vmatpush1.bf16.msra.mxu0 0
      %1656 = vmatprep.subr.bf16.mxu0 0
      %1657 = vmatpush1.bf16.msra.mxu0 0
      %1658 = vmatprep.subr.bf16.mxu0 0
      %1659 = vmatpush1.bf16.msra.mxu0 0
      %1660 = vmatprep.subr.bf16.mxu0 0
      %1661 = vmatpush1.bf16.msra.mxu0 0
      %1662 = vmatprep.subr.bf16.mxu0 0
      %1663 = vmatpush1.bf16.msra.mxu0 0
      %1664 = vmatprep.subr.bf16.mxu0 0
      %1665 = vmatpush1.bf16.msra.mxu0 0
      %1666 = vmatprep.subr.bf16.mxu0 0
      %1667 = vmatpush1.bf16.msra.mxu0 0
      %1668 = vmatprep.mubr.bf16.mxu0 0
      %1669 = vmatmul.mubr.bf16.gmra.mrb[0].mxu0 %v1452
      %v1670 = vpop.f32.mrb[0].mxu0
      %v1671 = vadd.f32 %v1586, %v1670
      %v1672 = vpop.f32.mrb[0].mxu0
      %v1673 = vpop.f32.mrb[0].mxu0
      %v1674 = vadd.f32 %v1586, %v1673
      %v1675 = vpop.f32.mrb[0].mxu0
      %1676 = vdwg.mxu0
      %v1677 = vld [vmem:[%s846] sm:$0xf]
      %v1678 = vld [vmem:[%s846 + $0x4] sm:$0xf]
      %v1679 = vld [vmem:[%s16] sm:$0xf]
      %v1680 = vld [vmem:[%s16 + $0x4] sm:$0xf]
      %v1681 = vld [vmem:[%s16 + $0x8] sm:$0x3]
      %v1682 = vld [vmem:[%s17] sm:$0x1]
      %v1684 = vlaneseq
      %v1685 = vshrl.u32 %v1684, 7
      %v1686 = vsub.s32 0, %v1685
      %v1687 = vrot.slane %v1682, %v1686
      %v1691 = vunpack.c.l.b16 %v1677
      %v1692 = vunpack.c.l.b16 %v1678
      %v1693 = vpack.c.b16 %v1692, %v1691
      %v1697 = vunpack.c.l.b16 %v1679
      %v1698 = vunpack.c.l.b16 %v1680
      %v1699 = vunpack.c.l.b16 %v1681
      %v1700 = vpack.c.b16 %v1698, %v1697
      %v1701 = vpack.c.b16 %v1699, %v1699
      %vm1703 = vcmask 162816
      %v1705 = vsel %vm1703, %v1693, 0
      %vm1707 = vcmask 1041408
      %v1709 = vsel %vm1707, %v1701, 0
      %1711 = vmatprep.subr.bf16.mxu0 0
      %1712 = vmatpush1.bf16.msra.mxu0 %v1700
      %1713 = vmatprep.subr.bf16.mxu0 0
      %1714 = vmatpush1.bf16.msra.mxu0 %v1709
      %1715 = vmatprep.subr.bf16.mxu0 0
      %1716 = vmatpush1.bf16.msra.mxu0 0
      %1717 = vmatprep.subr.bf16.mxu0 0
      %1718 = vmatpush1.bf16.msra.mxu0 0
      %1719 = vmatprep.subr.bf16.mxu0 0
      %1720 = vmatpush1.bf16.msra.mxu0 0
      %1721 = vmatprep.subr.bf16.mxu0 0
      %1722 = vmatpush1.bf16.msra.mxu0 0
      %1723 = vmatprep.subr.bf16.mxu0 0
      %1724 = vmatpush1.bf16.msra.mxu0 0
      %1725 = vmatprep.subr.bf16.mxu0 0
      %1726 = vmatpush1.bf16.msra.mxu0 0
      %1727 = vmatprep.subr.bf16.mxu0 0
      %1728 = vmatpush1.bf16.msra.mxu0 0
      %1729 = vmatprep.subr.bf16.mxu0 0
      %1730 = vmatpush1.bf16.msra.mxu0 0
      %1731 = vmatprep.subr.bf16.mxu0 0
      %1732 = vmatpush1.bf16.msra.mxu0 0
      %1733 = vmatprep.subr.bf16.mxu0 0
      %1734 = vmatpush1.bf16.msra.mxu0 0
      %1735 = vmatprep.subr.bf16.mxu0 0
      %1736 = vmatpush1.bf16.msra.mxu0 0
      %1737 = vmatprep.subr.bf16.mxu0 0
      %1738 = vmatpush1.bf16.msra.mxu0 0
      %1739 = vmatprep.subr.bf16.mxu0 0
      %1740 = vmatpush1.bf16.msra.mxu0 0
      %1741 = vmatprep.subr.bf16.mxu0 0
      %1742 = vmatpush1.bf16.msra.mxu0 0
      %1743 = vmatprep.mubr.bf16.mxu0 0
      %1744 = vmatmul.mubr.bf16.gmra.mrb[0].mxu0 %v1705
      %v1745 = vpop.f32.mrb[0].mxu0
      %v1746 = vadd.f32 %v1687, %v1745
      %v1747 = vpop.f32.mrb[0].mxu0
      %v1748 = vpop.f32.mrb[0].mxu0
      %v1749 = vadd.f32 %v1687, %v1748
      %v1750 = vpop.f32.mrb[0].mxu0
      %1751 = vdwg.mxu0
      %v1752 = vld [vmem:[%s18] sm:$0xf]
      %v1753 = vld [vmem:[%s18 + $0x4] sm:$0xf]
      %v1754 = vld [vmem:[%s18 + $0x8] sm:$0x3]
      %v1755 = vld [vmem:[%s19] sm:$0x1]
      %v1757 = vlaneseq
      %v1758 = vshrl.u32 %v1757, 7
      %v1759 = vsub.s32 0, %v1758
      %v1760 = vrot.slane %v1755, %v1759
      %v1765 = vunpack.c.l.b16 %v1752
      %v1766 = vunpack.c.l.b16 %v1753
      %v1767 = vunpack.c.l.b16 %v1754
      %v1768 = vpack.c.b16 %v1766, %v1765
      %v1769 = vpack.c.b16 %v1767, %v1767
      %v1772 = vsel %vm1707, %v1769, 0
      %1774 = vmatprep.subr.bf16.mxu0 0
      %1775 = vmatpush1.bf16.msra.mxu0 %v1768
      %1776 = vmatprep.subr.bf16.mxu0 0
      %1777 = vmatpush1.bf16.msra.mxu0 %v1772
      %1778 = vmatprep.subr.bf16.mxu0 0
      %1779 = vmatpush1.bf16.msra.mxu0 0
      %1780 = vmatprep.subr.bf16.mxu0 0
      %1781 = vmatpush1.bf16.msra.mxu0 0
      %1782 = vmatprep.subr.bf16.mxu0 0
      %1783 = vmatpush1.bf16.msra.mxu0 0
      %1784 = vmatprep.subr.bf16.mxu0 0
      %1785 = vmatpush1.bf16.msra.mxu0 0
      %1786 = vmatprep.subr.bf16.mxu0 0
      %1787 = vmatpush1.bf16.msra.mxu0 0
      %1788 = vmatprep.subr.bf16.mxu0 0
      %1789 = vmatpush1.bf16.msra.mxu0 0
      %1790 = vmatprep.subr.bf16.mxu0 0
      %1791 = vmatpush1.bf16.msra.mxu0 0
      %1792 = vmatprep.subr.bf16.mxu0 0
      %1793 = vmatpush1.bf16.msra.mxu0 0
      %1794 = vmatprep.subr.bf16.mxu0 0
      %1795 = vmatpush1.bf16.msra.mxu0 0
      %1796 = vmatprep.subr.bf16.mxu0 0
      %1797 = vmatpush1.bf16.msra.mxu0 0
      %1798 = vmatprep.subr.bf16.mxu0 0
      %1799 = vmatpush1.bf16.msra.mxu0 0
      %1800 = vmatprep.subr.bf16.mxu0 0
      %1801 = vmatpush1.bf16.msra.mxu0 0
      %1802 = vmatprep.subr.bf16.mxu0 0
      %1803 = vmatpush1.bf16.msra.mxu0 0
      %1804 = vmatprep.subr.bf16.mxu0 0
      %1805 = vmatpush1.bf16.msra.mxu0 0
      %1806 = vmatprep.mubr.bf16.mxu0 0
      %1807 = vmatmul.mubr.bf16.gmra.mrb[0].mxu0 %v1705
      %v1808 = vpop.f32.mrb[0].mxu0
      %v1809 = vadd.f32 %v1760, %v1808
      %v1810 = vpop.f32.mrb[0].mxu0
      %v1811 = vpop.f32.mrb[0].mxu0
      %v1812 = vadd.f32 %v1760, %v1811
      %v1813 = vpop.f32.mrb[0].mxu0
      %1814 = vdwg.mxu0
      %v1815 = vld [vmem:[%s866] sm:$0xff]
      %v1816 = vld [vmem:[%s866 + $0x8] sm:$0xff]
      %v1817 = vld [vmem:[%s20] sm:$0xff]
      %v1819 = vsel %vm931, %v1815, 0
      %v1822 = vsel %vm931, %v1816, 0
      %1824 = vmatprep.subr.mxu0 0.0
      %1825 = vmatpush1.msra.mxu0 %v1817
      %1826 = vmatprep.subr.mxu0 0.0
      %1827 = vmatpush1.msra.mxu0 0.0
      %1828 = vmatprep.subr.mxu0 0.0
      %1829 = vmatpush1.msra.mxu0 0.0
      %1830 = vmatprep.subr.mxu0 0.0
      %1831 = vmatpush1.msra.mxu0 0.0
      %1832 = vmatprep.subr.mxu0 0.0
      %1833 = vmatpush1.msra.mxu0 0.0
      %1834 = vmatprep.subr.mxu0 0.0
      %1835 = vmatpush1.msra.mxu0 0.0
      %1836 = vmatprep.subr.mxu0 0.0
      %1837 = vmatpush1.msra.mxu0 0.0
      %1838 = vmatprep.subr.mxu0 0.0
      %1839 = vmatpush1.msra.mxu0 0.0
      %1840 = vmatprep.subr.mxu0 0.0
      %1841 = vmatpush1.msra.mxu0 0.0
      %1842 = vmatprep.subr.mxu0 0.0
      %1843 = vmatpush1.msra.mxu0 0.0
      %1844 = vmatprep.subr.mxu0 0.0
      %1845 = vmatpush1.msra.mxu0 0.0
      %1846 = vmatprep.subr.mxu0 0.0
      %1847 = vmatpush1.msra.mxu0 0.0
      %1848 = vmatprep.subr.mxu0 0.0
      %1849 = vmatpush1.msra.mxu0 0.0
      %1850 = vmatprep.subr.mxu0 0.0
      %1851 = vmatpush1.msra.mxu0 0.0
      %1852 = vmatprep.subr.mxu0 0.0
      %1853 = vmatpush1.msra.mxu0 0.0
      %1854 = vmatprep.subr.mxu0 0.0
      %1855 = vmatpush1.msra.mxu0 0.0
      %1856 = vmatprep.subr.mxu0 0.0
      %1857 = vmatpush1.msra.mxu0 0.0
      %1858 = vmatprep.subr.mxu0 0.0
      %1859 = vmatpush1.msra.mxu0 0.0
      %1860 = vmatprep.subr.mxu0 0.0
      %1861 = vmatpush1.msra.mxu0 0.0
      %1862 = vmatprep.subr.mxu0 0.0
      %1863 = vmatpush1.msra.mxu0 0.0
      %1864 = vmatprep.subr.mxu0 0.0
      %1865 = vmatpush1.msra.mxu0 0.0
      %1866 = vmatprep.subr.mxu0 0.0
      %1867 = vmatpush1.msra.mxu0 0.0
      %1868 = vmatprep.subr.mxu0 0.0
      %1869 = vmatpush1.msra.mxu0 0.0
      %1870 = vmatprep.subr.mxu0 0.0
      %1871 = vmatpush1.msra.mxu0 0.0
      %1872 = vmatprep.subr.mxu0 0.0
      %1873 = vmatpush1.msra.mxu0 0.0
      %1874 = vmatprep.subr.mxu0 0.0
      %1875 = vmatpush1.msra.mxu0 0.0
      %1876 = vmatprep.subr.mxu0 0.0
      %1877 = vmatpush1.msra.mxu0 0.0
      %1878 = vmatprep.subr.mxu0 0.0
      %1879 = vmatpush1.msra.mxu0 0.0
      %1880 = vmatprep.subr.mxu0 0.0
      %1881 = vmatpush1.msra.mxu0 0.0
      %1882 = vmatprep.subr.mxu0 0.0
      %1883 = vmatpush1.msra.mxu0 0.0
      %1884 = vmatprep.subr.mxu0 0.0
      %1885 = vmatpush1.msra.mxu0 0.0
      %1886 = vmatprep.subr.mxu0 0.0
      %1887 = vmatpush1.msra.mxu0 0.0
      %1888 = vmatprep.mubr.f32.mxu0 0.0
      %1889 = vmatmul.mubr.f32.gmra.mrb[0].mxu0 %v1819
      %v1890 = vpop.f32.mrb[0].mxu0
      %v1891 = vadd.f32 0.0, %v1890
      %v1892 = vpop.f32.mrb[0].mxu0
      %1893 = vmatprep.mubr.f32.mxu0 0.0
      %1894 = vmatmul.mubr.f32.gmra.mrb[0].mxu0 %v1822
      %v1895 = vpop.f32.mrb[0].mxu0
      %v1896 = vadd.f32 0.0, %v1895
      %v1897 = vpop.f32.mrb[0].mxu0
      %1898 = vdwg.mxu0
      %v1899 = vmul.f32 %v1559, %v1746
      %v1900 = vmul.f32 %v1562, %v1749
      %v1901 = vld [vmem:[%s856] sm:$0xf]
      %v1902 = vld [vmem:[%s856 + $0x4] sm:$0xf]
      %v1903 = vunpack.c.l.bf16 %v1901
      %v1904 = vunpack.c.l.bf16 %v1902
      %v1905 = vmul.f32 %v1899, %v1903
      %v1906 = vmul.f32 %v1900, %v1904
      %v1907 = vmul.f32 %v1671, %v1809
      %v1908 = vmul.f32 %v1674, %v1812
      %v1909 = vmul.f32 %v1907, %v1891
      %v1910 = vmul.f32 %v1908, %v1896
      %v1911 = vadd.f32 %v1905, %v1909
      %v1912 = vadd.f32 %v1906, %v1910
      %v1913 = vld [vmem:[%s890] sm:$0xff]
      %v1914 = vpack.c.bf16 %v1912, %v1911
      %vm1915 = vcmask 130048
      %v1917 = vsel %vm1915, %v928, 0
      %1919 = vmatprep.subr.bf16.mxu0 0
      %1920 = vmatpush1.bf16.msra.mxu0 %v1914
      %1921 = vmatprep.subr.bf16.mxu0 0
      %1922 = vmatpush1.bf16.msra.mxu0 0
      %1923 = vmatprep.subr.bf16.mxu0 0
      %1924 = vmatpush1.bf16.msra.mxu0 0
      %1925 = vmatprep.subr.bf16.mxu0 0
      %1926 = vmatpush1.bf16.msra.mxu0 0
      %1927 = vmatprep.subr.bf16.mxu0 0
      %1928 = vmatpush1.bf16.msra.mxu0 0
      %1929 = vmatprep.subr.bf16.mxu0 0
      %1930 = vmatpush1.bf16.msra.mxu0 0
      %1931 = vmatprep.subr.bf16.mxu0 0
      %1932 = vmatpush1.bf16.msra.mxu0 0
      %1933 = vmatprep.subr.bf16.mxu0 0
      %1934 = vmatpush1.bf16.msra.mxu0 0
      %1935 = vmatprep.subr.bf16.mxu0 0
      %1936 = vmatpush1.bf16.msra.mxu0 0
      %1937 = vmatprep.subr.bf16.mxu0 0
      %1938 = vmatpush1.bf16.msra.mxu0 0
      %1939 = vmatprep.subr.bf16.mxu0 0
      %1940 = vmatpush1.bf16.msra.mxu0 0
      %1941 = vmatprep.subr.bf16.mxu0 0
      %1942 = vmatpush1.bf16.msra.mxu0 0
      %1943 = vmatprep.subr.bf16.mxu0 0
      %1944 = vmatpush1.bf16.msra.mxu0 0
      %1945 = vmatprep.subr.bf16.mxu0 0
      %1946 = vmatpush1.bf16.msra.mxu0 0
      %1947 = vmatprep.subr.bf16.mxu0 0
      %1948 = vmatpush1.bf16.msra.mxu0 0
      %1949 = vmatprep.subr.bf16.mxu0 0
      %1950 = vmatpush1.bf16.msra.mxu0 0
      %1951 = vmatprep.mubr.bf16.mxu0 0
      %1952 = vmatmul.mubr.bf16.gmra.mrb[0].mxu0 %v1917
      %v1953 = vpop.f32.mrb[0].mxu0
      %v1954 = vadd.f32 0.0, %v1953
      %v1955 = vpop.f32.mrb[0].mxu0
      %v1956 = vpop.f32.mrb[0].mxu0
      %v1957 = vpop.f32.mrb[0].mxu0
      %1958 = vdwg.mxu0
      %v1959 = vadd.f32 %v1913, %v1954
      %1960 = vst [vmem:[%s890] sm:$0xff] %v1959
      %p1961 = scmp.lt.s32.totalorder %s36, 0
      %s1962 = scalar_select %p1961, %s36, 0
      %s1963 = smul.addr %s1962, 8
      %s1964 = scalar_lea.vmem %s21, %s1963
      // Predicated region
      $region109: #{mp_block_forward.3} parent=103 // pred_check
        %p1965 = pneg %p566
      $region110: #{mp_block_forward.3} parent=103 // pred_check_branch
        %1967 = sbr.rel (%p1965) target = $region112
      $region111: #{mp_block_forward.3} parent=103 // pred_region
        _
      $region112: #{mp_block_forward.3} parent=103 // pred_fallthru
        _
      // Predicated region
      $region113: #{mp_block_forward.3} parent=103 // pred_check
        %p1968 = pneg %p566
      $region114: #{mp_block_forward.3} parent=103 // pred_check_branch
        %1970 = sbr.rel (%p1968) target = $region116
      $region115: #{mp_block_forward.3} parent=103 // pred_region
        %p1971 = scmp.lt.s32.totalorder %s36, 0
        %s1972 = scalar_select %p1971, %s36, 0
        %s1973 = smul.addr %s1972, 8
        %s1974 = scalar_lea.vmem %s21, %s1973
      $region116: #{mp_block_forward.3} parent=103 // pred_fallthru
        _
    $region104: #{mp_block_forward.3} parent=5 // pred_fallthru
      _
    %p1975 = scmp.le.s32.totalorder 2, %s27
    // Predicated region
    $region117: #{mp_block_forward.3} parent=5 // pred_check
      %p1976 = pneg %p1975
    $region118: #{mp_block_forward.3} parent=5 // pred_check_branch
      %1978 = sbr.rel (%p1976) target = $region120
    $region119: #{mp_block_forward.3} parent=5 // pred_region
      %s1979 = ssub.s32 %s27, 2
    $region120: #{mp_block_forward.3} parent=5 // pred_fallthru
      _
  $region6: #{mp_block_forward.3} parent=0 // loop_footer
    %s31 = sadd.s32 1, %s27
  $region7: #{mp_block_forward.3} parent=0 // loop_footer_branch
    %26 = sbr.rel target = $region3
  $region8: #{mp_block_forward.3} parent=0 // loop_exit
    _

</llo_original>
